<compile_context>
chip_gen: v6e
topology: v6e:2x2x1
jax: 0.10.0
libtpu: 0.0.40
codegen_flags: <defaults>
</compile_context>

<pallas_src>
import functools

import jax
import jax.numpy as jnp
from jax.experimental import pallas as pl
from jax.experimental.pallas import tpu as pltpu


def _encoder_block_kernel(
    x_ref,          # (1, S_pad, D)   f32   (same block for every query tile)
    ln1_g_ref,      # (1, D)          f32
    ln1_b_ref,      # (1, D)          f32
    w_q_ref,        # (D, D)          cdtype (in_proj[:D].T, scale pre-folded)
    w_k_ref,        # (D, D)          cdtype
    w_v_ref,        # (D, D)          cdtype
    w_out_ref,      # (D, D)          cdtype (out_proj.weight.T)
    ln2_g_ref,      # (1, D)          f32
    ln2_b_ref,      # (1, D)          f32
    w_fc1_ref,      # (D, Hm)         cdtype
    b_fc1_ref,      # (1, Hm)         f32
    w_fc2_ref,      # (Hm, D)         cdtype
    b_fc2_ref,      # (1, D)          f32
    o_ref,          # (1, Tq, D)      f32
    k_sc,           # (H, S_pad, hd)  cdtype  VMEM scratch (per batch element)
    v_sc,           # (H, S_pad, hd)  cdtype  VMEM scratch
    *,
    num_heads: int,
    eps: float,
    s_valid: int,
    approx_recip: bool,
):
    f32 = jnp.float32
    cdtype = w_q_ref.dtype
    qt = pl.program_id(1)

    s_pad, d = x_ref.shape[1], x_ref.shape[2]
    tq = o_ref.shape[1]
    heads = num_heads
    hd = d // heads

    def layer_norm(v, g, b):
        mu = jnp.mean(v, axis=-1, keepdims=True)
        c = v - mu
        var = jnp.mean(c * c, axis=-1, keepdims=True)
        return c * jax.lax.rsqrt(var + eps) * g + b

    def split_heads(t2d, rows):
        # (rows, D) -> (H, rows, hd): lane-split reshape + leading-dim swap
        # (no full lane<->sublane transpose).
        return jnp.swapaxes(t2d.reshape(rows, heads, hd), 0, 1)

    # ---- once per batch element: K / V of the whole (LN'd) sequence ---------
    @pl.when(qt == 0)
    def _():
        x_full = x_ref[0].astype(f32)                                 # (S_pad, D)
        xn = layer_norm(x_full, ln1_g_ref[0], ln1_b_ref[0]).astype(cdtype)
        k = jnp.dot(xn, w_k_ref[...], preferred_element_type=f32)
        v = jnp.dot(xn, w_v_ref[...], preferred_element_type=f32)
        k_sc[...] = split_heads(k, s_pad).astype(cdtype)
        v_sc[...] = split_heads(v, s_pad).astype(cdtype)

    # --------------------------- current query tile --------------------------
    row0 = qt * tq
    x_t = x_ref[0, pl.ds(row0, tq), :].astype(f32)                    # (Tq, D)

    xq = layer_norm(x_t, ln1_g_ref[0], ln1_b_ref[0]).astype(cdtype)
    q = jnp.dot(xq, w_q_ref[...], preferred_element_type=f32)         # scale folded in
    q3 = split_heads(q, tq).astype(cdtype)                            # (H, Tq, hd)

    scores = jnp.einsum("hqd,hkd->hqk", q3, k_sc[...],
                        preferred_element_type=f32)                   # (H, Tq, S_pad)
    if s_valid < s_pad:                                               # mask padded keys
        col = jax.lax.broadcasted_iota(jnp.int32, (1, 1, s_pad), 2)
        scores = jnp.where(col < s_valid, scores, -1e30)

    scores = scores - jnp.max(scores, axis=-1, keepdims=True)
    p = jnp.exp(scores)
    denom = jnp.sum(p, axis=-1, keepdims=True)
    if approx_recip:
        p = p * pl.reciprocal(denom, approx=True)
    else:
        p = p / denom

    ctx = jnp.einsum("hqk,hkd->hqd", p.astype(cdtype), v_sc[...],
                     preferred_element_type=f32)                      # (H, Tq, hd)
    ctx = jnp.swapaxes(ctx, 0, 1).reshape(tq, d)                      # merge heads
    attn = jnp.dot(ctx.astype(cdtype), w_out_ref[...],
                   preferred_element_type=f32)

    x1 = x_t + attn                                                   # residual 1 (f32)

    # ------------------------------- MLP branch ------------------------------
    x2n = layer_norm(x1, ln2_g_ref[0], ln2_b_ref[0]).astype(cdtype)
    h = jnp.dot(x2n, w_fc1_ref[...], preferred_element_type=f32) + b_fc1_ref[0]
    h = 0.5 * h * (1.0 + jax.lax.erf(h * (2.0 ** -0.5)))              # exact GELU
    y = jnp.dot(h.astype(cdtype), w_fc2_ref[...],
                preferred_element_type=f32) + b_fc2_ref[0]

    o_ref[0] = (x1 + y).astype(o_ref.dtype)                           # residual 2


def _round_up(a: int, m: int) -> int:
    return ((a + m - 1) // m) * m


def encoder_block(x, params, *, num_heads: int, eps: float = 1e-6, q_tile=None):
    """x: (B, S, D) float32. params: dict of f32 weights (see init_params)."""
    B, S, D = x.shape
    assert D % num_heads == 0
    hd = D // num_heads
    f32 = jnp.float32

    # bf16 matmul operands only on a real TPU (MXU); f32 otherwise so the kernel
    # also runs under the CPU interpreter (whose dot thunk rejects bf16 x bf16).
    on_tpu = jax.default_backend() == "tpu"
    cdtype = jnp.bfloat16 if on_tpu else f32

    # ---- sequence padding + query tiling (keeps live VMEM at O(Tq * S)) -----
    if q_tile is None:
        sp8 = _round_up(S, 8)
        n_qt = max(1, -(-sp8 // 256))                  # target <=256 rows / tile
        q_tile = _round_up(-(-sp8 // n_qt), 8)
    q_tile = _round_up(max(int(q_tile), 8), 8)
    s_pad = _round_up(S, q_tile)
    n_qt = s_pad // q_tile
    x_in = jnp.pad(x, ((0, 0), (0, s_pad - S), (0, 0))) if s_pad != S else x

    mlp_hidden = params["w_fc1"].shape[1]
    w_qkv = params["w_qkv"].astype(f32)                # (D, 3D) == in_proj_weight.T
    scale = 1.0 / (hd ** 0.5)

    weights = (
        params["ln1_g"].astype(f32),
        params["ln1_b"].astype(f32),
        (w_qkv[:, 0 * D:1 * D] * scale).astype(cdtype),   # w_q (scale folded in)
        w_qkv[:, 1 * D:2 * D].astype(cdtype),             # w_k
        w_qkv[:, 2 * D:3 * D].astype(cdtype),             # w_v
        params["w_out"].astype(cdtype),
        params["ln2_g"].astype(f32),
        params["ln2_b"].astype(f32),
        params["w_fc1"].astype(cdtype),
        params["b_fc1"].astype(f32),
        params["w_fc2"].astype(cdtype),
        params["b_fc2"].astype(f32),
    )

    def weight_spec(w):
        # Constant index map: the block never changes, so it is DMA'd once.
        imap = lambda b, q, _n=w.ndim: (0,) * _n
        buffered = getattr(pl, "Buffered", None)
        if on_tpu and buffered is not None:
            try:
                # Single-buffer grid-resident weights (double-buffering a
                # constant block only wastes VMEM; matters on v7x's 64 MiB).
                return pl.BlockSpec(w.shape, imap, pipeline_mode=buffered(1))
            except TypeError:
                pass
        return pl.BlockSpec(w.shape, imap)

    # --------------------------- VMEM budget / cost ---------------------------
    weight_bytes = sum(int(w.size) * w.dtype.itemsize for w in weights)
    csz = jnp.dtype(cdtype).itemsize
    scratch_bytes = 2 * num_heads * s_pad * hd * csz
    act_bytes = 4 * (3 * num_heads * q_tile * s_pad        # scores / probs temps
                     + 2 * q_tile * mlp_hidden             # MLP hidden
                     + 8 * s_pad * D + 6 * q_tile * D)     # LN / projections
    io_bytes = 4 * (2 * s_pad * D + 2 * q_tile * D)        # pipelined x / out blocks
    vmem_needed = 2 * weight_bytes + scratch_bytes + act_bytes + io_bytes + (4 << 20)

    vmem_cap = 128 << 20
    if on_tpu:
        try:
            vmem_cap = int(pltpu.get_tpu_info().vmem_capacity_bytes)
        except Exception:
            vmem_cap = 64 << 20                             # conservative (v7x)
    vmem_limit = int(max(min(vmem_needed, vmem_cap - (8 << 20)), 16 << 20))

    flops = int(2 * B * (12 * s_pad * D * D + 2 * num_heads * s_pad * s_pad * hd))
    transcendentals = int(B * (num_heads * s_pad * s_pad + s_pad * (mlp_hidden + 2 * D)))
    bytes_accessed = int(weight_bytes + 2 * B * s_pad * D * 4)

    kernel = functools.partial(
        _encoder_block_kernel,
        num_heads=num_heads, eps=eps, s_valid=S, approx_recip=on_tpu)

    out = pl.pallas_call(
        kernel,
        out_shape=jax.ShapeDtypeStruct((B, s_pad, D), x.dtype),
        grid=(B, n_qt),
        in_specs=[pl.BlockSpec((1, s_pad, D), lambda b, q: (b, 0, 0))]
                 + [weight_spec(w) for w in weights],
        out_specs=pl.BlockSpec((1, q_tile, D), lambda b, q: (b, q, 0)),
        scratch_shapes=[pltpu.VMEM((num_heads, s_pad, hd), cdtype),
                        pltpu.VMEM((num_heads, s_pad, hd), cdtype)],
        compiler_params=pltpu.CompilerParams(
            # qt axis must stay "arbitrary": the K/V scratch is filled at qt==0
            # and reused by later tiles of the same batch element.
            dimension_semantics=("parallel", "arbitrary"),
            vmem_limit_bytes=vmem_limit,
        ),
        cost_estimate=pl.CostEstimate(flops=flops,
                                      transcendentals=transcendentals,
                                      bytes_accessed=bytes_accessed),
    )(x_in, *weights)

    return out[:, :S, :] if s_pad != S else out


def init_params(key, embed_dim: int, mlp_ratio: float = 4.0):
    hidden = int(embed_dim * mlp_ratio)
    keys = jax.random.split(key, 4)
    s = 0.02
    # Weights are stored pre-transposed as (in_features, out_features).
    return {
        "ln1_g": jnp.ones((1, embed_dim), jnp.float32),
        "ln1_b": jnp.zeros((1, embed_dim), jnp.float32),
        "w_qkv": s * jax.random.normal(keys[0], (embed_dim, 3 * embed_dim), jnp.float32),
        "w_out": s * jax.random.normal(keys[1], (embed_dim, embed_dim), jnp.float32),
        "ln2_g": jnp.ones((1, embed_dim), jnp.float32),
        "ln2_b": jnp.zeros((1, embed_dim), jnp.float32),
        "w_fc1": s * jax.random.normal(keys[2], (embed_dim, hidden), jnp.float32),
        "b_fc1": jnp.zeros((1, hidden), jnp.float32),
        "w_fc2": s * jax.random.normal(keys[3], (hidden, embed_dim), jnp.float32),
        "b_fc2": jnp.zeros((1, embed_dim), jnp.float32),
    }


def _encoder_block_ref(x, params, *, num_heads: int, eps: float = 1e-6):
    """Pure-JAX f32 reference (mirrors the PyTorch module in eval mode)."""
    B, S, D = x.shape
    hd = D // num_heads

    def ln(v, g, b):
        mu = jnp.mean(v, axis=-1, keepdims=True)
        var = jnp.mean((v - mu) ** 2, axis=-1, keepdims=True)
        return (v - mu) * jax.lax.rsqrt(var + eps) * g + b

    xn = ln(x, params["ln1_g"][0], params["ln1_b"][0])
    qkv = xn @ params["w_qkv"]
    q, k, v = qkv[..., :D], qkv[..., D:2 * D], qkv[..., 2 * D:]
    q = q.reshape(B, S, num_heads, hd).transpose(0, 2, 1, 3) / (hd ** 0.5)
    k = k.reshape(B, S, num_heads, hd).transpose(0, 2, 1, 3)
    v = v.reshape(B, S, num_heads, hd).transpose(0, 2, 1, 3)
    a = jax.nn.softmax(jnp.einsum("bhqd,bhkd->bhqk", q, k), axis=-1)
    ctx = jnp.einsum("bhqk,bhkd->bhqd", a, v).transpose(0, 2, 1, 3).reshape(B, S, D)
    x = x + ctx @ params["w_out"]
    x2n = ln(x, params["ln2_g"][0], params["ln2_b"][0])
    h = x2n @ params["w_fc1"] + params["b_fc1"][0]
    h = 0.5 * h * (1.0 + jax.lax.erf(h * (2.0 ** -0.5)))
    return x + h @ params["w_fc2"] + params["b_fc2"][0]


if __name__ == "__main__":
    B, S, D = 2, 8, 32      # batch, sequence, embed_dim
    NUM_HEADS = 8           # head_dim = 4

    key = jax.random.PRNGKey(0)
    k_x, k_x2, k_p = jax.random.split(key, 3)
    params = init_params(k_p, D)

    # --- aligned sequence, single query tile ---
    x = jax.random.normal(k_x, (B, S, D), jnp.float32)
    out = jax.block_until_ready(encoder_block(x, params, num_heads=NUM_HEADS))
    assert out.shape == (B, S, D) and out.dtype == jnp.float32
    ref = _encoder_block_ref(x, params, num_heads=NUM_HEADS)
    assert jnp.allclose(out, ref, rtol=5e-2, atol=5e-2), float(
        jnp.max(jnp.abs(out - ref)))

    # --- unaligned sequence: exercises padding, key masking and the
    #     multi-tile path (q_tile=8 -> 2 tiles, KV scratch reused) ---
    S2 = 13
    x2 = jax.random.normal(k_x2, (B, S2, D), jnp.float32)
    out2 = jax.block_until_ready(
        encoder_block(x2, params, num_heads=NUM_HEADS, q_tile=8))
    assert out2.shape == (B, S2, D)
    ref2 = _encoder_block_ref(x2, params, num_heads=NUM_HEADS)
    assert jnp.allclose(out2, ref2, rtol=5e-2, atol=5e-2), float(
        jnp.max(jnp.abs(out2 - ref2)))

    print("KERNEL_OK")
</pallas_src>

<mosaic_0001>
module attributes {stable_mosaic.version = 11 : i64} {
  func.func @_encoder_block_kernel(%arg0: i32, %arg1: i32, %arg2: memref<1x8x32xf32, #tpu.memory_space<vmem>>, %arg3: memref<1x32xf32, #tpu.memory_space<vmem>>, %arg4: memref<1x32xf32, #tpu.memory_space<vmem>>, %arg5: memref<32x32xf32, #tpu.memory_space<vmem>>, %arg6: memref<32x32xf32, #tpu.memory_space<vmem>>, %arg7: memref<32x32xf32, #tpu.memory_space<vmem>>, %arg8: memref<32x32xf32, #tpu.memory_space<vmem>>, %arg9: memref<1x32xf32, #tpu.memory_space<vmem>>, %arg10: memref<1x32xf32, #tpu.memory_space<vmem>>, %arg11: memref<32x128xf32, #tpu.memory_space<vmem>>, %arg12: memref<1x128xf32, #tpu.memory_space<vmem>>, %arg13: memref<128x32xf32, #tpu.memory_space<vmem>>, %arg14: memref<1x32xf32, #tpu.memory_space<vmem>>, %arg15: memref<1x8x32xf32, #tpu.memory_space<vmem>>, %arg16: memref<8x8x4xf32, #tpu.memory_space<vmem>>, %arg17: memref<8x8x4xf32, #tpu.memory_space<vmem>>) attributes {dimension_semantics = [#tpu.dimension_semantics<parallel>, #tpu.dimension_semantics<arbitrary>], iteration_bounds = array<i64: 2, 1>, scalar_prefetch = 0 : i64, scratch_operands = 2 : i64, tpu.core_type = #tpu.core_type<tc>, window_params = [{transform_indices = @transform_0, window_bounds = array<i64: 1, 8, 32>}, {pipeline_mode = #tpu.pipeline_mode<synchronous>, transform_indices = @transform_1, window_bounds = array<i64: 1, 32>}, {pipeline_mode = #tpu.pipeline_mode<synchronous>, transform_indices = @transform_2, window_bounds = array<i64: 1, 32>}, {pipeline_mode = #tpu.pipeline_mode<synchronous>, transform_indices = @transform_3, window_bounds = array<i64: 32, 32>}, {pipeline_mode = #tpu.pipeline_mode<synchronous>, transform_indices = @transform_4, window_bounds = array<i64: 32, 32>}, {pipeline_mode = #tpu.pipeline_mode<synchronous>, transform_indices = @transform_5, window_bounds = array<i64: 32, 32>}, {pipeline_mode = #tpu.pipeline_mode<synchronous>, transform_indices = @transform_6, window_bounds = array<i64: 32, 32>}, {pipeline_mode = #tpu.pipeline_mode<synchronous>, transform_indices = @transform_7, window_bounds = array<i64: 1, 32>}, {pipeline_mode = #tpu.pipeline_mode<synchronous>, transform_indices = @transform_8, window_bounds = array<i64: 1, 32>}, {pipeline_mode = #tpu.pipeline_mode<synchronous>, transform_indices = @transform_9, window_bounds = array<i64: 32, 128>}, {pipeline_mode = #tpu.pipeline_mode<synchronous>, transform_indices = @transform_10, window_bounds = array<i64: 1, 128>}, {pipeline_mode = #tpu.pipeline_mode<synchronous>, transform_indices = @transform_11, window_bounds = array<i64: 128, 32>}, {pipeline_mode = #tpu.pipeline_mode<synchronous>, transform_indices = @transform_12, window_bounds = array<i64: 1, 32>}, {transform_indices = @transform_13, window_bounds = array<i64: 1, 8, 32>}]} {
    %c0_i32 = arith.constant 0 : i32
    %0 = arith.cmpi eq, %arg1, %c0_i32 : i32
    %1 = arith.extui %0 : i1 to i32
    %c0_i32_0 = arith.constant 0 : i32
    %2 = arith.cmpi ne, %1, %c0_i32_0 : i32
    scf.if %2 {
      %c0_51 = arith.constant 0 : index
      %c0_52 = arith.constant 0 : index
      %c0_53 = arith.constant 0 : index
      %107 = vector.load %arg2[%c0_51, %c0_52, %c0_53] : memref<1x8x32xf32, #tpu.memory_space<vmem>>, vector<1x8x32xf32>
      %108 = vector.shape_cast %107 : vector<1x8x32xf32> to vector<8x32xf32>
      %c0_54 = arith.constant 0 : index
      %c0_55 = arith.constant 0 : index
      %109 = vector.load %arg3[%c0_54, %c0_55] : memref<1x32xf32, #tpu.memory_space<vmem>>, vector<1x32xf32>
      %110 = vector.shape_cast %109 : vector<1x32xf32> to vector<32xf32>
      %c0_56 = arith.constant 0 : index
      %c0_57 = arith.constant 0 : index
      %111 = vector.load %arg4[%c0_56, %c0_57] : memref<1x32xf32, #tpu.memory_space<vmem>>, vector<1x32xf32>
      %112 = vector.shape_cast %111 : vector<1x32xf32> to vector<32xf32>
      %cst_58 = arith.constant dense<0.000000e+00> : vector<8xf32>
      %113 = vector.multi_reduction <add>, %108, %cst_58 [1] : vector<8x32xf32> to vector<8xf32>
      %114 = vector.shape_cast %113 : vector<8xf32> to vector<8x1xf32>
      %cst_59 = arith.constant 3.200000e+01 : f32
      %115 = vector.broadcast %cst_59 : f32 to vector<8x1xf32>
      %116 = arith.divf %114, %115 : vector<8x1xf32>
      %117 = vector.broadcast %116 : vector<8x1xf32> to vector<8x32xf32>
      %118 = arith.subf %108, %117 : vector<8x32xf32>
      %119 = arith.mulf %118, %118 : vector<8x32xf32>
      %cst_60 = arith.constant dense<0.000000e+00> : vector<8xf32>
      %120 = vector.multi_reduction <add>, %119, %cst_60 [1] : vector<8x32xf32> to vector<8xf32>
      %121 = vector.shape_cast %120 : vector<8xf32> to vector<8x1xf32>
      %cst_61 = arith.constant 3.200000e+01 : f32
      %122 = vector.broadcast %cst_61 : f32 to vector<8x1xf32>
      %123 = arith.divf %121, %122 : vector<8x1xf32>
      %cst_62 = arith.constant 9.99999997E-7 : f32
      %124 = vector.broadcast %cst_62 : f32 to vector<8x1xf32>
      %125 = arith.addf %123, %124 : vector<8x1xf32>
      %126 = math.rsqrt %125 : vector<8x1xf32>
      %127 = vector.broadcast %126 : vector<8x1xf32> to vector<8x32xf32>
      %128 = arith.mulf %118, %127 : vector<8x32xf32>
      %129 = vector.shape_cast %110 : vector<32xf32> to vector<1x32xf32>
      %130 = vector.broadcast %129 : vector<1x32xf32> to vector<8x32xf32>
      %131 = arith.mulf %128, %130 : vector<8x32xf32>
      %132 = vector.shape_cast %112 : vector<32xf32> to vector<1x32xf32>
      %133 = vector.broadcast %132 : vector<1x32xf32> to vector<8x32xf32>
      %134 = arith.addf %131, %133 : vector<8x32xf32>
      %c0_63 = arith.constant 0 : index
      %c0_64 = arith.constant 0 : index
      %135 = vector.load %arg6[%c0_63, %c0_64] : memref<32x32xf32, #tpu.memory_space<vmem>>, vector<32x32xf32>
      %cst_65 = arith.constant dense<0.000000e+00> : vector<8x32xf32>
      %136 = tpu.matmul %134, %135, %cst_65 {dimension_numbers = #tpu.dot_dimension_numbers<[1], [0], [0], [1], [0, 0, 1, 1], [], []>} : vector<8x32xf32>, vector<32x32xf32>, vector<8x32xf32> -> vector<8x32xf32>
      %c0_66 = arith.constant 0 : index
      %c0_67 = arith.constant 0 : index
      %137 = vector.load %arg7[%c0_66, %c0_67] : memref<32x32xf32, #tpu.memory_space<vmem>>, vector<32x32xf32>
      %cst_68 = arith.constant dense<0.000000e+00> : vector<8x32xf32>
      %138 = tpu.matmul %134, %137, %cst_68 {dimension_numbers = #tpu.dot_dimension_numbers<[1], [0], [0], [1], [0, 0, 1, 1], [], []>} : vector<8x32xf32>, vector<32x32xf32>, vector<8x32xf32> -> vector<8x32xf32>
      %139 = vector.shape_cast %136 : vector<8x32xf32> to vector<8x8x4xf32>
      %140 = tpu.transpose %139, [1, 0, 2] : vector<8x8x4xf32> -> vector<8x8x4xf32>
      %c0_69 = arith.constant 0 : index
      %c0_70 = arith.constant 0 : index
      %c0_71 = arith.constant 0 : index
      %141 = vector.load %arg16[%c0_69, %c0_70, %c0_71] : memref<8x8x4xf32, #tpu.memory_space<vmem>>, vector<8x8x4xf32>
      tpu.vector_store %arg16[%c0_69, %c0_70, %c0_71], %140 {strides = array<i32>} : memref<8x8x4xf32, #tpu.memory_space<vmem>>, vector<8x8x4xf32>,
      %142 = vector.shape_cast %138 : vector<8x32xf32> to vector<8x8x4xf32>
      %143 = tpu.transpose %142, [1, 0, 2] : vector<8x8x4xf32> -> vector<8x8x4xf32>
      %c0_72 = arith.constant 0 : index
      %c0_73 = arith.constant 0 : index
      %c0_74 = arith.constant 0 : index
      %144 = vector.load %arg17[%c0_72, %c0_73, %c0_74] : memref<8x8x4xf32, #tpu.memory_space<vmem>>, vector<8x8x4xf32>
      tpu.vector_store %arg17[%c0_72, %c0_73, %c0_74], %143 {strides = array<i32>} : memref<8x8x4xf32, #tpu.memory_space<vmem>>, vector<8x8x4xf32>,
    } else {
    }
    %c8_i32 = arith.constant 8 : i32
    %3 = arith.muli %arg1, %c8_i32 : i32
    %c0 = arith.constant 0 : index
    %4 = arith.index_cast %3 : i32 to index
    %c0_1 = arith.constant 0 : index
    %5 = vector.load %arg2[%c0, %4, %c0_1] : memref<1x8x32xf32, #tpu.memory_space<vmem>>, vector<1x8x32xf32>
    %6 = vector.shape_cast %5 : vector<1x8x32xf32> to vector<8x32xf32>
    %c0_2 = arith.constant 0 : index
    %c0_3 = arith.constant 0 : index
    %7 = vector.load %arg3[%c0_2, %c0_3] : memref<1x32xf32, #tpu.memory_space<vmem>>, vector<1x32xf32>
    %8 = vector.shape_cast %7 : vector<1x32xf32> to vector<32xf32>
    %c0_4 = arith.constant 0 : index
    %c0_5 = arith.constant 0 : index
    %9 = vector.load %arg4[%c0_4, %c0_5] : memref<1x32xf32, #tpu.memory_space<vmem>>, vector<1x32xf32>
    %10 = vector.shape_cast %9 : vector<1x32xf32> to vector<32xf32>
    %cst = arith.constant dense<0.000000e+00> : vector<8xf32>
    %11 = vector.multi_reduction <add>, %6, %cst [1] : vector<8x32xf32> to vector<8xf32>
    %12 = vector.shape_cast %11 : vector<8xf32> to vector<8x1xf32>
    %cst_6 = arith.constant 3.200000e+01 : f32
    %13 = vector.broadcast %cst_6 : f32 to vector<8x1xf32>
    %14 = arith.divf %12, %13 : vector<8x1xf32>
    %15 = vector.broadcast %14 : vector<8x1xf32> to vector<8x32xf32>
    %16 = arith.subf %6, %15 : vector<8x32xf32>
    %17 = arith.mulf %16, %16 : vector<8x32xf32>
    %cst_7 = arith.constant dense<0.000000e+00> : vector<8xf32>
    %18 = vector.multi_reduction <add>, %17, %cst_7 [1] : vector<8x32xf32> to vector<8xf32>
    %19 = vector.shape_cast %18 : vector<8xf32> to vector<8x1xf32>
    %cst_8 = arith.constant 3.200000e+01 : f32
    %20 = vector.broadcast %cst_8 : f32 to vector<8x1xf32>
    %21 = arith.divf %19, %20 : vector<8x1xf32>
    %cst_9 = arith.constant 9.99999997E-7 : f32
    %22 = vector.broadcast %cst_9 : f32 to vector<8x1xf32>
    %23 = arith.addf %21, %22 : vector<8x1xf32>
    %24 = math.rsqrt %23 : vector<8x1xf32>
    %25 = vector.broadcast %24 : vector<8x1xf32> to vector<8x32xf32>
    %26 = arith.mulf %16, %25 : vector<8x32xf32>
    %27 = vector.shape_cast %8 : vector<32xf32> to vector<1x32xf32>
    %28 = vector.broadcast %27 : vector<1x32xf32> to vector<8x32xf32>
    %29 = arith.mulf %26, %28 : vector<8x32xf32>
    %30 = vector.shape_cast %10 : vector<32xf32> to vector<1x32xf32>
    %31 = vector.broadcast %30 : vector<1x32xf32> to vector<8x32xf32>
    %32 = arith.addf %29, %31 : vector<8x32xf32>
    %c0_10 = arith.constant 0 : index
    %c0_11 = arith.constant 0 : index
    %33 = vector.load %arg5[%c0_10, %c0_11] : memref<32x32xf32, #tpu.memory_space<vmem>>, vector<32x32xf32>
    %cst_12 = arith.constant dense<0.000000e+00> : vector<8x32xf32>
    %34 = tpu.matmul %32, %33, %cst_12 {dimension_numbers = #tpu.dot_dimension_numbers<[1], [0], [0], [1], [0, 0, 1, 1], [], []>} : vector<8x32xf32>, vector<32x32xf32>, vector<8x32xf32> -> vector<8x32xf32>
    %35 = vector.shape_cast %34 : vector<8x32xf32> to vector<8x8x4xf32>
    %36 = tpu.transpose %35, [1, 0, 2] : vector<8x8x4xf32> -> vector<8x8x4xf32>
    %c0_13 = arith.constant 0 : index
    %c0_14 = arith.constant 0 : index
    %c0_15 = arith.constant 0 : index
    %37 = vector.load %arg16[%c0_13, %c0_14, %c0_15] : memref<8x8x4xf32, #tpu.memory_space<vmem>>, vector<8x8x4xf32>
    "tpu.trace_start"() <{level = 10 : i32, message = "hqd,hkd->hqk"}> : () -> ()
    %cst_16 = arith.constant dense<0.000000e+00> : vector<8x8x8xf32>
    %38 = tpu.matmul %36, %37, %cst_16 {dimension_numbers = #tpu.dot_dimension_numbers<[2], [2], [1], [1], [0, 0, 0, 1, 1, 1], [0], [0]>} : vector<8x8x4xf32>, vector<8x8x4xf32>, vector<8x8x8xf32> -> vector<8x8x8xf32>
    "tpu.trace_stop"() : () -> ()
    %cst_17 = arith.constant dense<0xFF800000> : vector<8x8xf32>
    %39 = vector.multi_reduction <maximumf>, %38, %cst_17 [2] : vector<8x8x8xf32> to vector<8x8xf32>
    %40 = vector.shape_cast %39 : vector<8x8xf32> to vector<8x8x1xf32>
    %41 = vector.broadcast %40 : vector<8x8x1xf32> to vector<8x8x8xf32>
    %42 = arith.subf %38, %41 : vector<8x8x8xf32>
    %43 = math.exp %42 : vector<8x8x8xf32>
    %cst_18 = arith.constant dense<0.000000e+00> : vector<8x8xf32>
    %44 = vector.multi_reduction <add>, %43, %cst_18 [2] : vector<8x8x8xf32> to vector<8x8xf32>
    %45 = vector.shape_cast %44 : vector<8x8xf32> to vector<8x8x1xf32>
    %46 = vector.broadcast %45 : vector<8x8x1xf32> to vector<8x8x8xf32>
    %47 = arith.divf %43, %46 : vector<8x8x8xf32>
    %c0_19 = arith.constant 0 : index
    %c0_20 = arith.constant 0 : index
    %c0_21 = arith.constant 0 : index
    %48 = vector.load %arg17[%c0_19, %c0_20, %c0_21] : memref<8x8x4xf32, #tpu.memory_space<vmem>>, vector<8x8x4xf32>
    "tpu.trace_start"() <{level = 10 : i32, message = "hqk,hkd->hqd"}> : () -> ()
    %cst_22 = arith.constant dense<0.000000e+00> : vector<8x8x4xf32>
    %49 = tpu.matmul %47, %48, %cst_22 {dimension_numbers = #tpu.dot_dimension_numbers<[2], [1], [1], [2], [0, 0, 0, 1, 1, 2], [0], [0]>} : vector<8x8x8xf32>, vector<8x8x4xf32>, vector<8x8x4xf32> -> vector<8x8x4xf32>
    "tpu.trace_stop"() : () -> ()
    %50 = tpu.transpose %49, [1, 0, 2] : vector<8x8x4xf32> -> vector<8x8x4xf32>
    %51 = vector.shape_cast %50 : vector<8x8x4xf32> to vector<8x32xf32>
    %c0_23 = arith.constant 0 : index
    %c0_24 = arith.constant 0 : index
    %52 = vector.load %arg8[%c0_23, %c0_24] : memref<32x32xf32, #tpu.memory_space<vmem>>, vector<32x32xf32>
    %cst_25 = arith.constant dense<0.000000e+00> : vector<8x32xf32>
    %53 = tpu.matmul %51, %52, %cst_25 {dimension_numbers = #tpu.dot_dimension_numbers<[1], [0], [0], [1], [0, 0, 1, 1], [], []>} : vector<8x32xf32>, vector<32x32xf32>, vector<8x32xf32> -> vector<8x32xf32>
    %54 = arith.addf %6, %53 : vector<8x32xf32>
    %c0_26 = arith.constant 0 : index
    %c0_27 = arith.constant 0 : index
    %55 = vector.load %arg9[%c0_26, %c0_27] : memref<1x32xf32, #tpu.memory_space<vmem>>, vector<1x32xf32>
    %56 = vector.shape_cast %55 : vector<1x32xf32> to vector<32xf32>
    %c0_28 = arith.constant 0 : index
    %c0_29 = arith.constant 0 : index
    %57 = vector.load %arg10[%c0_28, %c0_29] : memref<1x32xf32, #tpu.memory_space<vmem>>, vector<1x32xf32>
    %58 = vector.shape_cast %57 : vector<1x32xf32> to vector<32xf32>
    %cst_30 = arith.constant dense<0.000000e+00> : vector<8xf32>
    %59 = vector.multi_reduction <add>, %54, %cst_30 [1] : vector<8x32xf32> to vector<8xf32>
    %60 = vector.shape_cast %59 : vector<8xf32> to vector<8x1xf32>
    %cst_31 = arith.constant 3.200000e+01 : f32
    %61 = vector.broadcast %cst_31 : f32 to vector<8x1xf32>
    %62 = arith.divf %60, %61 : vector<8x1xf32>
    %63 = vector.broadcast %62 : vector<8x1xf32> to vector<8x32xf32>
    %64 = arith.subf %54, %63 : vector<8x32xf32>
    %65 = arith.mulf %64, %64 : vector<8x32xf32>
    %cst_32 = arith.constant dense<0.000000e+00> : vector<8xf32>
    %66 = vector.multi_reduction <add>, %65, %cst_32 [1] : vector<8x32xf32> to vector<8xf32>
    %67 = vector.shape_cast %66 : vector<8xf32> to vector<8x1xf32>
    %cst_33 = arith.constant 3.200000e+01 : f32
    %68 = vector.broadcast %cst_33 : f32 to vector<8x1xf32>
    %69 = arith.divf %67, %68 : vector<8x1xf32>
    %cst_34 = arith.constant 9.99999997E-7 : f32
    %70 = vector.broadcast %cst_34 : f32 to vector<8x1xf32>
    %71 = arith.addf %69, %70 : vector<8x1xf32>
    %72 = math.rsqrt %71 : vector<8x1xf32>
    %73 = vector.broadcast %72 : vector<8x1xf32> to vector<8x32xf32>
    %74 = arith.mulf %64, %73 : vector<8x32xf32>
    %75 = vector.shape_cast %56 : vector<32xf32> to vector<1x32xf32>
    %76 = vector.broadcast %75 : vector<1x32xf32> to vector<8x32xf32>
    %77 = arith.mulf %74, %76 : vector<8x32xf32>
    %78 = vector.shape_cast %58 : vector<32xf32> to vector<1x32xf32>
    %79 = vector.broadcast %78 : vector<1x32xf32> to vector<8x32xf32>
    %80 = arith.addf %77, %79 : vector<8x32xf32>
    %c0_35 = arith.constant 0 : index
    %c0_36 = arith.constant 0 : index
    %81 = vector.load %arg11[%c0_35, %c0_36] : memref<32x128xf32, #tpu.memory_space<vmem>>, vector<32x128xf32>
    %cst_37 = arith.constant dense<0.000000e+00> : vector<8x128xf32>
    %82 = tpu.matmul %80, %81, %cst_37 {dimension_numbers = #tpu.dot_dimension_numbers<[1], [0], [0], [1], [0, 0, 1, 1], [], []>} : vector<8x32xf32>, vector<32x128xf32>, vector<8x128xf32> -> vector<8x128xf32>
    %c0_38 = arith.constant 0 : index
    %c0_39 = arith.constant 0 : index
    %83 = vector.load %arg12[%c0_38, %c0_39] : memref<1x128xf32, #tpu.memory_space<vmem>>, vector<1x128xf32>
    %84 = vector.shape_cast %83 : vector<1x128xf32> to vector<128xf32>
    %85 = vector.shape_cast %84 : vector<128xf32> to vector<1x128xf32>
    %86 = vector.broadcast %85 : vector<1x128xf32> to vector<8x128xf32>
    %87 = arith.addf %82, %86 : vector<8x128xf32>
    %cst_40 = arith.constant 5.000000e-01 : f32
    %88 = vector.broadcast %cst_40 : f32 to vector<8x128xf32>
    %89 = arith.mulf %88, %87 : vector<8x128xf32>
    %cst_41 = arith.constant 0.707106769 : f32
    %90 = vector.broadcast %cst_41 : f32 to vector<8x128xf32>
    %91 = arith.mulf %87, %90 : vector<8x128xf32>
    %92 = math.erf %91 : vector<8x128xf32>
    %cst_42 = arith.constant 1.000000e+00 : f32
    %93 = vector.broadcast %cst_42 : f32 to vector<8x128xf32>
    %94 = arith.addf %93, %92 : vector<8x128xf32>
    %95 = arith.mulf %89, %94 : vector<8x128xf32>
    %c0_43 = arith.constant 0 : index
    %c0_44 = arith.constant 0 : index
    %96 = vector.load %arg13[%c0_43, %c0_44] : memref<128x32xf32, #tpu.memory_space<vmem>>, vector<128x32xf32>
    %cst_45 = arith.constant dense<0.000000e+00> : vector<8x32xf32>
    %97 = tpu.matmul %95, %96, %cst_45 {dimension_numbers = #tpu.dot_dimension_numbers<[1], [0], [0], [1], [0, 0, 1, 1], [], []>} : vector<8x128xf32>, vector<128x32xf32>, vector<8x32xf32> -> vector<8x32xf32>
    %c0_46 = arith.constant 0 : index
    %c0_47 = arith.constant 0 : index
    %98 = vector.load %arg14[%c0_46, %c0_47] : memref<1x32xf32, #tpu.memory_space<vmem>>, vector<1x32xf32>
    %99 = vector.shape_cast %98 : vector<1x32xf32> to vector<32xf32>
    %100 = vector.shape_cast %99 : vector<32xf32> to vector<1x32xf32>
    %101 = vector.broadcast %100 : vector<1x32xf32> to vector<8x32xf32>
    %102 = arith.addf %97, %101 : vector<8x32xf32>
    %103 = arith.addf %54, %102 : vector<8x32xf32>
    %c0_48 = arith.constant 0 : index
    %c0_49 = arith.constant 0 : index
    %c0_50 = arith.constant 0 : index
    %104 = vector.load %arg15[%c0_48, %c0_49, %c0_50] : memref<1x8x32xf32, #tpu.memory_space<vmem>>, vector<1x8x32xf32>
    %105 = vector.shape_cast %104 : vector<1x8x32xf32> to vector<8x32xf32>
    %106 = vector.shape_cast %103 : vector<8x32xf32> to vector<1x8x32xf32>
    tpu.vector_store %arg15[%c0_48, %c0_49, %c0_50], %106 {strides = array<i32>} : memref<1x8x32xf32, #tpu.memory_space<vmem>>, vector<1x8x32xf32>,
    return
  }
  func.func @transform_0(%arg0: i32, %arg1: i32) -> (i32, i32, i32) {
    %c0_i32 = arith.constant 0 : i32
    %c0_i32_0 = arith.constant 0 : i32
    %c0_i32_1 = arith.constant 0 : i32
    return %arg0, %c0_i32, %c0_i32_0 : i32, i32, i32
  }
  func.func @transform_1(%arg0: i32, %arg1: i32) -> (i32, i32) {
    %c0_i32 = arith.constant 0 : i32
    %c0_i32_0 = arith.constant 0 : i32
    %c0_i32_1 = arith.constant 0 : i32
    return %c0_i32, %c0_i32_0 : i32, i32
  }
  func.func @transform_2(%arg0: i32, %arg1: i32) -> (i32, i32) {
    %c0_i32 = arith.constant 0 : i32
    %c0_i32_0 = arith.constant 0 : i32
    %c0_i32_1 = arith.constant 0 : i32
    return %c0_i32, %c0_i32_0 : i32, i32
  }
  func.func @transform_3(%arg0: i32, %arg1: i32) -> (i32, i32) {
    %c0_i32 = arith.constant 0 : i32
    %c0_i32_0 = arith.constant 0 : i32
    %c0_i32_1 = arith.constant 0 : i32
    return %c0_i32, %c0_i32_0 : i32, i32
  }
  func.func @transform_4(%arg0: i32, %arg1: i32) -> (i32, i32) {
    %c0_i32 = arith.constant 0 : i32
    %c0_i32_0 = arith.constant 0 : i32
    %c0_i32_1 = arith.constant 0 : i32
    return %c0_i32, %c0_i32_0 : i32, i32
  }
  func.func @transform_5(%arg0: i32, %arg1: i32) -> (i32, i32) {
    %c0_i32 = arith.constant 0 : i32
    %c0_i32_0 = arith.constant 0 : i32
    %c0_i32_1 = arith.constant 0 : i32
    return %c0_i32, %c0_i32_0 : i32, i32
  }
  func.func @transform_6(%arg0: i32, %arg1: i32) -> (i32, i32) {
    %c0_i32 = arith.constant 0 : i32
    %c0_i32_0 = arith.constant 0 : i32
    %c0_i32_1 = arith.constant 0 : i32
    return %c0_i32, %c0_i32_0 : i32, i32
  }
  func.func @transform_7(%arg0: i32, %arg1: i32) -> (i32, i32) {
    %c0_i32 = arith.constant 0 : i32
    %c0_i32_0 = arith.constant 0 : i32
    %c0_i32_1 = arith.constant 0 : i32
    return %c0_i32, %c0_i32_0 : i32, i32
  }
  func.func @transform_8(%arg0: i32, %arg1: i32) -> (i32, i32) {
    %c0_i32 = arith.constant 0 : i32
    %c0_i32_0 = arith.constant 0 : i32
    %c0_i32_1 = arith.constant 0 : i32
    return %c0_i32, %c0_i32_0 : i32, i32
  }
  func.func @transform_9(%arg0: i32, %arg1: i32) -> (i32, i32) {
    %c0_i32 = arith.constant 0 : i32
    %c0_i32_0 = arith.constant 0 : i32
    %c0_i32_1 = arith.constant 0 : i32
    return %c0_i32, %c0_i32_0 : i32, i32
  }
  func.func @transform_10(%arg0: i32, %arg1: i32) -> (i32, i32) {
    %c0_i32 = arith.constant 0 : i32
    %c0_i32_0 = arith.constant 0 : i32
    %c0_i32_1 = arith.constant 0 : i32
    return %c0_i32, %c0_i32_0 : i32, i32
  }
  func.func @transform_11(%arg0: i32, %arg1: i32) -> (i32, i32) {
    %c0_i32 = arith.constant 0 : i32
    %c0_i32_0 = arith.constant 0 : i32
    %c0_i32_1 = arith.constant 0 : i32
    return %c0_i32, %c0_i32_0 : i32, i32
  }
  func.func @transform_12(%arg0: i32, %arg1: i32) -> (i32, i32) {
    %c0_i32 = arith.constant 0 : i32
    %c0_i32_0 = arith.constant 0 : i32
    %c0_i32_1 = arith.constant 0 : i32
    return %c0_i32, %c0_i32_0 : i32, i32
  }
  func.func @transform_13(%arg0: i32, %arg1: i32) -> (i32, i32, i32) {
    %c0_i32 = arith.constant 0 : i32
    %c0_i32_0 = arith.constant 0 : i32
    return %arg0, %arg1, %c0_i32 : i32, i32, i32
  }
}

</mosaic_0001>

<llo_original>
// kernel: tpu_custom_call.1
$region0: #{tpu_custom_call.1}
  #allocation0 [shape = 'u32[]', space=smem, size = 0x4, offset = 0x4, fixed_abs, tag = 'smem constant byte address 0x4 - core index']
  #allocation1 [shape = 'u32[144,128]{1,0:T(1,128)}', space=vmem, size = 0x12000, scoped, tag = 'internal scratch']
  #allocation2 [shape = 'f32[8,8,4]{2,1,0:T(8,128)}', space=vmem, size = 0x8000, scoped, tag = 'scratch operand']
  #allocation3 [shape = 'f32[8,8,4]{2,1,0:T(8,128)}', space=vmem, size = 0x8000, scoped, tag = 'scratch operand']
  %s0 = inlined_call_operand.hbm [shape: f32[2,8,32], index: 0, kind: input, shape index: {}]
  %s1 = inlined_call_operand.vmem [shape: f32[1,32], index: 1, kind: input, shape index: {}]
  %s2 = inlined_call_operand.vmem [shape: f32[1,32], index: 2, kind: input, shape index: {}]
  %s3 = inlined_call_operand.vmem [shape: f32[32,32], index: 3, kind: input, shape index: {}]
  %s4 = inlined_call_operand.vmem [shape: f32[32,32], index: 4, kind: input, shape index: {}]
  %s5 = inlined_call_operand.vmem [shape: f32[32,32], index: 5, kind: input, shape index: {}]
  %s6 = inlined_call_operand.vmem [shape: f32[32,32], index: 6, kind: input, shape index: {}]
  %s7 = inlined_call_operand.vmem [shape: f32[1,32], index: 7, kind: input, shape index: {}]
  %s8 = inlined_call_operand.vmem [shape: f32[1,32], index: 8, kind: input, shape index: {}]
  %s9 = inlined_call_operand.vmem [shape: f32[32,128], index: 9, kind: input, shape index: {}]
  %s10 = inlined_call_operand.vmem [shape: f32[1,128], index: 10, kind: input, shape index: {}]
  %s11 = inlined_call_operand.vmem [shape: f32[128,32], index: 11, kind: input, shape index: {}]
  %s12 = inlined_call_operand.vmem [shape: f32[1,32], index: 12, kind: input, shape index: {}]
  %s13 = inlined_call_operand.hbm [shape: f32[2,8,32], index: 13, kind: output, shape index: {}]
  %s14 = sld [smem:[#allocation0]]
  $region93: #{tpu_custom_call.1} parent=0
    _
  %s16 = ssub.s32 1, %s14
  %s17 = scalar_select 0, %s16, %s14
  $region1: #{tpu_custom_call.1} parent=0
    #allocation4 [shape = 'u8[8192]{0}', space=vmem, size = 0x2000, scoped, tag = 'input window, operand 0']
    #allocation5 [shape = 's32[2]{0}', space=sflag, size = 0x8, scoped, tag = 'scoped memory for tpu_custom_call.1']
    #allocation6 [shape = 's32[2]{0}', space=sflag, size = 0x8, scoped, tag = 'scoped memory for tpu_custom_call.1']
    #allocation7 [shape = 'u8[8192]{0}', space=vmem, size = 0x2000, scoped, tag = 'output window, operand 0']
    %18 = vsyncpa [#allocation5], 0
    %s19 = scalar_lea.sflag [#allocation5], 1
    %20 = vsyncpa %s19, 0
    %21 = vsyncpa [#allocation6], 0
    %s22 = scalar_lea.sflag [#allocation6], 1
    %23 = vsyncpa %s22, 0
    loop: start=0, step=1, limit=4
    $region2: #{tpu_custom_call.1} parent=1 // loop_pre_header
      _
    $region3: #{tpu_custom_call.1} parent=1 // loop_header
      %s25 = sphi 0, %s29
      %p26 = scmp.ge.s32.totalorder %s25, 4
      %s32 = sphi 0, %s44
      %s33 = sphi 0, %s40
      %s34 = sphi 0, %s32
      %s35 = sphi 0, %s33
      %s36 = sphi 0, %s34
      %s37 = sphi 0, %s35
      %s47 = sphi 0, %s49
      %s50 = sphi 0, %s47
      %s51 = sphi 0, %s50
      %s67 = sphi 0, %s51
      %s71 = sphi 0, %s71
      %s73 = sphi 0, %s71
      %s74 = sphi 0, %s73
      %s88 = sphi 0, %s74
      %s92 = sphi 0, %s92
      %s94 = sphi 0, %s92
      %s95 = sphi 0, %s94
      %s109 = sphi 0, %s95
      %s113 = sphi 0, %s113
      %s115 = sphi 0, %s113
      %s116 = sphi 0, %s115
      %s130 = sphi 0, %s116
      %s134 = sphi 0, %s134
      %s136 = sphi 0, %s134
      %s137 = sphi 0, %s136
      %s151 = sphi 0, %s137
      %s155 = sphi 0, %s155
      %s157 = sphi 0, %s155
      %s158 = sphi 0, %s157
      %s172 = sphi 0, %s158
      %s176 = sphi 0, %s176
      %s178 = sphi 0, %s176
      %s179 = sphi 0, %s178
      %s193 = sphi 0, %s179
      %s197 = sphi 0, %s197
      %s199 = sphi 0, %s197
      %s200 = sphi 0, %s199
      %s214 = sphi 0, %s200
      %s218 = sphi 0, %s218
      %s220 = sphi 0, %s218
      %s221 = sphi 0, %s220
      %s235 = sphi 0, %s221
      %s239 = sphi 0, %s239
      %s241 = sphi 0, %s239
      %s242 = sphi 0, %s241
      %s256 = sphi 0, %s242
      %s260 = sphi 0, %s260
      %s262 = sphi 0, %s260
      %s263 = sphi 0, %s262
      %s277 = sphi 0, %s263
      %s281 = sphi 0, %s281
      %s283 = sphi 0, %s281
      %s284 = sphi 0, %s283
      %s298 = sphi 0, %s284
      %s302 = sphi 0, %s302
      %s304 = sphi 0, %s302
      %s305 = sphi 0, %s304
      %s319 = sphi 0, %s305
      %s327 = sphi 0, %s329
      %s330 = sphi 0, %s327
      %s331 = sphi 0, %s330
      %s347 = sphi 0, %s331
    $region4: #{tpu_custom_call.1} parent=1 // loop_header_branch
      %28 = sbr.rel (%p26) target = $region8
    $region5: #{tpu_custom_call.1} parent=1 // loop_body
      %s30 = ssub.s32 %s25, 1
      %s31 = ssub.s32 %s25, 2
      %s38 = sadd.s32 1, %s33
      %p39 = scmp.ge.s32.totalorder %s38, 1
      %s40 = scalar_select %p39, 0, %s38
      %s41 = sadd.s32 1, %s32
      %s42 = scalar_select %p39, %s41, %s32
      %p43 = scmp.ge.s32.totalorder %s42, 2
      %s44 = scalar_select %p43, 0, %s42
      %s45 = ssub.s32 %s32, %s44
      %p46 = scmp.eq.s32.totalorder %s45, 0
      %s48 = sadd.s32 %s47, 1
      %s49 = scalar_select %p46, %s47, %s48
      %p52 = pneg %p46
      %p53 = scmp.eq.s32.totalorder %s25, 1
      %p54 = por %p52, %p53
      %p55 = scmp.ne.s32.totalorder %s47, %s50
      %p56 = scmp.eq.s32.totalorder %s25, 0
      %p57 = por %p55, %p56
      %p58 = scmp.ne.s32.totalorder %s47, %s50
      %p59 = scmp.eq.s32.totalorder %s30, 1
      %p60 = por %p58, %p59
      %p61 = scmp.ne.s32.totalorder %s50, %s51
      %p62 = scmp.eq.s32.totalorder %s30, 0
      %p63 = por %p61, %p62
      %p64 = scmp.ne.s32.totalorder %s50, %s51
      %p65 = scmp.eq.s32.totalorder %s31, 1
      %p66 = por %p64, %p65
      %p68 = scmp.ne.s32.totalorder %s51, %s67
      %p69 = scmp.eq.s32.totalorder %s31, 0
      %p70 = por %p68, %p69
      %s72 = sadd.s32 %s71, 1
      %p75 = scmp.eq.s32.totalorder %s25, 1
      %p76 = scmp.ne.s32.totalorder %s71, %s73
      %p77 = scmp.eq.s32.totalorder %s25, 0
      %p78 = por %p76, %p77
      %p79 = scmp.ne.s32.totalorder %s71, %s73
      %p80 = scmp.eq.s32.totalorder %s30, 1
      %p81 = por %p79, %p80
      %p82 = scmp.ne.s32.totalorder %s73, %s74
      %p83 = scmp.eq.s32.totalorder %s30, 0
      %p84 = por %p82, %p83
      %p85 = scmp.ne.s32.totalorder %s73, %s74
      %p86 = scmp.eq.s32.totalorder %s31, 1
      %p87 = por %p85, %p86
      %p89 = scmp.ne.s32.totalorder %s74, %s88
      %p90 = scmp.eq.s32.totalorder %s31, 0
      %p91 = por %p89, %p90
      %s93 = sadd.s32 %s92, 1
      %p96 = scmp.eq.s32.totalorder %s25, 1
      %p97 = scmp.ne.s32.totalorder %s92, %s94
      %p98 = scmp.eq.s32.totalorder %s25, 0
      %p99 = por %p97, %p98
      %p100 = scmp.ne.s32.totalorder %s92, %s94
      %p101 = scmp.eq.s32.totalorder %s30, 1
      %p102 = por %p100, %p101
      %p103 = scmp.ne.s32.totalorder %s94, %s95
      %p104 = scmp.eq.s32.totalorder %s30, 0
      %p105 = por %p103, %p104
      %p106 = scmp.ne.s32.totalorder %s94, %s95
      %p107 = scmp.eq.s32.totalorder %s31, 1
      %p108 = por %p106, %p107
      %p110 = scmp.ne.s32.totalorder %s95, %s109
      %p111 = scmp.eq.s32.totalorder %s31, 0
      %p112 = por %p110, %p111
      %s114 = sadd.s32 %s113, 1
      %p117 = scmp.eq.s32.totalorder %s25, 1
      %p118 = scmp.ne.s32.totalorder %s113, %s115
      %p119 = scmp.eq.s32.totalorder %s25, 0
      %p120 = por %p118, %p119
      %p121 = scmp.ne.s32.totalorder %s113, %s115
      %p122 = scmp.eq.s32.totalorder %s30, 1
      %p123 = por %p121, %p122
      %p124 = scmp.ne.s32.totalorder %s115, %s116
      %p125 = scmp.eq.s32.totalorder %s30, 0
      %p126 = por %p124, %p125
      %p127 = scmp.ne.s32.totalorder %s115, %s116
      %p128 = scmp.eq.s32.totalorder %s31, 1
      %p129 = por %p127, %p128
      %p131 = scmp.ne.s32.totalorder %s116, %s130
      %p132 = scmp.eq.s32.totalorder %s31, 0
      %p133 = por %p131, %p132
      %s135 = sadd.s32 %s134, 1
      %p138 = scmp.eq.s32.totalorder %s25, 1
      %p139 = scmp.ne.s32.totalorder %s134, %s136
      %p140 = scmp.eq.s32.totalorder %s25, 0
      %p141 = por %p139, %p140
      %p142 = scmp.ne.s32.totalorder %s134, %s136
      %p143 = scmp.eq.s32.totalorder %s30, 1
      %p144 = por %p142, %p143
      %p145 = scmp.ne.s32.totalorder %s136, %s137
      %p146 = scmp.eq.s32.totalorder %s30, 0
      %p147 = por %p145, %p146
      %p148 = scmp.ne.s32.totalorder %s136, %s137
      %p149 = scmp.eq.s32.totalorder %s31, 1
      %p150 = por %p148, %p149
      %p152 = scmp.ne.s32.totalorder %s137, %s151
      %p153 = scmp.eq.s32.totalorder %s31, 0
      %p154 = por %p152, %p153
      %s156 = sadd.s32 %s155, 1
      %p159 = scmp.eq.s32.totalorder %s25, 1
      %p160 = scmp.ne.s32.totalorder %s155, %s157
      %p161 = scmp.eq.s32.totalorder %s25, 0
      %p162 = por %p160, %p161
      %p163 = scmp.ne.s32.totalorder %s155, %s157
      %p164 = scmp.eq.s32.totalorder %s30, 1
      %p165 = por %p163, %p164
      %p166 = scmp.ne.s32.totalorder %s157, %s158
      %p167 = scmp.eq.s32.totalorder %s30, 0
      %p168 = por %p166, %p167
      %p169 = scmp.ne.s32.totalorder %s157, %s158
      %p170 = scmp.eq.s32.totalorder %s31, 1
      %p171 = por %p169, %p170
      %p173 = scmp.ne.s32.totalorder %s158, %s172
      %p174 = scmp.eq.s32.totalorder %s31, 0
      %p175 = por %p173, %p174
      %s177 = sadd.s32 %s176, 1
      %p180 = scmp.eq.s32.totalorder %s25, 1
      %p181 = scmp.ne.s32.totalorder %s176, %s178
      %p182 = scmp.eq.s32.totalorder %s25, 0
      %p183 = por %p181, %p182
      %p184 = scmp.ne.s32.totalorder %s176, %s178
      %p185 = scmp.eq.s32.totalorder %s30, 1
      %p186 = por %p184, %p185
      %p187 = scmp.ne.s32.totalorder %s178, %s179
      %p188 = scmp.eq.s32.totalorder %s30, 0
      %p189 = por %p187, %p188
      %p190 = scmp.ne.s32.totalorder %s178, %s179
      %p191 = scmp.eq.s32.totalorder %s31, 1
      %p192 = por %p190, %p191
      %p194 = scmp.ne.s32.totalorder %s179, %s193
      %p195 = scmp.eq.s32.totalorder %s31, 0
      %p196 = por %p194, %p195
      %s198 = sadd.s32 %s197, 1
      %p201 = scmp.eq.s32.totalorder %s25, 1
      %p202 = scmp.ne.s32.totalorder %s197, %s199
      %p203 = scmp.eq.s32.totalorder %s25, 0
      %p204 = por %p202, %p203
      %p205 = scmp.ne.s32.totalorder %s197, %s199
      %p206 = scmp.eq.s32.totalorder %s30, 1
      %p207 = por %p205, %p206
      %p208 = scmp.ne.s32.totalorder %s199, %s200
      %p209 = scmp.eq.s32.totalorder %s30, 0
      %p210 = por %p208, %p209
      %p211 = scmp.ne.s32.totalorder %s199, %s200
      %p212 = scmp.eq.s32.totalorder %s31, 1
      %p213 = por %p211, %p212
      %p215 = scmp.ne.s32.totalorder %s200, %s214
      %p216 = scmp.eq.s32.totalorder %s31, 0
      %p217 = por %p215, %p216
      %s219 = sadd.s32 %s218, 1
      %p222 = scmp.eq.s32.totalorder %s25, 1
      %p223 = scmp.ne.s32.totalorder %s218, %s220
      %p224 = scmp.eq.s32.totalorder %s25, 0
      %p225 = por %p223, %p224
      %p226 = scmp.ne.s32.totalorder %s218, %s220
      %p227 = scmp.eq.s32.totalorder %s30, 1
      %p228 = por %p226, %p227
      %p229 = scmp.ne.s32.totalorder %s220, %s221
      %p230 = scmp.eq.s32.totalorder %s30, 0
      %p231 = por %p229, %p230
      %p232 = scmp.ne.s32.totalorder %s220, %s221
      %p233 = scmp.eq.s32.totalorder %s31, 1
      %p234 = por %p232, %p233
      %p236 = scmp.ne.s32.totalorder %s221, %s235
      %p237 = scmp.eq.s32.totalorder %s31, 0
      %p238 = por %p236, %p237
      %s240 = sadd.s32 %s239, 1
      %p243 = scmp.eq.s32.totalorder %s25, 1
      %p244 = scmp.ne.s32.totalorder %s239, %s241
      %p245 = scmp.eq.s32.totalorder %s25, 0
      %p246 = por %p244, %p245
      %p247 = scmp.ne.s32.totalorder %s239, %s241
      %p248 = scmp.eq.s32.totalorder %s30, 1
      %p249 = por %p247, %p248
      %p250 = scmp.ne.s32.totalorder %s241, %s242
      %p251 = scmp.eq.s32.totalorder %s30, 0
      %p252 = por %p250, %p251
      %p253 = scmp.ne.s32.totalorder %s241, %s242
      %p254 = scmp.eq.s32.totalorder %s31, 1
      %p255 = por %p253, %p254
      %p257 = scmp.ne.s32.totalorder %s242, %s256
      %p258 = scmp.eq.s32.totalorder %s31, 0
      %p259 = por %p257, %p258
      %s261 = sadd.s32 %s260, 1
      %p264 = scmp.eq.s32.totalorder %s25, 1
      %p265 = scmp.ne.s32.totalorder %s260, %s262
      %p266 = scmp.eq.s32.totalorder %s25, 0
      %p267 = por %p265, %p266
      %p268 = scmp.ne.s32.totalorder %s260, %s262
      %p269 = scmp.eq.s32.totalorder %s30, 1
      %p270 = por %p268, %p269
      %p271 = scmp.ne.s32.totalorder %s262, %s263
      %p272 = scmp.eq.s32.totalorder %s30, 0
      %p273 = por %p271, %p272
      %p274 = scmp.ne.s32.totalorder %s262, %s263
      %p275 = scmp.eq.s32.totalorder %s31, 1
      %p276 = por %p274, %p275
      %p278 = scmp.ne.s32.totalorder %s263, %s277
      %p279 = scmp.eq.s32.totalorder %s31, 0
      %p280 = por %p278, %p279
      %s282 = sadd.s32 %s281, 1
      %p285 = scmp.eq.s32.totalorder %s25, 1
      %p286 = scmp.ne.s32.totalorder %s281, %s283
      %p287 = scmp.eq.s32.totalorder %s25, 0
      %p288 = por %p286, %p287
      %p289 = scmp.ne.s32.totalorder %s281, %s283
      %p290 = scmp.eq.s32.totalorder %s30, 1
      %p291 = por %p289, %p290
      %p292 = scmp.ne.s32.totalorder %s283, %s284
      %p293 = scmp.eq.s32.totalorder %s30, 0
      %p294 = por %p292, %p293
      %p295 = scmp.ne.s32.totalorder %s283, %s284
      %p296 = scmp.eq.s32.totalorder %s31, 1
      %p297 = por %p295, %p296
      %p299 = scmp.ne.s32.totalorder %s284, %s298
      %p300 = scmp.eq.s32.totalorder %s31, 0
      %p301 = por %p299, %p300
      %s303 = sadd.s32 %s302, 1
      %p306 = scmp.eq.s32.totalorder %s25, 1
      %p307 = scmp.ne.s32.totalorder %s302, %s304
      %p308 = scmp.eq.s32.totalorder %s25, 0
      %p309 = por %p307, %p308
      %p310 = scmp.ne.s32.totalorder %s302, %s304
      %p311 = scmp.eq.s32.totalorder %s30, 1
      %p312 = por %p310, %p311
      %p313 = scmp.ne.s32.totalorder %s304, %s305
      %p314 = scmp.eq.s32.totalorder %s30, 0
      %p315 = por %p313, %p314
      %p316 = scmp.ne.s32.totalorder %s304, %s305
      %p317 = scmp.eq.s32.totalorder %s31, 1
      %p318 = por %p316, %p317
      %p320 = scmp.ne.s32.totalorder %s305, %s319
      %p321 = scmp.eq.s32.totalorder %s31, 0
      %p322 = por %p320, %p321
      %s323 = ssub.s32 %s32, %s44
      %s324 = ssub.s32 %s33, %s40
      %s325 = sor.u32 %s323, %s324
      %p326 = scmp.eq.s32.totalorder %s325, 0
      %s328 = sadd.s32 %s327, 1
      %s329 = scalar_select %p326, %s327, %s328
      %p332 = pneg %p326
      %p333 = scmp.eq.s32.totalorder %s25, 1
      %p334 = por %p332, %p333
      %p335 = scmp.ne.s32.totalorder %s327, %s330
      %p336 = scmp.eq.s32.totalorder %s25, 0
      %p337 = por %p335, %p336
      %p338 = scmp.ne.s32.totalorder %s327, %s330
      %p339 = scmp.eq.s32.totalorder %s30, 1
      %p340 = por %p338, %p339
      %p341 = scmp.ne.s32.totalorder %s330, %s331
      %p342 = scmp.eq.s32.totalorder %s30, 0
      %p343 = por %p341, %p342
      %p344 = scmp.ne.s32.totalorder %s330, %s331
      %p345 = scmp.eq.s32.totalorder %s31, 1
      %p346 = por %p344, %p345
      %p348 = scmp.ne.s32.totalorder %s331, %s347
      %p349 = scmp.eq.s32.totalorder %s31, 0
      %p350 = por %p348, %p349
      %p351 = scmp.le.s32.totalorder 1, %s25
      %p352 = scmp.lt.s32.totalorder %s25, 3
      %p353 = pnand %p351, %p352
      %p354 = pneg %p353
      // Predicated region
      $region9: #{tpu_custom_call.1} parent=5 // pred_check
        _
      $region10: #{tpu_custom_call.1} parent=5 // pred_check_branch
        %356 = sbr.rel (%p353) target = $region12
      $region11: #{tpu_custom_call.1} parent=5 // pred_region
        %s357 = ssub.s32 %s25, 1
        // Predicated region
        $region13: #{tpu_custom_call.1} parent=11 // pred_check
          %p358 = pneg %p84
        $region14: #{tpu_custom_call.1} parent=11 // pred_check_branch
          %360 = sbr.rel (%p358) target = $region16
        $region15: #{tpu_custom_call.1} parent=11 // pred_region
          _
        $region16: #{tpu_custom_call.1} parent=11 // pred_fallthru
          _
        // Predicated region
        $region17: #{tpu_custom_call.1} parent=11 // pred_check
          %p361 = pneg %p105
        $region18: #{tpu_custom_call.1} parent=11 // pred_check_branch
          %363 = sbr.rel (%p361) target = $region20
        $region19: #{tpu_custom_call.1} parent=11 // pred_region
          _
        $region20: #{tpu_custom_call.1} parent=11 // pred_fallthru
          _
        // Predicated region
        $region21: #{tpu_custom_call.1} parent=11 // pred_check
          %p364 = pneg %p126
        $region22: #{tpu_custom_call.1} parent=11 // pred_check_branch
          %366 = sbr.rel (%p364) target = $region24
        $region23: #{tpu_custom_call.1} parent=11 // pred_region
          _
        $region24: #{tpu_custom_call.1} parent=11 // pred_fallthru
          _
        // Predicated region
        $region25: #{tpu_custom_call.1} parent=11 // pred_check
          %p367 = pneg %p147
        $region26: #{tpu_custom_call.1} parent=11 // pred_check_branch
          %369 = sbr.rel (%p367) target = $region28
        $region27: #{tpu_custom_call.1} parent=11 // pred_region
          _
        $region28: #{tpu_custom_call.1} parent=11 // pred_fallthru
          _
        // Predicated region
        $region29: #{tpu_custom_call.1} parent=11 // pred_check
          %p370 = pneg %p168
        $region30: #{tpu_custom_call.1} parent=11 // pred_check_branch
          %372 = sbr.rel (%p370) target = $region32
        $region31: #{tpu_custom_call.1} parent=11 // pred_region
          _
        $region32: #{tpu_custom_call.1} parent=11 // pred_fallthru
          _
        // Predicated region
        $region33: #{tpu_custom_call.1} parent=11 // pred_check
          %p373 = pneg %p189
        $region34: #{tpu_custom_call.1} parent=11 // pred_check_branch
          %375 = sbr.rel (%p373) target = $region36
        $region35: #{tpu_custom_call.1} parent=11 // pred_region
          _
        $region36: #{tpu_custom_call.1} parent=11 // pred_fallthru
          _
        // Predicated region
        $region37: #{tpu_custom_call.1} parent=11 // pred_check
          %p376 = pneg %p210
        $region38: #{tpu_custom_call.1} parent=11 // pred_check_branch
          %378 = sbr.rel (%p376) target = $region40
        $region39: #{tpu_custom_call.1} parent=11 // pred_region
          _
        $region40: #{tpu_custom_call.1} parent=11 // pred_fallthru
          _
        // Predicated region
        $region41: #{tpu_custom_call.1} parent=11 // pred_check
          %p379 = pneg %p231
        $region42: #{tpu_custom_call.1} parent=11 // pred_check_branch
          %381 = sbr.rel (%p379) target = $region44
        $region43: #{tpu_custom_call.1} parent=11 // pred_region
          _
        $region44: #{tpu_custom_call.1} parent=11 // pred_fallthru
          _
        // Predicated region
        $region45: #{tpu_custom_call.1} parent=11 // pred_check
          %p382 = pneg %p252
        $region46: #{tpu_custom_call.1} parent=11 // pred_check_branch
          %384 = sbr.rel (%p382) target = $region48
        $region47: #{tpu_custom_call.1} parent=11 // pred_region
          _
        $region48: #{tpu_custom_call.1} parent=11 // pred_fallthru
          _
        // Predicated region
        $region49: #{tpu_custom_call.1} parent=11 // pred_check
          %p385 = pneg %p273
        $region50: #{tpu_custom_call.1} parent=11 // pred_check_branch
          %387 = sbr.rel (%p385) target = $region52
        $region51: #{tpu_custom_call.1} parent=11 // pred_region
          _
        $region52: #{tpu_custom_call.1} parent=11 // pred_fallthru
          _
        // Predicated region
        $region53: #{tpu_custom_call.1} parent=11 // pred_check
          %p388 = pneg %p294
        $region54: #{tpu_custom_call.1} parent=11 // pred_check_branch
          %390 = sbr.rel (%p388) target = $region56
        $region55: #{tpu_custom_call.1} parent=11 // pred_region
          _
        $region56: #{tpu_custom_call.1} parent=11 // pred_fallthru
          _
        // Predicated region
        $region57: #{tpu_custom_call.1} parent=11 // pred_check
          %p391 = pneg %p315
        $region58: #{tpu_custom_call.1} parent=11 // pred_check_branch
          %393 = sbr.rel (%p391) target = $region60
        $region59: #{tpu_custom_call.1} parent=11 // pred_region
          _
        $region60: #{tpu_custom_call.1} parent=11 // pred_fallthru
          _
      $region12: #{tpu_custom_call.1} parent=5 // pred_fallthru
        _
      %p394 = scmp.lt.s32.totalorder %s25, 2
      // Predicated region
      $region61: #{tpu_custom_call.1} parent=5 // pred_check
        %p395 = pneg %p394
      $region62: #{tpu_custom_call.1} parent=5 // pred_check_branch
        %397 = sbr.rel (%p395) target = $region64
      $region63: #{tpu_custom_call.1} parent=5 // pred_region
        // Predicated region
        $region65: #{tpu_custom_call.1} parent=63 // pred_check
          %p398 = pneg %p57
        $region66: #{tpu_custom_call.1} parent=63 // pred_check_branch
          %400 = sbr.rel (%p398) target = $region68
        $region67: #{tpu_custom_call.1} parent=63 // pred_region
          %s401 = sand.u32 %s47, 1
          %s402 = scalar_lea.sflag [#allocation5], %s401
          %s403 = sand.u32 %s47, 1
          %s404 = smul.addr %s403, 8
          %s405 = scalar_lea.vmem [#allocation4], %s404
          %s407 = ssub.s32 128, 128
          %408 = vsyncadd %s402, %s407
          %s409 = smul.addr %s32, 128
          %s410 = scalar_lea.hbm %s0, %s409
          %s412 = sshll.u32 %s405, 4
          %s413 = int_to_ptr.vmem [resolvable:$true] %s412
          %415 = dma.hbm_to_vmem [thread:$0]  %s410, 128, %s413, %s402
        $region68: #{tpu_custom_call.1} parent=63 // pred_fallthru
          _
      $region64: #{tpu_custom_call.1} parent=5 // pred_fallthru
        _
      %p416 = scmp.le.s32.totalorder 1, %s25
      %p417 = scmp.lt.s32.totalorder %s25, 3
      %p418 = pnand %p416, %p417
      %p419 = pneg %p418
      // Predicated region
      $region69: #{tpu_custom_call.1} parent=5 // pred_check
        _
      $region70: #{tpu_custom_call.1} parent=5 // pred_check_branch
        %421 = sbr.rel (%p418) target = $region72
      $region71: #{tpu_custom_call.1} parent=5 // pred_region
        %s422 = ssub.s32 %s25, 1
        %s423 = sand.u32 %s50, 1
        %s424 = scalar_lea.sflag [#allocation5], %s423
        %s425 = sand.u32 %s50, 1
        %s426 = smul.addr %s425, 8
        %s427 = scalar_lea.vmem [#allocation4], %s426
        // Predicated region
        $region73: #{tpu_custom_call.1} parent=71 // pred_check
          %p428 = pneg %p63
        $region74: #{tpu_custom_call.1} parent=71 // pred_check_branch
          %430 = sbr.rel (%p428) target = $region76
        $region75: #{tpu_custom_call.1} parent=71 // pred_region
          %431 = dma.done %s424, 128
        $region76: #{tpu_custom_call.1} parent=71 // pred_fallthru
          _
        %s432 = sand.u32 %s50, 1
        %s433 = scalar_lea.sflag [#allocation5], %s432
        %s434 = sand.u32 %s50, 1
        %s435 = smul.addr %s434, 8
        %s436 = scalar_lea.vmem [#allocation4], %s435
        %p437 = pneg %p63
        %p438 = pneg %p60
        %p439 = pneg %p84
        %p440 = pneg %p81
        %p441 = pneg %p105
        %p442 = pneg %p102
        %p443 = pneg %p126
        %p444 = pneg %p123
        %p445 = pneg %p147
        %p446 = pneg %p144
        %p447 = pneg %p168
        %p448 = pneg %p165
        %p449 = pneg %p189
        %p450 = pneg %p186
        %p451 = pneg %p210
        %p452 = pneg %p207
        %p453 = pneg %p231
        %p454 = pneg %p228
        %p455 = pneg %p252
        %p456 = pneg %p249
        %p457 = pneg %p273
        %p458 = pneg %p270
        %p459 = pneg %p294
        %p460 = pneg %p291
        %p461 = pneg %p315
        %p462 = pneg %p312
        %p463 = pneg %p343
        %p464 = pneg %p340
        %s465 = sand.u32 %s330, 1
        %s466 = scalar_lea.sflag [#allocation6], %s465
        %s467 = sand.u32 %s330, 1
        %s468 = smul.addr %s467, 8
        %s469 = scalar_lea.vmem [#allocation7], %s468
        %p470 = scmp.eq.s32.totalorder %s35, 0
        // Predicated region
        $region77: #{tpu_custom_call.1} parent=71 // pred_check
          %p471 = pneg %p470
        $region78: #{tpu_custom_call.1} parent=71 // pred_check_branch
          %473 = sbr.rel (%p471) target = $region80
        $region79: #{tpu_custom_call.1} parent=71 // pred_region
          %v474 = vld [vmem:[%s427] sm:$0xff]
          %v475 = vld [vmem:[%s1] sm:$0x1]
          %v476 = vld [vmem:[%s2] sm:$0x1]
          %vm477 = vcmask 261120
          %v478 = vsel %vm477, %v474, 0.0
          %479 = vadd.xlane.f32.xlu0 %v478
          %v480 = vpop.xlane.xlu0 %479
          %v481 = vrcp.pop 32.0
          %v482 = vmul.f32 %v480, %v481
          %v483 = vsub.f32 %v474, %v482
          %v484 = vmul.f32 %v483, %v483
          %v485 = vsel %vm477, %v484, 0.0
          %486 = vadd.xlane.f32.xlu0 %v485
          %v487 = vpop.xlane.xlu0 %486
          %v488 = vmul.f32 %v487, %v481
          %v489 = vadd.f32 %v488, 1e-06
          %v490 = vrsqrt.pop %v489
          %v491 = vmul.f32 %v483, %v490
          %v493 = vlaneseq
          %v494 = vshrl.u32 %v493, 7
          %v495 = vsub.s32 0, %v494
          %v496 = vrot.slane %v475, %v495
          %v498 = vmul.f32 %v491, %v496
          %v500 = vlaneseq
          %v501 = vshrl.u32 %v500, 7
          %v502 = vsub.s32 0, %v501
          %v503 = vrot.slane %v476, %v502
          %v505 = vadd.f32 %v498, %v503
          %v506 = vld [vmem:[%s4] sm:$0xff]
          %v507 = vld [vmem:[%s4 + $0x8] sm:$0xff]
          %v508 = vld [vmem:[%s4 + $0x10] sm:$0xff]
          %v509 = vld [vmem:[%s4 + $0x18] sm:$0xff]
          %v511 = vsel %vm477, %v505, 0
          %513 = vmatprep.subr.mxu0 0.0
          %514 = vmatpush1.msra.mxu0 0.0
          %515 = vmatprep.subr.mxu0 0.0
          %516 = vmatpush1.msra.mxu0 0.0
          %517 = vmatprep.subr.mxu0 0.0
          %518 = vmatpush1.msra.mxu0 0.0
          %519 = vmatprep.subr.mxu0 0.0
          %520 = vmatpush1.msra.mxu0 0.0
          %521 = vmatprep.subr.mxu0 0.0
          %522 = vmatpush1.msra.mxu0 0.0
          %523 = vmatprep.subr.mxu0 0.0
          %524 = vmatpush1.msra.mxu0 0.0
          %525 = vmatprep.subr.mxu0 0.0
          %526 = vmatpush1.msra.mxu0 0.0
          %527 = vmatprep.subr.mxu0 0.0
          %528 = vmatpush1.msra.mxu0 0.0
          %529 = vmatprep.subr.mxu0 0.0
          %530 = vmatpush1.msra.mxu0 0.0
          %531 = vmatprep.subr.mxu0 0.0
          %532 = vmatpush1.msra.mxu0 0.0
          %533 = vmatprep.subr.mxu0 0.0
          %534 = vmatpush1.msra.mxu0 0.0
          %535 = vmatprep.subr.mxu0 0.0
          %536 = vmatpush1.msra.mxu0 0.0
          %537 = vmatprep.subr.mxu0 0.0
          %538 = vmatpush1.msra.mxu0 %v509
          %539 = vmatprep.subr.mxu0 0.0
          %540 = vmatpush1.msra.mxu0 %v508
          %541 = vmatprep.subr.mxu0 0.0
          %542 = vmatpush1.msra.mxu0 %v507
          %543 = vmatprep.subr.mxu0 0.0
          %544 = vmatpush1.msra.mxu0 %v506
          %545 = vmatprep.subr.mxu0 0.0
          %546 = vmatpush2.msra.mxu0 0.0
          %547 = vmatprep.subr.mxu0 0.0
          %548 = vmatpush2.msra.mxu0 0.0
          %549 = vmatprep.subr.mxu0 0.0
          %550 = vmatpush2.msra.mxu0 0.0
          %551 = vmatprep.subr.mxu0 0.0
          %552 = vmatpush2.msra.mxu0 0.0
          %553 = vmatprep.subr.mxu0 0.0
          %554 = vmatpush2.msra.mxu0 0.0
          %555 = vmatprep.subr.mxu0 0.0
          %556 = vmatpush2.msra.mxu0 0.0
          %557 = vmatprep.subr.mxu0 0.0
          %558 = vmatpush2.msra.mxu0 0.0
          %559 = vmatprep.subr.mxu0 0.0
          %560 = vmatpush2.msra.mxu0 0.0
          %561 = vmatprep.subr.mxu0 0.0
          %562 = vmatpush2.msra.mxu0 0.0
          %563 = vmatprep.subr.mxu0 0.0
          %564 = vmatpush2.msra.mxu0 0.0
          %565 = vmatprep.subr.mxu0 0.0
          %566 = vmatpush2.msra.mxu0 0.0
          %567 = vmatprep.subr.mxu0 0.0
          %568 = vmatpush2.msra.mxu0 0.0
          %569 = vmatprep.subr.mxu0 0.0
          %570 = vmatpush2.msra.mxu0 0.0
          %571 = vmatprep.subr.mxu0 0.0
          %572 = vmatpush2.msra.mxu0 0.0
          %573 = vmatprep.subr.mxu0 0.0
          %574 = vmatpush2.msra.mxu0 0.0
          %575 = vmatprep.subr.mxu0 0.0
          %576 = vmatpush2.msra.mxu0 0.0
          %577 = vmatprep.mubr.f32.mxu0 0.0
          %578 = vmatmul.mubr.f32.gmra.mxu0 %v511
          %v579 = vpop.f32.mrf.mxu0
          %v580 = vadd.f32 0.0, %v579
          %v581 = vpop.f32.mrf.mxu0
          %582 = vdwg.mxu0
          %v583 = vld [vmem:[%s5] sm:$0xff]
          %v584 = vld [vmem:[%s5 + $0x8] sm:$0xff]
          %v585 = vld [vmem:[%s5 + $0x10] sm:$0xff]
          %v586 = vld [vmem:[%s5 + $0x18] sm:$0xff]
          %587 = vmatprep.subr.mxu0 0.0
          %588 = vmatpush1.msra.mxu0 0.0
          %589 = vmatprep.subr.mxu0 0.0
          %590 = vmatpush1.msra.mxu0 0.0
          %591 = vmatprep.subr.mxu0 0.0
          %592 = vmatpush1.msra.mxu0 0.0
          %593 = vmatprep.subr.mxu0 0.0
          %594 = vmatpush1.msra.mxu0 0.0
          %595 = vmatprep.subr.mxu0 0.0
          %596 = vmatpush1.msra.mxu0 0.0
          %597 = vmatprep.subr.mxu0 0.0
          %598 = vmatpush1.msra.mxu0 0.0
          %599 = vmatprep.subr.mxu0 0.0
          %600 = vmatpush1.msra.mxu0 0.0
          %601 = vmatprep.subr.mxu0 0.0
          %602 = vmatpush1.msra.mxu0 0.0
          %603 = vmatprep.subr.mxu0 0.0
          %604 = vmatpush1.msra.mxu0 0.0
          %605 = vmatprep.subr.mxu0 0.0
          %606 = vmatpush1.msra.mxu0 0.0
          %607 = vmatprep.subr.mxu0 0.0
          %608 = vmatpush1.msra.mxu0 0.0
          %609 = vmatprep.subr.mxu0 0.0
          %610 = vmatpush1.msra.mxu0 0.0
          %611 = vmatprep.subr.mxu0 0.0
          %612 = vmatpush1.msra.mxu0 %v586
          %613 = vmatprep.subr.mxu0 0.0
          %614 = vmatpush1.msra.mxu0 %v585
          %615 = vmatprep.subr.mxu0 0.0
          %616 = vmatpush1.msra.mxu0 %v584
          %617 = vmatprep.subr.mxu0 0.0
          %618 = vmatpush1.msra.mxu0 %v583
          %619 = vmatprep.subr.mxu0 0.0
          %620 = vmatpush2.msra.mxu0 0.0
          %621 = vmatprep.subr.mxu0 0.0
          %622 = vmatpush2.msra.mxu0 0.0
          %623 = vmatprep.subr.mxu0 0.0
          %624 = vmatpush2.msra.mxu0 0.0
          %625 = vmatprep.subr.mxu0 0.0
          %626 = vmatpush2.msra.mxu0 0.0
          %627 = vmatprep.subr.mxu0 0.0
          %628 = vmatpush2.msra.mxu0 0.0
          %629 = vmatprep.subr.mxu0 0.0
          %630 = vmatpush2.msra.mxu0 0.0
          %631 = vmatprep.subr.mxu0 0.0
          %632 = vmatpush2.msra.mxu0 0.0
          %633 = vmatprep.subr.mxu0 0.0
          %634 = vmatpush2.msra.mxu0 0.0
          %635 = vmatprep.subr.mxu0 0.0
          %636 = vmatpush2.msra.mxu0 0.0
          %637 = vmatprep.subr.mxu0 0.0
          %638 = vmatpush2.msra.mxu0 0.0
          %639 = vmatprep.subr.mxu0 0.0
          %640 = vmatpush2.msra.mxu0 0.0
          %641 = vmatprep.subr.mxu0 0.0
          %642 = vmatpush2.msra.mxu0 0.0
          %643 = vmatprep.subr.mxu0 0.0
          %644 = vmatpush2.msra.mxu0 0.0
          %645 = vmatprep.subr.mxu0 0.0
          %646 = vmatpush2.msra.mxu0 0.0
          %647 = vmatprep.subr.mxu0 0.0
          %648 = vmatpush2.msra.mxu0 0.0
          %649 = vmatprep.subr.mxu0 0.0
          %650 = vmatpush2.msra.mxu0 0.0
          %651 = vmatprep.mubr.f32.mxu0 0.0
          %652 = vmatmul.mubr.f32.gmra.mxu0 %v511
          %v653 = vpop.f32.mrf.mxu0
          %v654 = vadd.f32 0.0, %v653
          %v655 = vpop.f32.mrf.mxu0
          %656 = vdwg.mxu0
          %658 = vrot.lane.b32.xlu0 %v580, 124
          %v659 = vpop.permute.xlu0 %658
          %661 = vrot.lane.b32.xlu0 %v580, 120
          %v662 = vpop.permute.xlu0 %661
          %664 = vrot.lane.b32.xlu0 %v580, 116
          %v665 = vpop.permute.xlu0 %664
          %667 = vrot.lane.b32.xlu0 %v580, 112
          %v668 = vpop.permute.xlu0 %667
          %670 = vrot.lane.b32.xlu0 %v580, 108
          %v671 = vpop.permute.xlu0 %670
          %673 = vrot.lane.b32.xlu0 %v580, 104
          %v674 = vpop.permute.xlu0 %673
          %676 = vrot.lane.b32.xlu0 %v580, 100
          %v677 = vpop.permute.xlu0 %676
          %v679 = vcombine.low %v580, %v662
          %v680 = vcombine.high %v580, %v662
          %v682 = vunpack.c.l.s4 1983009808
          %v683 = vunpack.c.0.s8 %v682
          %v684 = vlaneseq
          %v685 = vshrl.u32 %v684, 7
          %v686 = vsub.s32 %v683, %v685
          %v687 = vrot.slane %v679, %v686
          %v689 = vunpack.c.l.s4 1983009808
          %v690 = vunpack.c.0.s8 %v689
          %v691 = vlaneseq
          %v692 = vshrl.u32 %v691, 7
          %v693 = vsub.s32 %v690, %v692
          %v694 = vrot.slane %v680, %v693
          %v695 = vcombine.low %v659, %v665
          %v696 = vcombine.high %v659, %v665
          %v698 = vunpack.c.l.s4 1983009808
          %v699 = vunpack.c.0.s8 %v698
          %v700 = vlaneseq
          %v701 = vshrl.u32 %v700, 7
          %v702 = vsub.s32 %v699, %v701
          %v703 = vrot.slane %v695, %v702
          %v705 = vunpack.c.l.s4 1983009808
          %v706 = vunpack.c.0.s8 %v705
          %v707 = vlaneseq
          %v708 = vshrl.u32 %v707, 7
          %v709 = vsub.s32 %v706, %v708
          %v710 = vrot.slane %v696, %v709
          %v711 = vcombine.low %v668, %v674
          %v712 = vcombine.high %v668, %v674
          %v714 = vunpack.c.l.s4 1983009808
          %v715 = vunpack.c.0.s8 %v714
          %v716 = vlaneseq
          %v717 = vshrl.u32 %v716, 7
          %v718 = vsub.s32 %v715, %v717
          %v719 = vrot.slane %v711, %v718
          %v721 = vunpack.c.l.s4 1983009808
          %v722 = vunpack.c.0.s8 %v721
          %v723 = vlaneseq
          %v724 = vshrl.u32 %v723, 7
          %v725 = vsub.s32 %v722, %v724
          %v726 = vrot.slane %v712, %v725
          %v727 = vcombine.low %v671, %v677
          %v728 = vcombine.high %v671, %v677
          %v730 = vunpack.c.l.s4 1983009808
          %v731 = vunpack.c.0.s8 %v730
          %v732 = vlaneseq
          %v733 = vshrl.u32 %v732, 7
          %v734 = vsub.s32 %v731, %v733
          %v735 = vrot.slane %v727, %v734
          %v737 = vunpack.c.l.s4 1983009808
          %v738 = vunpack.c.0.s8 %v737
          %v739 = vlaneseq
          %v740 = vshrl.u32 %v739, 7
          %v741 = vsub.s32 %v738, %v740
          %v742 = vrot.slane %v728, %v741
          %v743 = vcombine.low %v687, %v703
          %v744 = vcombine.high %v687, %v703
          %v746 = vunpack.c.l.s4 1934713408
          %v747 = vunpack.c.0.s8 %v746
          %v748 = vlaneseq
          %v749 = vshrl.u32 %v748, 7
          %v750 = vsub.s32 %v747, %v749
          %v751 = vrot.slane %v743, %v750
          %v753 = vunpack.c.l.s4 1934713408
          %v754 = vunpack.c.0.s8 %v753
          %v755 = vlaneseq
          %v756 = vshrl.u32 %v755, 7
          %v757 = vsub.s32 %v754, %v756
          %v758 = vrot.slane %v744, %v757
          %v759 = vcombine.low %v694, %v710
          %v760 = vcombine.high %v694, %v710
          %v762 = vunpack.c.l.s4 1934713408
          %v763 = vunpack.c.0.s8 %v762
          %v764 = vlaneseq
          %v765 = vshrl.u32 %v764, 7
          %v766 = vsub.s32 %v763, %v765
          %v767 = vrot.slane %v759, %v766
          %v769 = vunpack.c.l.s4 1934713408
          %v770 = vunpack.c.0.s8 %v769
          %v771 = vlaneseq
          %v772 = vshrl.u32 %v771, 7
          %v773 = vsub.s32 %v770, %v772
          %v774 = vrot.slane %v760, %v773
          %v775 = vcombine.low %v719, %v735
          %v776 = vcombine.high %v719, %v735
          %v778 = vunpack.c.l.s4 1934713408
          %v779 = vunpack.c.0.s8 %v778
          %v780 = vlaneseq
          %v781 = vshrl.u32 %v780, 7
          %v782 = vsub.s32 %v779, %v781
          %v783 = vrot.slane %v775, %v782
          %v785 = vunpack.c.l.s4 1934713408
          %v786 = vunpack.c.0.s8 %v785
          %v787 = vlaneseq
          %v788 = vshrl.u32 %v787, 7
          %v789 = vsub.s32 %v786, %v788
          %v790 = vrot.slane %v776, %v789
          %v791 = vcombine.low %v726, %v742
          %v792 = vcombine.high %v726, %v742
          %v794 = vunpack.c.l.s4 1934713408
          %v795 = vunpack.c.0.s8 %v794
          %v796 = vlaneseq
          %v797 = vshrl.u32 %v796, 7
          %v798 = vsub.s32 %v795, %v797
          %v799 = vrot.slane %v791, %v798
          %v801 = vunpack.c.l.s4 1934713408
          %v802 = vunpack.c.0.s8 %v801
          %v803 = vlaneseq
          %v804 = vshrl.u32 %v803, 7
          %v805 = vsub.s32 %v802, %v804
          %v806 = vrot.slane %v792, %v805
          %v807 = vcombine.low %v751, %v783
          %v808 = vcombine.high %v751, %v783
          %v809 = vcombine.low %v758, %v790
          %v810 = vcombine.high %v758, %v790
          %v811 = vcombine.low %v767, %v799
          %v812 = vcombine.high %v767, %v799
          %v813 = vcombine.low %v774, %v806
          %v814 = vcombine.high %v774, %v806
          %v815 = vcombine.low %v807, %v809
          %v816 = vcombine.high %v807, %v809
          %v818 = vunpack.c.l.s4 1983009808
          %v819 = vunpack.c.0.s8 %v818
          %v820 = vlaneseq
          %v821 = vshrl.u32 %v820, 7
          %v822 = vsub.s32 %v819, %v821
          %v823 = vrot.slane %v815, %v822
          %v825 = vunpack.c.l.s4 1983009808
          %v826 = vunpack.c.0.s8 %v825
          %v827 = vlaneseq
          %v828 = vshrl.u32 %v827, 7
          %v829 = vsub.s32 %v826, %v828
          %v830 = vrot.slane %v816, %v829
          %v831 = vcombine.low %v808, %v810
          %v832 = vcombine.high %v808, %v810
          %v834 = vunpack.c.l.s4 1983009808
          %v835 = vunpack.c.0.s8 %v834
          %v836 = vlaneseq
          %v837 = vshrl.u32 %v836, 7
          %v838 = vsub.s32 %v835, %v837
          %v839 = vrot.slane %v831, %v838
          %v841 = vunpack.c.l.s4 1983009808
          %v842 = vunpack.c.0.s8 %v841
          %v843 = vlaneseq
          %v844 = vshrl.u32 %v843, 7
          %v845 = vsub.s32 %v842, %v844
          %v846 = vrot.slane %v832, %v845
          %v847 = vcombine.low %v811, %v813
          %v848 = vcombine.high %v811, %v813
          %v850 = vunpack.c.l.s4 1983009808
          %v851 = vunpack.c.0.s8 %v850
          %v852 = vlaneseq
          %v853 = vshrl.u32 %v852, 7
          %v854 = vsub.s32 %v851, %v853
          %v855 = vrot.slane %v847, %v854
          %v857 = vunpack.c.l.s4 1983009808
          %v858 = vunpack.c.0.s8 %v857
          %v859 = vlaneseq
          %v860 = vshrl.u32 %v859, 7
          %v861 = vsub.s32 %v858, %v860
          %v862 = vrot.slane %v848, %v861
          %v863 = vcombine.low %v812, %v814
          %v864 = vcombine.high %v812, %v814
          %v866 = vunpack.c.l.s4 1983009808
          %v867 = vunpack.c.0.s8 %v866
          %v868 = vlaneseq
          %v869 = vshrl.u32 %v868, 7
          %v870 = vsub.s32 %v867, %v869
          %v871 = vrot.slane %v863, %v870
          %v873 = vunpack.c.l.s4 1983009808
          %v874 = vunpack.c.0.s8 %v873
          %v875 = vlaneseq
          %v876 = vshrl.u32 %v875, 7
          %v877 = vsub.s32 %v874, %v876
          %v878 = vrot.slane %v864, %v877
          %v879 = vcombine.low %v823, %v839
          %v880 = vcombine.high %v823, %v839
          %v882 = vunpack.c.l.s4 1934713408
          %v883 = vunpack.c.0.s8 %v882
          %v884 = vlaneseq
          %v885 = vshrl.u32 %v884, 7
          %v886 = vsub.s32 %v883, %v885
          %v887 = vrot.slane %v879, %v886
          %v889 = vunpack.c.l.s4 1934713408
          %v890 = vunpack.c.0.s8 %v889
          %v891 = vlaneseq
          %v892 = vshrl.u32 %v891, 7
          %v893 = vsub.s32 %v890, %v892
          %v894 = vrot.slane %v880, %v893
          %v895 = vcombine.low %v830, %v846
          %v896 = vcombine.high %v830, %v846
          %v898 = vunpack.c.l.s4 1934713408
          %v899 = vunpack.c.0.s8 %v898
          %v900 = vlaneseq
          %v901 = vshrl.u32 %v900, 7
          %v902 = vsub.s32 %v899, %v901
          %v903 = vrot.slane %v895, %v902
          %v905 = vunpack.c.l.s4 1934713408
          %v906 = vunpack.c.0.s8 %v905
          %v907 = vlaneseq
          %v908 = vshrl.u32 %v907, 7
          %v909 = vsub.s32 %v906, %v908
          %v910 = vrot.slane %v896, %v909
          %v911 = vcombine.low %v855, %v871
          %v912 = vcombine.high %v855, %v871
          %v914 = vunpack.c.l.s4 1934713408
          %v915 = vunpack.c.0.s8 %v914
          %v916 = vlaneseq
          %v917 = vshrl.u32 %v916, 7
          %v918 = vsub.s32 %v915, %v917
          %v919 = vrot.slane %v911, %v918
          %v921 = vunpack.c.l.s4 1934713408
          %v922 = vunpack.c.0.s8 %v921
          %v923 = vlaneseq
          %v924 = vshrl.u32 %v923, 7
          %v925 = vsub.s32 %v922, %v924
          %v926 = vrot.slane %v912, %v925
          %v927 = vcombine.low %v862, %v878
          %v928 = vcombine.high %v862, %v878
          %v930 = vunpack.c.l.s4 1934713408
          %v931 = vunpack.c.0.s8 %v930
          %v932 = vlaneseq
          %v933 = vshrl.u32 %v932, 7
          %v934 = vsub.s32 %v931, %v933
          %v935 = vrot.slane %v927, %v934
          %v937 = vunpack.c.l.s4 1934713408
          %v938 = vunpack.c.0.s8 %v937
          %v939 = vlaneseq
          %v940 = vshrl.u32 %v939, 7
          %v941 = vsub.s32 %v938, %v940
          %v942 = vrot.slane %v928, %v941
          %v943 = vcombine.low %v887, %v919
          %v944 = vcombine.high %v887, %v919
          %v945 = vcombine.low %v894, %v926
          %v946 = vcombine.high %v894, %v926
          %v947 = vcombine.low %v903, %v935
          %v948 = vcombine.high %v903, %v935
          %v949 = vcombine.low %v910, %v942
          %v950 = vcombine.high %v910, %v942
          %vm951 = vcmask 31744
          %952 = vst.msk [vmem:[#allocation2] sm:$0xff] %vm951, %v943
          %953 = vst.msk [vmem:[#allocation2 + $0x8] sm:$0xff] %vm951, %v944
          %954 = vst.msk [vmem:[#allocation2 + $0x10] sm:$0xff] %vm951, %v945
          %955 = vst.msk [vmem:[#allocation2 + $0x18] sm:$0xff] %vm951, %v946
          %956 = vst.msk [vmem:[#allocation2 + $0x20] sm:$0xff] %vm951, %v947
          %957 = vst.msk [vmem:[#allocation2 + $0x28] sm:$0xff] %vm951, %v948
          %958 = vst.msk [vmem:[#allocation2 + $0x30] sm:$0xff] %vm951, %v949
          %959 = vst.msk [vmem:[#allocation2 + $0x38] sm:$0xff] %vm951, %v950
          %961 = vrot.lane.b32.xlu0 %v654, 124
          %v962 = vpop.permute.xlu0 %961
          %964 = vrot.lane.b32.xlu0 %v654, 120
          %v965 = vpop.permute.xlu0 %964
          %967 = vrot.lane.b32.xlu0 %v654, 116
          %v968 = vpop.permute.xlu0 %967
          %970 = vrot.lane.b32.xlu0 %v654, 112
          %v971 = vpop.permute.xlu0 %970
          %973 = vrot.lane.b32.xlu0 %v654, 108
          %v974 = vpop.permute.xlu0 %973
          %976 = vrot.lane.b32.xlu0 %v654, 104
          %v977 = vpop.permute.xlu0 %976
          %979 = vrot.lane.b32.xlu0 %v654, 100
          %v980 = vpop.permute.xlu0 %979
          %v982 = vcombine.low %v654, %v965
          %v983 = vcombine.high %v654, %v965
          %v985 = vunpack.c.l.s4 1983009808
          %v986 = vunpack.c.0.s8 %v985
          %v987 = vlaneseq
          %v988 = vshrl.u32 %v987, 7
          %v989 = vsub.s32 %v986, %v988
          %v990 = vrot.slane %v982, %v989
          %v992 = vunpack.c.l.s4 1983009808
          %v993 = vunpack.c.0.s8 %v992
          %v994 = vlaneseq
          %v995 = vshrl.u32 %v994, 7
          %v996 = vsub.s32 %v993, %v995
          %v997 = vrot.slane %v983, %v996
          %v998 = vcombine.low %v962, %v968
          %v999 = vcombine.high %v962, %v968
          %v1001 = vunpack.c.l.s4 1983009808
          %v1002 = vunpack.c.0.s8 %v1001
          %v1003 = vlaneseq
          %v1004 = vshrl.u32 %v1003, 7
          %v1005 = vsub.s32 %v1002, %v1004
          %v1006 = vrot.slane %v998, %v1005
          %v1008 = vunpack.c.l.s4 1983009808
          %v1009 = vunpack.c.0.s8 %v1008
          %v1010 = vlaneseq
          %v1011 = vshrl.u32 %v1010, 7
          %v1012 = vsub.s32 %v1009, %v1011
          %v1013 = vrot.slane %v999, %v1012
          %v1014 = vcombine.low %v971, %v977
          %v1015 = vcombine.high %v971, %v977
          %v1017 = vunpack.c.l.s4 1983009808
          %v1018 = vunpack.c.0.s8 %v1017
          %v1019 = vlaneseq
          %v1020 = vshrl.u32 %v1019, 7
          %v1021 = vsub.s32 %v1018, %v1020
          %v1022 = vrot.slane %v1014, %v1021
          %v1024 = vunpack.c.l.s4 1983009808
          %v1025 = vunpack.c.0.s8 %v1024
          %v1026 = vlaneseq
          %v1027 = vshrl.u32 %v1026, 7
          %v1028 = vsub.s32 %v1025, %v1027
          %v1029 = vrot.slane %v1015, %v1028
          %v1030 = vcombine.low %v974, %v980
          %v1031 = vcombine.high %v974, %v980
          %v1033 = vunpack.c.l.s4 1983009808
          %v1034 = vunpack.c.0.s8 %v1033
          %v1035 = vlaneseq
          %v1036 = vshrl.u32 %v1035, 7
          %v1037 = vsub.s32 %v1034, %v1036
          %v1038 = vrot.slane %v1030, %v1037
          %v1040 = vunpack.c.l.s4 1983009808
          %v1041 = vunpack.c.0.s8 %v1040
          %v1042 = vlaneseq
          %v1043 = vshrl.u32 %v1042, 7
          %v1044 = vsub.s32 %v1041, %v1043
          %v1045 = vrot.slane %v1031, %v1044
          %v1046 = vcombine.low %v990, %v1006
          %v1047 = vcombine.high %v990, %v1006
          %v1049 = vunpack.c.l.s4 1934713408
          %v1050 = vunpack.c.0.s8 %v1049
          %v1051 = vlaneseq
          %v1052 = vshrl.u32 %v1051, 7
          %v1053 = vsub.s32 %v1050, %v1052
          %v1054 = vrot.slane %v1046, %v1053
          %v1056 = vunpack.c.l.s4 1934713408
          %v1057 = vunpack.c.0.s8 %v1056
          %v1058 = vlaneseq
          %v1059 = vshrl.u32 %v1058, 7
          %v1060 = vsub.s32 %v1057, %v1059
          %v1061 = vrot.slane %v1047, %v1060
          %v1062 = vcombine.low %v997, %v1013
          %v1063 = vcombine.high %v997, %v1013
          %v1065 = vunpack.c.l.s4 1934713408
          %v1066 = vunpack.c.0.s8 %v1065
          %v1067 = vlaneseq
          %v1068 = vshrl.u32 %v1067, 7
          %v1069 = vsub.s32 %v1066, %v1068
          %v1070 = vrot.slane %v1062, %v1069
          %v1072 = vunpack.c.l.s4 1934713408
          %v1073 = vunpack.c.0.s8 %v1072
          %v1074 = vlaneseq
          %v1075 = vshrl.u32 %v1074, 7
          %v1076 = vsub.s32 %v1073, %v1075
          %v1077 = vrot.slane %v1063, %v1076
          %v1078 = vcombine.low %v1022, %v1038
          %v1079 = vcombine.high %v1022, %v1038
          %v1081 = vunpack.c.l.s4 1934713408
          %v1082 = vunpack.c.0.s8 %v1081
          %v1083 = vlaneseq
          %v1084 = vshrl.u32 %v1083, 7
          %v1085 = vsub.s32 %v1082, %v1084
          %v1086 = vrot.slane %v1078, %v1085
          %v1088 = vunpack.c.l.s4 1934713408
          %v1089 = vunpack.c.0.s8 %v1088
          %v1090 = vlaneseq
          %v1091 = vshrl.u32 %v1090, 7
          %v1092 = vsub.s32 %v1089, %v1091
          %v1093 = vrot.slane %v1079, %v1092
          %v1094 = vcombine.low %v1029, %v1045
          %v1095 = vcombine.high %v1029, %v1045
          %v1097 = vunpack.c.l.s4 1934713408
          %v1098 = vunpack.c.0.s8 %v1097
          %v1099 = vlaneseq
          %v1100 = vshrl.u32 %v1099, 7
          %v1101 = vsub.s32 %v1098, %v1100
          %v1102 = vrot.slane %v1094, %v1101
          %v1104 = vunpack.c.l.s4 1934713408
          %v1105 = vunpack.c.0.s8 %v1104
          %v1106 = vlaneseq
          %v1107 = vshrl.u32 %v1106, 7
          %v1108 = vsub.s32 %v1105, %v1107
          %v1109 = vrot.slane %v1095, %v1108
          %v1110 = vcombine.low %v1054, %v1086
          %v1111 = vcombine.high %v1054, %v1086
          %v1112 = vcombine.low %v1061, %v1093
          %v1113 = vcombine.high %v1061, %v1093
          %v1114 = vcombine.low %v1070, %v1102
          %v1115 = vcombine.high %v1070, %v1102
          %v1116 = vcombine.low %v1077, %v1109
          %v1117 = vcombine.high %v1077, %v1109
          %v1118 = vcombine.low %v1110, %v1112
          %v1119 = vcombine.high %v1110, %v1112
          %v1121 = vunpack.c.l.s4 1983009808
          %v1122 = vunpack.c.0.s8 %v1121
          %v1123 = vlaneseq
          %v1124 = vshrl.u32 %v1123, 7
          %v1125 = vsub.s32 %v1122, %v1124
          %v1126 = vrot.slane %v1118, %v1125
          %v1128 = vunpack.c.l.s4 1983009808
          %v1129 = vunpack.c.0.s8 %v1128
          %v1130 = vlaneseq
          %v1131 = vshrl.u32 %v1130, 7
          %v1132 = vsub.s32 %v1129, %v1131
          %v1133 = vrot.slane %v1119, %v1132
          %v1134 = vcombine.low %v1111, %v1113
          %v1135 = vcombine.high %v1111, %v1113
          %v1137 = vunpack.c.l.s4 1983009808
          %v1138 = vunpack.c.0.s8 %v1137
          %v1139 = vlaneseq
          %v1140 = vshrl.u32 %v1139, 7
          %v1141 = vsub.s32 %v1138, %v1140
          %v1142 = vrot.slane %v1134, %v1141
          %v1144 = vunpack.c.l.s4 1983009808
          %v1145 = vunpack.c.0.s8 %v1144
          %v1146 = vlaneseq
          %v1147 = vshrl.u32 %v1146, 7
          %v1148 = vsub.s32 %v1145, %v1147
          %v1149 = vrot.slane %v1135, %v1148
          %v1150 = vcombine.low %v1114, %v1116
          %v1151 = vcombine.high %v1114, %v1116
          %v1153 = vunpack.c.l.s4 1983009808
          %v1154 = vunpack.c.0.s8 %v1153
          %v1155 = vlaneseq
          %v1156 = vshrl.u32 %v1155, 7
          %v1157 = vsub.s32 %v1154, %v1156
          %v1158 = vrot.slane %v1150, %v1157
          %v1160 = vunpack.c.l.s4 1983009808
          %v1161 = vunpack.c.0.s8 %v1160
          %v1162 = vlaneseq
          %v1163 = vshrl.u32 %v1162, 7
          %v1164 = vsub.s32 %v1161, %v1163
          %v1165 = vrot.slane %v1151, %v1164
          %v1166 = vcombine.low %v1115, %v1117
          %v1167 = vcombine.high %v1115, %v1117
          %v1169 = vunpack.c.l.s4 1983009808
          %v1170 = vunpack.c.0.s8 %v1169
          %v1171 = vlaneseq
          %v1172 = vshrl.u32 %v1171, 7
          %v1173 = vsub.s32 %v1170, %v1172
          %v1174 = vrot.slane %v1166, %v1173
          %v1176 = vunpack.c.l.s4 1983009808
          %v1177 = vunpack.c.0.s8 %v1176
          %v1178 = vlaneseq
          %v1179 = vshrl.u32 %v1178, 7
          %v1180 = vsub.s32 %v1177, %v1179
          %v1181 = vrot.slane %v1167, %v1180
          %v1182 = vcombine.low %v1126, %v1142
          %v1183 = vcombine.high %v1126, %v1142
          %v1185 = vunpack.c.l.s4 1934713408
          %v1186 = vunpack.c.0.s8 %v1185
          %v1187 = vlaneseq
          %v1188 = vshrl.u32 %v1187, 7
          %v1189 = vsub.s32 %v1186, %v1188
          %v1190 = vrot.slane %v1182, %v1189
          %v1192 = vunpack.c.l.s4 1934713408
          %v1193 = vunpack.c.0.s8 %v1192
          %v1194 = vlaneseq
          %v1195 = vshrl.u32 %v1194, 7
          %v1196 = vsub.s32 %v1193, %v1195
          %v1197 = vrot.slane %v1183, %v1196
          %v1198 = vcombine.low %v1133, %v1149
          %v1199 = vcombine.high %v1133, %v1149
          %v1201 = vunpack.c.l.s4 1934713408
          %v1202 = vunpack.c.0.s8 %v1201
          %v1203 = vlaneseq
          %v1204 = vshrl.u32 %v1203, 7
          %v1205 = vsub.s32 %v1202, %v1204
          %v1206 = vrot.slane %v1198, %v1205
          %v1208 = vunpack.c.l.s4 1934713408
          %v1209 = vunpack.c.0.s8 %v1208
          %v1210 = vlaneseq
          %v1211 = vshrl.u32 %v1210, 7
          %v1212 = vsub.s32 %v1209, %v1211
          %v1213 = vrot.slane %v1199, %v1212
          %v1214 = vcombine.low %v1158, %v1174
          %v1215 = vcombine.high %v1158, %v1174
          %v1217 = vunpack.c.l.s4 1934713408
          %v1218 = vunpack.c.0.s8 %v1217
          %v1219 = vlaneseq
          %v1220 = vshrl.u32 %v1219, 7
          %v1221 = vsub.s32 %v1218, %v1220
          %v1222 = vrot.slane %v1214, %v1221
          %v1224 = vunpack.c.l.s4 1934713408
          %v1225 = vunpack.c.0.s8 %v1224
          %v1226 = vlaneseq
          %v1227 = vshrl.u32 %v1226, 7
          %v1228 = vsub.s32 %v1225, %v1227
          %v1229 = vrot.slane %v1215, %v1228
          %v1230 = vcombine.low %v1165, %v1181
          %v1231 = vcombine.high %v1165, %v1181
          %v1233 = vunpack.c.l.s4 1934713408
          %v1234 = vunpack.c.0.s8 %v1233
          %v1235 = vlaneseq
          %v1236 = vshrl.u32 %v1235, 7
          %v1237 = vsub.s32 %v1234, %v1236
          %v1238 = vrot.slane %v1230, %v1237
          %v1240 = vunpack.c.l.s4 1934713408
          %v1241 = vunpack.c.0.s8 %v1240
          %v1242 = vlaneseq
          %v1243 = vshrl.u32 %v1242, 7
          %v1244 = vsub.s32 %v1241, %v1243
          %v1245 = vrot.slane %v1231, %v1244
          %v1246 = vcombine.low %v1190, %v1222
          %v1247 = vcombine.high %v1190, %v1222
          %v1248 = vcombine.low %v1197, %v1229
          %v1249 = vcombine.high %v1197, %v1229
          %v1250 = vcombine.low %v1206, %v1238
          %v1251 = vcombine.high %v1206, %v1238
          %v1252 = vcombine.low %v1213, %v1245
          %v1253 = vcombine.high %v1213, %v1245
          %1254 = vst.msk [vmem:[#allocation3] sm:$0xff] %vm951, %v1246
          %1255 = vst.msk [vmem:[#allocation3 + $0x8] sm:$0xff] %vm951, %v1247
          %1256 = vst.msk [vmem:[#allocation3 + $0x10] sm:$0xff] %vm951, %v1248
          %1257 = vst.msk [vmem:[#allocation3 + $0x18] sm:$0xff] %vm951, %v1249
          %1258 = vst.msk [vmem:[#allocation3 + $0x20] sm:$0xff] %vm951, %v1250
          %1259 = vst.msk [vmem:[#allocation3 + $0x28] sm:$0xff] %vm951, %v1251
          %1260 = vst.msk [vmem:[#allocation3 + $0x30] sm:$0xff] %vm951, %v1252
          %1261 = vst.msk [vmem:[#allocation3 + $0x38] sm:$0xff] %vm951, %v1253
        $region80: #{tpu_custom_call.1} parent=71 // pred_fallthru
          _
        %s1262 = smul.u32 %s35, 8
        %s1263 = scalar_lea.vmem %s427, %s1262 [#allocation4]
        %v1264 = vld [vmem:[%s1263] sm:$0xff]
        %v1265 = vld [vmem:[%s1] sm:$0x1]
        %v1266 = vld [vmem:[%s2] sm:$0x1]
        %vm1267 = vcmask 261120
        %v1268 = vsel %vm1267, %v1264, 0.0
        %1269 = vadd.xlane.f32.xlu0 %v1268
        %v1270 = vpop.xlane.xlu0 %1269
        %v1271 = vrcp.pop 32.0
        %v1272 = vmul.f32 %v1270, %v1271
        %v1273 = vsub.f32 %v1264, %v1272
        %v1274 = vmul.f32 %v1273, %v1273
        %v1275 = vsel %vm1267, %v1274, 0.0
        %1276 = vadd.xlane.f32.xlu0 %v1275
        %v1277 = vpop.xlane.xlu0 %1276
        %v1278 = vmul.f32 %v1277, %v1271
        %v1279 = vadd.f32 %v1278, 1e-06
        %v1280 = vrsqrt.pop %v1279
        %v1281 = vmul.f32 %v1273, %v1280
        %v1283 = vlaneseq
        %v1284 = vshrl.u32 %v1283, 7
        %v1285 = vsub.s32 0, %v1284
        %v1286 = vrot.slane %v1265, %v1285
        %v1288 = vmul.f32 %v1281, %v1286
        %v1290 = vlaneseq
        %v1291 = vshrl.u32 %v1290, 7
        %v1292 = vsub.s32 0, %v1291
        %v1293 = vrot.slane %v1266, %v1292
        %v1295 = vadd.f32 %v1288, %v1293
        %v1296 = vld [vmem:[%s3] sm:$0xff]
        %v1297 = vld [vmem:[%s3 + $0x8] sm:$0xff]
        %v1298 = vld [vmem:[%s3 + $0x10] sm:$0xff]
        %v1299 = vld [vmem:[%s3 + $0x18] sm:$0xff]
        %v1301 = vsel %vm1267, %v1295, 0
        %1303 = vmatprep.subr.mxu0 0.0
        %1304 = vmatpush1.msra.mxu0 0.0
        %1305 = vmatprep.subr.mxu0 0.0
        %1306 = vmatpush1.msra.mxu0 0.0
        %1307 = vmatprep.subr.mxu0 0.0
        %1308 = vmatpush1.msra.mxu0 0.0
        %1309 = vmatprep.subr.mxu0 0.0
        %1310 = vmatpush1.msra.mxu0 0.0
        %1311 = vmatprep.subr.mxu0 0.0
        %1312 = vmatpush1.msra.mxu0 0.0
        %1313 = vmatprep.subr.mxu0 0.0
        %1314 = vmatpush1.msra.mxu0 0.0
        %1315 = vmatprep.subr.mxu0 0.0
        %1316 = vmatpush1.msra.mxu0 0.0
        %1317 = vmatprep.subr.mxu0 0.0
        %1318 = vmatpush1.msra.mxu0 0.0
        %1319 = vmatprep.subr.mxu0 0.0
        %1320 = vmatpush1.msra.mxu0 0.0
        %1321 = vmatprep.subr.mxu0 0.0
        %1322 = vmatpush1.msra.mxu0 0.0
        %1323 = vmatprep.subr.mxu0 0.0
        %1324 = vmatpush1.msra.mxu0 0.0
        %1325 = vmatprep.subr.mxu0 0.0
        %1326 = vmatpush1.msra.mxu0 0.0
        %1327 = vmatprep.subr.mxu0 0.0
        %1328 = vmatpush1.msra.mxu0 %v1299
        %1329 = vmatprep.subr.mxu0 0.0
        %1330 = vmatpush1.msra.mxu0 %v1298
        %1331 = vmatprep.subr.mxu0 0.0
        %1332 = vmatpush1.msra.mxu0 %v1297
        %1333 = vmatprep.subr.mxu0 0.0
        %1334 = vmatpush1.msra.mxu0 %v1296
        %1335 = vmatprep.subr.mxu0 0.0
        %1336 = vmatpush2.msra.mxu0 0.0
        %1337 = vmatprep.subr.mxu0 0.0
        %1338 = vmatpush2.msra.mxu0 0.0
        %1339 = vmatprep.subr.mxu0 0.0
        %1340 = vmatpush2.msra.mxu0 0.0
        %1341 = vmatprep.subr.mxu0 0.0
        %1342 = vmatpush2.msra.mxu0 0.0
        %1343 = vmatprep.subr.mxu0 0.0
        %1344 = vmatpush2.msra.mxu0 0.0
        %1345 = vmatprep.subr.mxu0 0.0
        %1346 = vmatpush2.msra.mxu0 0.0
        %1347 = vmatprep.subr.mxu0 0.0
        %1348 = vmatpush2.msra.mxu0 0.0
        %1349 = vmatprep.subr.mxu0 0.0
        %1350 = vmatpush2.msra.mxu0 0.0
        %1351 = vmatprep.subr.mxu0 0.0
        %1352 = vmatpush2.msra.mxu0 0.0
        %1353 = vmatprep.subr.mxu0 0.0
        %1354 = vmatpush2.msra.mxu0 0.0
        %1355 = vmatprep.subr.mxu0 0.0
        %1356 = vmatpush2.msra.mxu0 0.0
        %1357 = vmatprep.subr.mxu0 0.0
        %1358 = vmatpush2.msra.mxu0 0.0
        %1359 = vmatprep.subr.mxu0 0.0
        %1360 = vmatpush2.msra.mxu0 0.0
        %1361 = vmatprep.subr.mxu0 0.0
        %1362 = vmatpush2.msra.mxu0 0.0
        %1363 = vmatprep.subr.mxu0 0.0
        %1364 = vmatpush2.msra.mxu0 0.0
        %1365 = vmatprep.subr.mxu0 0.0
        %1366 = vmatpush2.msra.mxu0 0.0
        %1367 = vmatprep.mubr.f32.mxu0 0.0
        %1368 = vmatmul.mubr.f32.gmra.mxu0 %v1301
        %v1369 = vpop.f32.mrf.mxu0
        %v1370 = vadd.f32 0.0, %v1369
        %v1371 = vpop.f32.mrf.mxu0
        %1372 = vdwg.mxu0
        %1374 = vrot.lane.b32.xlu0 %v1370, 124
        %v1375 = vpop.permute.xlu0 %1374
        %1377 = vrot.lane.b32.xlu0 %v1370, 120
        %v1378 = vpop.permute.xlu0 %1377
        %1380 = vrot.lane.b32.xlu0 %v1370, 116
        %v1381 = vpop.permute.xlu0 %1380
        %1383 = vrot.lane.b32.xlu0 %v1370, 112
        %v1384 = vpop.permute.xlu0 %1383
        %1386 = vrot.lane.b32.xlu0 %v1370, 108
        %v1387 = vpop.permute.xlu0 %1386
        %1389 = vrot.lane.b32.xlu0 %v1370, 104
        %v1390 = vpop.permute.xlu0 %1389
        %1392 = vrot.lane.b32.xlu0 %v1370, 100
        %v1393 = vpop.permute.xlu0 %1392
        %v1395 = vcombine.low %v1370, %v1378
        %v1396 = vcombine.high %v1370, %v1378
        %v1398 = vunpack.c.l.s4 1983009808
        %v1399 = vunpack.c.0.s8 %v1398
        %v1400 = vlaneseq
        %v1401 = vshrl.u32 %v1400, 7
        %v1402 = vsub.s32 %v1399, %v1401
        %v1403 = vrot.slane %v1395, %v1402
        %v1405 = vunpack.c.l.s4 1983009808
        %v1406 = vunpack.c.0.s8 %v1405
        %v1407 = vlaneseq
        %v1408 = vshrl.u32 %v1407, 7
        %v1409 = vsub.s32 %v1406, %v1408
        %v1410 = vrot.slane %v1396, %v1409
        %v1411 = vcombine.low %v1375, %v1381
        %v1412 = vcombine.high %v1375, %v1381
        %v1414 = vunpack.c.l.s4 1983009808
        %v1415 = vunpack.c.0.s8 %v1414
        %v1416 = vlaneseq
        %v1417 = vshrl.u32 %v1416, 7
        %v1418 = vsub.s32 %v1415, %v1417
        %v1419 = vrot.slane %v1411, %v1418
        %v1421 = vunpack.c.l.s4 1983009808
        %v1422 = vunpack.c.0.s8 %v1421
        %v1423 = vlaneseq
        %v1424 = vshrl.u32 %v1423, 7
        %v1425 = vsub.s32 %v1422, %v1424
        %v1426 = vrot.slane %v1412, %v1425
        %v1427 = vcombine.low %v1384, %v1390
        %v1428 = vcombine.high %v1384, %v1390
        %v1430 = vunpack.c.l.s4 1983009808
        %v1431 = vunpack.c.0.s8 %v1430
        %v1432 = vlaneseq
        %v1433 = vshrl.u32 %v1432, 7
        %v1434 = vsub.s32 %v1431, %v1433
        %v1435 = vrot.slane %v1427, %v1434
        %v1437 = vunpack.c.l.s4 1983009808
        %v1438 = vunpack.c.0.s8 %v1437
        %v1439 = vlaneseq
        %v1440 = vshrl.u32 %v1439, 7
        %v1441 = vsub.s32 %v1438, %v1440
        %v1442 = vrot.slane %v1428, %v1441
        %v1443 = vcombine.low %v1387, %v1393
        %v1444 = vcombine.high %v1387, %v1393
        %v1446 = vunpack.c.l.s4 1983009808
        %v1447 = vunpack.c.0.s8 %v1446
        %v1448 = vlaneseq
        %v1449 = vshrl.u32 %v1448, 7
        %v1450 = vsub.s32 %v1447, %v1449
        %v1451 = vrot.slane %v1443, %v1450
        %v1453 = vunpack.c.l.s4 1983009808
        %v1454 = vunpack.c.0.s8 %v1453
        %v1455 = vlaneseq
        %v1456 = vshrl.u32 %v1455, 7
        %v1457 = vsub.s32 %v1454, %v1456
        %v1458 = vrot.slane %v1444, %v1457
        %v1459 = vcombine.low %v1403, %v1419
        %v1460 = vcombine.high %v1403, %v1419
        %v1462 = vunpack.c.l.s4 1934713408
        %v1463 = vunpack.c.0.s8 %v1462
        %v1464 = vlaneseq
        %v1465 = vshrl.u32 %v1464, 7
        %v1466 = vsub.s32 %v1463, %v1465
        %v1467 = vrot.slane %v1459, %v1466
        %v1469 = vunpack.c.l.s4 1934713408
        %v1470 = vunpack.c.0.s8 %v1469
        %v1471 = vlaneseq
        %v1472 = vshrl.u32 %v1471, 7
        %v1473 = vsub.s32 %v1470, %v1472
        %v1474 = vrot.slane %v1460, %v1473
        %v1475 = vcombine.low %v1410, %v1426
        %v1476 = vcombine.high %v1410, %v1426
        %v1478 = vunpack.c.l.s4 1934713408
        %v1479 = vunpack.c.0.s8 %v1478
        %v1480 = vlaneseq
        %v1481 = vshrl.u32 %v1480, 7
        %v1482 = vsub.s32 %v1479, %v1481
        %v1483 = vrot.slane %v1475, %v1482
        %v1485 = vunpack.c.l.s4 1934713408
        %v1486 = vunpack.c.0.s8 %v1485
        %v1487 = vlaneseq
        %v1488 = vshrl.u32 %v1487, 7
        %v1489 = vsub.s32 %v1486, %v1488
        %v1490 = vrot.slane %v1476, %v1489
        %v1491 = vcombine.low %v1435, %v1451
        %v1492 = vcombine.high %v1435, %v1451
        %v1494 = vunpack.c.l.s4 1934713408
        %v1495 = vunpack.c.0.s8 %v1494
        %v1496 = vlaneseq
        %v1497 = vshrl.u32 %v1496, 7
        %v1498 = vsub.s32 %v1495, %v1497
        %v1499 = vrot.slane %v1491, %v1498
        %v1501 = vunpack.c.l.s4 1934713408
        %v1502 = vunpack.c.0.s8 %v1501
        %v1503 = vlaneseq
        %v1504 = vshrl.u32 %v1503, 7
        %v1505 = vsub.s32 %v1502, %v1504
        %v1506 = vrot.slane %v1492, %v1505
        %v1507 = vcombine.low %v1442, %v1458
        %v1508 = vcombine.high %v1442, %v1458
        %v1510 = vunpack.c.l.s4 1934713408
        %v1511 = vunpack.c.0.s8 %v1510
        %v1512 = vlaneseq
        %v1513 = vshrl.u32 %v1512, 7
        %v1514 = vsub.s32 %v1511, %v1513
        %v1515 = vrot.slane %v1507, %v1514
        %v1517 = vunpack.c.l.s4 1934713408
        %v1518 = vunpack.c.0.s8 %v1517
        %v1519 = vlaneseq
        %v1520 = vshrl.u32 %v1519, 7
        %v1521 = vsub.s32 %v1518, %v1520
        %v1522 = vrot.slane %v1508, %v1521
        %v1523 = vcombine.low %v1467, %v1499
        %v1524 = vcombine.high %v1467, %v1499
        %v1525 = vcombine.low %v1474, %v1506
        %v1526 = vcombine.high %v1474, %v1506
        %v1527 = vcombine.low %v1483, %v1515
        %v1528 = vcombine.high %v1483, %v1515
        %v1529 = vcombine.low %v1490, %v1522
        %v1530 = vcombine.high %v1490, %v1522
        %v1531 = vcombine.low %v1523, %v1525
        %v1532 = vcombine.high %v1523, %v1525
        %v1534 = vunpack.c.l.s4 1983009808
        %v1535 = vunpack.c.0.s8 %v1534
        %v1536 = vlaneseq
        %v1537 = vshrl.u32 %v1536, 7
        %v1538 = vsub.s32 %v1535, %v1537
        %v1539 = vrot.slane %v1531, %v1538
        %v1541 = vunpack.c.l.s4 1983009808
        %v1542 = vunpack.c.0.s8 %v1541
        %v1543 = vlaneseq
        %v1544 = vshrl.u32 %v1543, 7
        %v1545 = vsub.s32 %v1542, %v1544
        %v1546 = vrot.slane %v1532, %v1545
        %v1547 = vcombine.low %v1524, %v1526
        %v1548 = vcombine.high %v1524, %v1526
        %v1550 = vunpack.c.l.s4 1983009808
        %v1551 = vunpack.c.0.s8 %v1550
        %v1552 = vlaneseq
        %v1553 = vshrl.u32 %v1552, 7
        %v1554 = vsub.s32 %v1551, %v1553
        %v1555 = vrot.slane %v1547, %v1554
        %v1557 = vunpack.c.l.s4 1983009808
        %v1558 = vunpack.c.0.s8 %v1557
        %v1559 = vlaneseq
        %v1560 = vshrl.u32 %v1559, 7
        %v1561 = vsub.s32 %v1558, %v1560
        %v1562 = vrot.slane %v1548, %v1561
        %v1563 = vcombine.low %v1527, %v1529
        %v1564 = vcombine.high %v1527, %v1529
        %v1566 = vunpack.c.l.s4 1983009808
        %v1567 = vunpack.c.0.s8 %v1566
        %v1568 = vlaneseq
        %v1569 = vshrl.u32 %v1568, 7
        %v1570 = vsub.s32 %v1567, %v1569
        %v1571 = vrot.slane %v1563, %v1570
        %v1573 = vunpack.c.l.s4 1983009808
        %v1574 = vunpack.c.0.s8 %v1573
        %v1575 = vlaneseq
        %v1576 = vshrl.u32 %v1575, 7
        %v1577 = vsub.s32 %v1574, %v1576
        %v1578 = vrot.slane %v1564, %v1577
        %v1579 = vcombine.low %v1528, %v1530
        %v1580 = vcombine.high %v1528, %v1530
        %v1582 = vunpack.c.l.s4 1983009808
        %v1583 = vunpack.c.0.s8 %v1582
        %v1584 = vlaneseq
        %v1585 = vshrl.u32 %v1584, 7
        %v1586 = vsub.s32 %v1583, %v1585
        %v1587 = vrot.slane %v1579, %v1586
        %v1589 = vunpack.c.l.s4 1983009808
        %v1590 = vunpack.c.0.s8 %v1589
        %v1591 = vlaneseq
        %v1592 = vshrl.u32 %v1591, 7
        %v1593 = vsub.s32 %v1590, %v1592
        %v1594 = vrot.slane %v1580, %v1593
        %v1595 = vcombine.low %v1539, %v1555
        %v1596 = vcombine.high %v1539, %v1555
        %v1598 = vunpack.c.l.s4 1934713408
        %v1599 = vunpack.c.0.s8 %v1598
        %v1600 = vlaneseq
        %v1601 = vshrl.u32 %v1600, 7
        %v1602 = vsub.s32 %v1599, %v1601
        %v1603 = vrot.slane %v1595, %v1602
        %v1605 = vunpack.c.l.s4 1934713408
        %v1606 = vunpack.c.0.s8 %v1605
        %v1607 = vlaneseq
        %v1608 = vshrl.u32 %v1607, 7
        %v1609 = vsub.s32 %v1606, %v1608
        %v1610 = vrot.slane %v1596, %v1609
        %v1611 = vcombine.low %v1546, %v1562
        %v1612 = vcombine.high %v1546, %v1562
        %v1614 = vunpack.c.l.s4 1934713408
        %v1615 = vunpack.c.0.s8 %v1614
        %v1616 = vlaneseq
        %v1617 = vshrl.u32 %v1616, 7
        %v1618 = vsub.s32 %v1615, %v1617
        %v1619 = vrot.slane %v1611, %v1618
        %v1621 = vunpack.c.l.s4 1934713408
        %v1622 = vunpack.c.0.s8 %v1621
        %v1623 = vlaneseq
        %v1624 = vshrl.u32 %v1623, 7
        %v1625 = vsub.s32 %v1622, %v1624
        %v1626 = vrot.slane %v1612, %v1625
        %v1627 = vcombine.low %v1571, %v1587
        %v1628 = vcombine.high %v1571, %v1587
        %v1630 = vunpack.c.l.s4 1934713408
        %v1631 = vunpack.c.0.s8 %v1630
        %v1632 = vlaneseq
        %v1633 = vshrl.u32 %v1632, 7
        %v1634 = vsub.s32 %v1631, %v1633
        %v1635 = vrot.slane %v1627, %v1634
        %v1637 = vunpack.c.l.s4 1934713408
        %v1638 = vunpack.c.0.s8 %v1637
        %v1639 = vlaneseq
        %v1640 = vshrl.u32 %v1639, 7
        %v1641 = vsub.s32 %v1638, %v1640
        %v1642 = vrot.slane %v1628, %v1641
        %v1643 = vcombine.low %v1578, %v1594
        %v1644 = vcombine.high %v1578, %v1594
        %v1646 = vunpack.c.l.s4 1934713408
        %v1647 = vunpack.c.0.s8 %v1646
        %v1648 = vlaneseq
        %v1649 = vshrl.u32 %v1648, 7
        %v1650 = vsub.s32 %v1647, %v1649
        %v1651 = vrot.slane %v1643, %v1650
        %v1653 = vunpack.c.l.s4 1934713408
        %v1654 = vunpack.c.0.s8 %v1653
        %v1655 = vlaneseq
        %v1656 = vshrl.u32 %v1655, 7
        %v1657 = vsub.s32 %v1654, %v1656
        %v1658 = vrot.slane %v1644, %v1657
        %v1659 = vcombine.low %v1603, %v1635
        %v1660 = vcombine.high %v1603, %v1635
        %v1661 = vcombine.low %v1610, %v1642
        %v1662 = vcombine.high %v1610, %v1642
        %v1663 = vcombine.low %v1619, %v1651
        %v1664 = vcombine.high %v1619, %v1651
        %v1665 = vcombine.low %v1626, %v1658
        %v1666 = vcombine.high %v1626, %v1658
        %v1667 = vld [vmem:[#allocation2] sm:$0xff]
        %v1668 = vld [vmem:[#allocation2 + $0x8] sm:$0xff]
        %v1669 = vld [vmem:[#allocation2 + $0x10] sm:$0xff]
        %v1670 = vld [vmem:[#allocation2 + $0x18] sm:$0xff]
        %v1671 = vld [vmem:[#allocation2 + $0x20] sm:$0xff]
        %v1672 = vld [vmem:[#allocation2 + $0x28] sm:$0xff]
        %v1673 = vld [vmem:[#allocation2 + $0x30] sm:$0xff]
        %v1674 = vld [vmem:[#allocation2 + $0x38] sm:$0xff]
        %vm1675 = vcmask 31744
        %v1677 = vsel %vm1675, %v1659, 0
        %v1680 = vsel %vm1675, %v1667, 0
        %1682 = vmatprep.subr.mxu0 0.0
        %1683 = vmatpush1.xpose.msra.mxu0 0.0
        %1684 = vmatprep.subr.mxu0 0.0
        %1685 = vmatpush1.xpose.msra.mxu0 0.0
        %1686 = vmatprep.subr.mxu0 0.0
        %1687 = vmatpush1.xpose.msra.mxu0 0.0
        %1688 = vmatprep.subr.mxu0 0.0
        %1689 = vmatpush1.xpose.msra.mxu0 0.0
        %1690 = vmatprep.subr.mxu0 0.0
        %1691 = vmatpush1.xpose.msra.mxu0 0.0
        %1692 = vmatprep.subr.mxu0 0.0
        %1693 = vmatpush1.xpose.msra.mxu0 0.0
        %1694 = vmatprep.subr.mxu0 0.0
        %1695 = vmatpush1.xpose.msra.mxu0 0.0
        %1696 = vmatprep.subr.mxu0 0.0
        %1697 = vmatpush1.xpose.msra.mxu0 0.0
        %1698 = vmatprep.subr.mxu0 0.0
        %1699 = vmatpush1.xpose.msra.mxu0 0.0
        %1700 = vmatprep.subr.mxu0 0.0
        %1701 = vmatpush1.xpose.msra.mxu0 0.0
        %1702 = vmatprep.subr.mxu0 0.0
        %1703 = vmatpush1.xpose.msra.mxu0 0.0
        %1704 = vmatprep.subr.mxu0 0.0
        %1705 = vmatpush1.xpose.msra.mxu0 0.0
        %1706 = vmatprep.subr.mxu0 0.0
        %1707 = vmatpush1.xpose.msra.mxu0 0.0
        %1708 = vmatprep.subr.mxu0 0.0
        %1709 = vmatpush1.xpose.msra.mxu0 0.0
        %1710 = vmatprep.subr.mxu0 0.0
        %1711 = vmatpush1.xpose.msra.mxu0 0.0
        %1712 = vmatprep.subr.mxu0 0.0
        %1713 = vmatpush1.xpose.msra.mxu0 %v1680
        %1714 = vmatprep.subr.mxu0 0.0
        %1715 = vmatpush2.xpose.msra.mxu0 0.0
        %1716 = vmatprep.subr.mxu0 0.0
        %1717 = vmatpush2.xpose.msra.mxu0 0.0
        %1718 = vmatprep.subr.mxu0 0.0
        %1719 = vmatpush2.xpose.msra.mxu0 0.0
        %1720 = vmatprep.subr.mxu0 0.0
        %1721 = vmatpush2.xpose.msra.mxu0 0.0
        %1722 = vmatprep.subr.mxu0 0.0
        %1723 = vmatpush2.xpose.msra.mxu0 0.0
        %1724 = vmatprep.subr.mxu0 0.0
        %1725 = vmatpush2.xpose.msra.mxu0 0.0
        %1726 = vmatprep.subr.mxu0 0.0
        %1727 = vmatpush2.xpose.msra.mxu0 0.0
        %1728 = vmatprep.subr.mxu0 0.0
        %1729 = vmatpush2.xpose.msra.mxu0 0.0
        %1730 = vmatprep.subr.mxu0 0.0
        %1731 = vmatpush2.xpose.msra.mxu0 0.0
        %1732 = vmatprep.subr.mxu0 0.0
        %1733 = vmatpush2.xpose.msra.mxu0 0.0
        %1734 = vmatprep.subr.mxu0 0.0
        %1735 = vmatpush2.xpose.msra.mxu0 0.0
        %1736 = vmatprep.subr.mxu0 0.0
        %1737 = vmatpush2.xpose.msra.mxu0 0.0
        %1738 = vmatprep.subr.mxu0 0.0
        %1739 = vmatpush2.xpose.msra.mxu0 0.0
        %1740 = vmatprep.subr.mxu0 0.0
        %1741 = vmatpush2.xpose.msra.mxu0 0.0
        %1742 = vmatprep.subr.mxu0 0.0
        %1743 = vmatpush2.xpose.msra.mxu0 0.0
        %1744 = vmatprep.subr.mxu0 0.0
        %1745 = vmatpush2.xpose.msra.mxu0 0.0
        %1746 = vmatprep.mubr.f32.mxu0 0.0
        %1747 = vmatmul.mubr.f32.gmra.mxu0 %v1677
        %v1748 = vpop.f32.mrf.mxu0
        %v1749 = vadd.f32 0.0, %v1748
        %v1750 = vpop.f32.mrf.mxu0
        %1751 = vdwg.mxu0
        %v1753 = vsel %vm1675, %v1660, 0
        %v1756 = vsel %vm1675, %v1668, 0
        %1758 = vmatprep.subr.mxu0 0.0
        %1759 = vmatpush1.xpose.msra.mxu0 0.0
        %1760 = vmatprep.subr.mxu0 0.0
        %1761 = vmatpush1.xpose.msra.mxu0 0.0
        %1762 = vmatprep.subr.mxu0 0.0
        %1763 = vmatpush1.xpose.msra.mxu0 0.0
        %1764 = vmatprep.subr.mxu0 0.0
        %1765 = vmatpush1.xpose.msra.mxu0 0.0
        %1766 = vmatprep.subr.mxu0 0.0
        %1767 = vmatpush1.xpose.msra.mxu0 0.0
        %1768 = vmatprep.subr.mxu0 0.0
        %1769 = vmatpush1.xpose.msra.mxu0 0.0
        %1770 = vmatprep.subr.mxu0 0.0
        %1771 = vmatpush1.xpose.msra.mxu0 0.0
        %1772 = vmatprep.subr.mxu0 0.0
        %1773 = vmatpush1.xpose.msra.mxu0 0.0
        %1774 = vmatprep.subr.mxu0 0.0
        %1775 = vmatpush1.xpose.msra.mxu0 0.0
        %1776 = vmatprep.subr.mxu0 0.0
        %1777 = vmatpush1.xpose.msra.mxu0 0.0
        %1778 = vmatprep.subr.mxu0 0.0
        %1779 = vmatpush1.xpose.msra.mxu0 0.0
        %1780 = vmatprep.subr.mxu0 0.0
        %1781 = vmatpush1.xpose.msra.mxu0 0.0
        %1782 = vmatprep.subr.mxu0 0.0
        %1783 = vmatpush1.xpose.msra.mxu0 0.0
        %1784 = vmatprep.subr.mxu0 0.0
        %1785 = vmatpush1.xpose.msra.mxu0 0.0
        %1786 = vmatprep.subr.mxu0 0.0
        %1787 = vmatpush1.xpose.msra.mxu0 0.0
        %1788 = vmatprep.subr.mxu0 0.0
        %1789 = vmatpush1.xpose.msra.mxu0 %v1756
        %1790 = vmatprep.subr.mxu0 0.0
        %1791 = vmatpush2.xpose.msra.mxu0 0.0
        %1792 = vmatprep.subr.mxu0 0.0
        %1793 = vmatpush2.xpose.msra.mxu0 0.0
        %1794 = vmatprep.subr.mxu0 0.0
        %1795 = vmatpush2.xpose.msra.mxu0 0.0
        %1796 = vmatprep.subr.mxu0 0.0
        %1797 = vmatpush2.xpose.msra.mxu0 0.0
        %1798 = vmatprep.subr.mxu0 0.0
        %1799 = vmatpush2.xpose.msra.mxu0 0.0
        %1800 = vmatprep.subr.mxu0 0.0
        %1801 = vmatpush2.xpose.msra.mxu0 0.0
        %1802 = vmatprep.subr.mxu0 0.0
        %1803 = vmatpush2.xpose.msra.mxu0 0.0
        %1804 = vmatprep.subr.mxu0 0.0
        %1805 = vmatpush2.xpose.msra.mxu0 0.0
        %1806 = vmatprep.subr.mxu0 0.0
        %1807 = vmatpush2.xpose.msra.mxu0 0.0
        %1808 = vmatprep.subr.mxu0 0.0
        %1809 = vmatpush2.xpose.msra.mxu0 0.0
        %1810 = vmatprep.subr.mxu0 0.0
        %1811 = vmatpush2.xpose.msra.mxu0 0.0
        %1812 = vmatprep.subr.mxu0 0.0
        %1813 = vmatpush2.xpose.msra.mxu0 0.0
        %1814 = vmatprep.subr.mxu0 0.0
        %1815 = vmatpush2.xpose.msra.mxu0 0.0
        %1816 = vmatprep.subr.mxu0 0.0
        %1817 = vmatpush2.xpose.msra.mxu0 0.0
        %1818 = vmatprep.subr.mxu0 0.0
        %1819 = vmatpush2.xpose.msra.mxu0 0.0
        %1820 = vmatprep.subr.mxu0 0.0
        %1821 = vmatpush2.xpose.msra.mxu0 0.0
        %1822 = vmatprep.mubr.f32.mxu0 0.0
        %1823 = vmatmul.mubr.f32.gmra.mxu0 %v1753
        %v1824 = vpop.f32.mrf.mxu0
        %v1825 = vadd.f32 0.0, %v1824
        %v1826 = vpop.f32.mrf.mxu0
        %1827 = vdwg.mxu0
        %v1829 = vsel %vm1675, %v1661, 0
        %v1832 = vsel %vm1675, %v1669, 0
        %1834 = vmatprep.subr.mxu0 0.0
        %1835 = vmatpush1.xpose.msra.mxu0 0.0
        %1836 = vmatprep.subr.mxu0 0.0
        %1837 = vmatpush1.xpose.msra.mxu0 0.0
        %1838 = vmatprep.subr.mxu0 0.0
        %1839 = vmatpush1.xpose.msra.mxu0 0.0
        %1840 = vmatprep.subr.mxu0 0.0
        %1841 = vmatpush1.xpose.msra.mxu0 0.0
        %1842 = vmatprep.subr.mxu0 0.0
        %1843 = vmatpush1.xpose.msra.mxu0 0.0
        %1844 = vmatprep.subr.mxu0 0.0
        %1845 = vmatpush1.xpose.msra.mxu0 0.0
        %1846 = vmatprep.subr.mxu0 0.0
        %1847 = vmatpush1.xpose.msra.mxu0 0.0
        %1848 = vmatprep.subr.mxu0 0.0
        %1849 = vmatpush1.xpose.msra.mxu0 0.0
        %1850 = vmatprep.subr.mxu0 0.0
        %1851 = vmatpush1.xpose.msra.mxu0 0.0
        %1852 = vmatprep.subr.mxu0 0.0
        %1853 = vmatpush1.xpose.msra.mxu0 0.0
        %1854 = vmatprep.subr.mxu0 0.0
        %1855 = vmatpush1.xpose.msra.mxu0 0.0
        %1856 = vmatprep.subr.mxu0 0.0
        %1857 = vmatpush1.xpose.msra.mxu0 0.0
        %1858 = vmatprep.subr.mxu0 0.0
        %1859 = vmatpush1.xpose.msra.mxu0 0.0
        %1860 = vmatprep.subr.mxu0 0.0
        %1861 = vmatpush1.xpose.msra.mxu0 0.0
        %1862 = vmatprep.subr.mxu0 0.0
        %1863 = vmatpush1.xpose.msra.mxu0 0.0
        %1864 = vmatprep.subr.mxu0 0.0
        %1865 = vmatpush1.xpose.msra.mxu0 %v1832
        %1866 = vmatprep.subr.mxu0 0.0
        %1867 = vmatpush2.xpose.msra.mxu0 0.0
        %1868 = vmatprep.subr.mxu0 0.0
        %1869 = vmatpush2.xpose.msra.mxu0 0.0
        %1870 = vmatprep.subr.mxu0 0.0
        %1871 = vmatpush2.xpose.msra.mxu0 0.0
        %1872 = vmatprep.subr.mxu0 0.0
        %1873 = vmatpush2.xpose.msra.mxu0 0.0
        %1874 = vmatprep.subr.mxu0 0.0
        %1875 = vmatpush2.xpose.msra.mxu0 0.0
        %1876 = vmatprep.subr.mxu0 0.0
        %1877 = vmatpush2.xpose.msra.mxu0 0.0
        %1878 = vmatprep.subr.mxu0 0.0
        %1879 = vmatpush2.xpose.msra.mxu0 0.0
        %1880 = vmatprep.subr.mxu0 0.0
        %1881 = vmatpush2.xpose.msra.mxu0 0.0
        %1882 = vmatprep.subr.mxu0 0.0
        %1883 = vmatpush2.xpose.msra.mxu0 0.0
        %1884 = vmatprep.subr.mxu0 0.0
        %1885 = vmatpush2.xpose.msra.mxu0 0.0
        %1886 = vmatprep.subr.mxu0 0.0
        %1887 = vmatpush2.xpose.msra.mxu0 0.0
        %1888 = vmatprep.subr.mxu0 0.0
        %1889 = vmatpush2.xpose.msra.mxu0 0.0
        %1890 = vmatprep.subr.mxu0 0.0
        %1891 = vmatpush2.xpose.msra.mxu0 0.0
        %1892 = vmatprep.subr.mxu0 0.0
        %1893 = vmatpush2.xpose.msra.mxu0 0.0
        %1894 = vmatprep.subr.mxu0 0.0
        %1895 = vmatpush2.xpose.msra.mxu0 0.0
        %1896 = vmatprep.subr.mxu0 0.0
        %1897 = vmatpush2.xpose.msra.mxu0 0.0
        %1898 = vmatprep.mubr.f32.mxu0 0.0
        %1899 = vmatmul.mubr.f32.gmra.mxu0 %v1829
        %v1900 = vpop.f32.mrf.mxu0
        %v1901 = vadd.f32 0.0, %v1900
        %v1902 = vpop.f32.mrf.mxu0
        %1903 = vdwg.mxu0
        %v1905 = vsel %vm1675, %v1662, 0
        %v1908 = vsel %vm1675, %v1670, 0
        %1910 = vmatprep.subr.mxu0 0.0
        %1911 = vmatpush1.xpose.msra.mxu0 0.0
        %1912 = vmatprep.subr.mxu0 0.0
        %1913 = vmatpush1.xpose.msra.mxu0 0.0
        %1914 = vmatprep.subr.mxu0 0.0
        %1915 = vmatpush1.xpose.msra.mxu0 0.0
        %1916 = vmatprep.subr.mxu0 0.0
        %1917 = vmatpush1.xpose.msra.mxu0 0.0
        %1918 = vmatprep.subr.mxu0 0.0
        %1919 = vmatpush1.xpose.msra.mxu0 0.0
        %1920 = vmatprep.subr.mxu0 0.0
        %1921 = vmatpush1.xpose.msra.mxu0 0.0
        %1922 = vmatprep.subr.mxu0 0.0
        %1923 = vmatpush1.xpose.msra.mxu0 0.0
        %1924 = vmatprep.subr.mxu0 0.0
        %1925 = vmatpush1.xpose.msra.mxu0 0.0
        %1926 = vmatprep.subr.mxu0 0.0
        %1927 = vmatpush1.xpose.msra.mxu0 0.0
        %1928 = vmatprep.subr.mxu0 0.0
        %1929 = vmatpush1.xpose.msra.mxu0 0.0
        %1930 = vmatprep.subr.mxu0 0.0
        %1931 = vmatpush1.xpose.msra.mxu0 0.0
        %1932 = vmatprep.subr.mxu0 0.0
        %1933 = vmatpush1.xpose.msra.mxu0 0.0
        %1934 = vmatprep.subr.mxu0 0.0
        %1935 = vmatpush1.xpose.msra.mxu0 0.0
        %1936 = vmatprep.subr.mxu0 0.0
        %1937 = vmatpush1.xpose.msra.mxu0 0.0
        %1938 = vmatprep.subr.mxu0 0.0
        %1939 = vmatpush1.xpose.msra.mxu0 0.0
        %1940 = vmatprep.subr.mxu0 0.0
        %1941 = vmatpush1.xpose.msra.mxu0 %v1908
        %1942 = vmatprep.subr.mxu0 0.0
        %1943 = vmatpush2.xpose.msra.mxu0 0.0
        %1944 = vmatprep.subr.mxu0 0.0
        %1945 = vmatpush2.xpose.msra.mxu0 0.0
        %1946 = vmatprep.subr.mxu0 0.0
        %1947 = vmatpush2.xpose.msra.mxu0 0.0
        %1948 = vmatprep.subr.mxu0 0.0
        %1949 = vmatpush2.xpose.msra.mxu0 0.0
        %1950 = vmatprep.subr.mxu0 0.0
        %1951 = vmatpush2.xpose.msra.mxu0 0.0
        %1952 = vmatprep.subr.mxu0 0.0
        %1953 = vmatpush2.xpose.msra.mxu0 0.0
        %1954 = vmatprep.subr.mxu0 0.0
        %1955 = vmatpush2.xpose.msra.mxu0 0.0
        %1956 = vmatprep.subr.mxu0 0.0
        %1957 = vmatpush2.xpose.msra.mxu0 0.0
        %1958 = vmatprep.subr.mxu0 0.0
        %1959 = vmatpush2.xpose.msra.mxu0 0.0
        %1960 = vmatprep.subr.mxu0 0.0
        %1961 = vmatpush2.xpose.msra.mxu0 0.0
        %1962 = vmatprep.subr.mxu0 0.0
        %1963 = vmatpush2.xpose.msra.mxu0 0.0
        %1964 = vmatprep.subr.mxu0 0.0
        %1965 = vmatpush2.xpose.msra.mxu0 0.0
        %1966 = vmatprep.subr.mxu0 0.0
        %1967 = vmatpush2.xpose.msra.mxu0 0.0
        %1968 = vmatprep.subr.mxu0 0.0
        %1969 = vmatpush2.xpose.msra.mxu0 0.0
        %1970 = vmatprep.subr.mxu0 0.0
        %1971 = vmatpush2.xpose.msra.mxu0 0.0
        %1972 = vmatprep.subr.mxu0 0.0
        %1973 = vmatpush2.xpose.msra.mxu0 0.0
        %1974 = vmatprep.mubr.f32.mxu0 0.0
        %1975 = vmatmul.mubr.f32.gmra.mxu0 %v1905
        %v1976 = vpop.f32.mrf.mxu0
        %v1977 = vadd.f32 0.0, %v1976
        %v1978 = vpop.f32.mrf.mxu0
        %1979 = vdwg.mxu0
        %v1981 = vsel %vm1675, %v1663, 0
        %v1984 = vsel %vm1675, %v1671, 0
        %1986 = vmatprep.subr.mxu0 0.0
        %1987 = vmatpush1.xpose.msra.mxu0 0.0
        %1988 = vmatprep.subr.mxu0 0.0
        %1989 = vmatpush1.xpose.msra.mxu0 0.0
        %1990 = vmatprep.subr.mxu0 0.0
        %1991 = vmatpush1.xpose.msra.mxu0 0.0
        %1992 = vmatprep.subr.mxu0 0.0
        %1993 = vmatpush1.xpose.msra.mxu0 0.0
        %1994 = vmatprep.subr.mxu0 0.0
        %1995 = vmatpush1.xpose.msra.mxu0 0.0
        %1996 = vmatprep.subr.mxu0 0.0
        %1997 = vmatpush1.xpose.msra.mxu0 0.0
        %1998 = vmatprep.subr.mxu0 0.0
        %1999 = vmatpush1.xpose.msra.mxu0 0.0
        %2000 = vmatprep.subr.mxu0 0.0
        %2001 = vmatpush1.xpose.msra.mxu0 0.0
        %2002 = vmatprep.subr.mxu0 0.0
        %2003 = vmatpush1.xpose.msra.mxu0 0.0
        %2004 = vmatprep.subr.mxu0 0.0
        %2005 = vmatpush1.xpose.msra.mxu0 0.0
        %2006 = vmatprep.subr.mxu0 0.0
        %2007 = vmatpush1.xpose.msra.mxu0 0.0
        %2008 = vmatprep.subr.mxu0 0.0
        %2009 = vmatpush1.xpose.msra.mxu0 0.0
        %2010 = vmatprep.subr.mxu0 0.0
        %2011 = vmatpush1.xpose.msra.mxu0 0.0
        %2012 = vmatprep.subr.mxu0 0.0
        %2013 = vmatpush1.xpose.msra.mxu0 0.0
        %2014 = vmatprep.subr.mxu0 0.0
        %2015 = vmatpush1.xpose.msra.mxu0 0.0
        %2016 = vmatprep.subr.mxu0 0.0
        %2017 = vmatpush1.xpose.msra.mxu0 %v1984
        %2018 = vmatprep.subr.mxu0 0.0
        %2019 = vmatpush2.xpose.msra.mxu0 0.0
        %2020 = vmatprep.subr.mxu0 0.0
        %2021 = vmatpush2.xpose.msra.mxu0 0.0
        %2022 = vmatprep.subr.mxu0 0.0
        %2023 = vmatpush2.xpose.msra.mxu0 0.0
        %2024 = vmatprep.subr.mxu0 0.0
        %2025 = vmatpush2.xpose.msra.mxu0 0.0
        %2026 = vmatprep.subr.mxu0 0.0
        %2027 = vmatpush2.xpose.msra.mxu0 0.0
        %2028 = vmatprep.subr.mxu0 0.0
        %2029 = vmatpush2.xpose.msra.mxu0 0.0
        %2030 = vmatprep.subr.mxu0 0.0
        %2031 = vmatpush2.xpose.msra.mxu0 0.0
        %2032 = vmatprep.subr.mxu0 0.0
        %2033 = vmatpush2.xpose.msra.mxu0 0.0
        %2034 = vmatprep.subr.mxu0 0.0
        %2035 = vmatpush2.xpose.msra.mxu0 0.0
        %2036 = vmatprep.subr.mxu0 0.0
        %2037 = vmatpush2.xpose.msra.mxu0 0.0
        %2038 = vmatprep.subr.mxu0 0.0
        %2039 = vmatpush2.xpose.msra.mxu0 0.0
        %2040 = vmatprep.subr.mxu0 0.0
        %2041 = vmatpush2.xpose.msra.mxu0 0.0
        %2042 = vmatprep.subr.mxu0 0.0
        %2043 = vmatpush2.xpose.msra.mxu0 0.0
        %2044 = vmatprep.subr.mxu0 0.0
        %2045 = vmatpush2.xpose.msra.mxu0 0.0
        %2046 = vmatprep.subr.mxu0 0.0
        %2047 = vmatpush2.xpose.msra.mxu0 0.0
        %2048 = vmatprep.subr.mxu0 0.0
        %2049 = vmatpush2.xpose.msra.mxu0 0.0
        %2050 = vmatprep.mubr.f32.mxu0 0.0
        %2051 = vmatmul.mubr.f32.gmra.mxu0 %v1981
        %v2052 = vpop.f32.mrf.mxu0
        %v2053 = vadd.f32 0.0, %v2052
        %v2054 = vpop.f32.mrf.mxu0
        %2055 = vdwg.mxu0
        %v2057 = vsel %vm1675, %v1664, 0
        %v2060 = vsel %vm1675, %v1672, 0
        %2062 = vmatprep.subr.mxu0 0.0
        %2063 = vmatpush1.xpose.msra.mxu0 0.0
        %2064 = vmatprep.subr.mxu0 0.0
        %2065 = vmatpush1.xpose.msra.mxu0 0.0
        %2066 = vmatprep.subr.mxu0 0.0
        %2067 = vmatpush1.xpose.msra.mxu0 0.0
        %2068 = vmatprep.subr.mxu0 0.0
        %2069 = vmatpush1.xpose.msra.mxu0 0.0
        %2070 = vmatprep.subr.mxu0 0.0
        %2071 = vmatpush1.xpose.msra.mxu0 0.0
        %2072 = vmatprep.subr.mxu0 0.0
        %2073 = vmatpush1.xpose.msra.mxu0 0.0
        %2074 = vmatprep.subr.mxu0 0.0
        %2075 = vmatpush1.xpose.msra.mxu0 0.0
        %2076 = vmatprep.subr.mxu0 0.0
        %2077 = vmatpush1.xpose.msra.mxu0 0.0
        %2078 = vmatprep.subr.mxu0 0.0
        %2079 = vmatpush1.xpose.msra.mxu0 0.0
        %2080 = vmatprep.subr.mxu0 0.0
        %2081 = vmatpush1.xpose.msra.mxu0 0.0
        %2082 = vmatprep.subr.mxu0 0.0
        %2083 = vmatpush1.xpose.msra.mxu0 0.0
        %2084 = vmatprep.subr.mxu0 0.0
        %2085 = vmatpush1.xpose.msra.mxu0 0.0
        %2086 = vmatprep.subr.mxu0 0.0
        %2087 = vmatpush1.xpose.msra.mxu0 0.0
        %2088 = vmatprep.subr.mxu0 0.0
        %2089 = vmatpush1.xpose.msra.mxu0 0.0
        %2090 = vmatprep.subr.mxu0 0.0
        %2091 = vmatpush1.xpose.msra.mxu0 0.0
        %2092 = vmatprep.subr.mxu0 0.0
        %2093 = vmatpush1.xpose.msra.mxu0 %v2060
        %2094 = vmatprep.subr.mxu0 0.0
        %2095 = vmatpush2.xpose.msra.mxu0 0.0
        %2096 = vmatprep.subr.mxu0 0.0
        %2097 = vmatpush2.xpose.msra.mxu0 0.0
        %2098 = vmatprep.subr.mxu0 0.0
        %2099 = vmatpush2.xpose.msra.mxu0 0.0
        %2100 = vmatprep.subr.mxu0 0.0
        %2101 = vmatpush2.xpose.msra.mxu0 0.0
        %2102 = vmatprep.subr.mxu0 0.0
        %2103 = vmatpush2.xpose.msra.mxu0 0.0
        %2104 = vmatprep.subr.mxu0 0.0
        %2105 = vmatpush2.xpose.msra.mxu0 0.0
        %2106 = vmatprep.subr.mxu0 0.0
        %2107 = vmatpush2.xpose.msra.mxu0 0.0
        %2108 = vmatprep.subr.mxu0 0.0
        %2109 = vmatpush2.xpose.msra.mxu0 0.0
        %2110 = vmatprep.subr.mxu0 0.0
        %2111 = vmatpush2.xpose.msra.mxu0 0.0
        %2112 = vmatprep.subr.mxu0 0.0
        %2113 = vmatpush2.xpose.msra.mxu0 0.0
        %2114 = vmatprep.subr.mxu0 0.0
        %2115 = vmatpush2.xpose.msra.mxu0 0.0
        %2116 = vmatprep.subr.mxu0 0.0
        %2117 = vmatpush2.xpose.msra.mxu0 0.0
        %2118 = vmatprep.subr.mxu0 0.0
        %2119 = vmatpush2.xpose.msra.mxu0 0.0
        %2120 = vmatprep.subr.mxu0 0.0
        %2121 = vmatpush2.xpose.msra.mxu0 0.0
        %2122 = vmatprep.subr.mxu0 0.0
        %2123 = vmatpush2.xpose.msra.mxu0 0.0
        %2124 = vmatprep.subr.mxu0 0.0
        %2125 = vmatpush2.xpose.msra.mxu0 0.0
        %2126 = vmatprep.mubr.f32.mxu0 0.0
        %2127 = vmatmul.mubr.f32.gmra.mxu0 %v2057
        %v2128 = vpop.f32.mrf.mxu0
        %v2129 = vadd.f32 0.0, %v2128
        %v2130 = vpop.f32.mrf.mxu0
        %2131 = vdwg.mxu0
        %v2133 = vsel %vm1675, %v1665, 0
        %v2136 = vsel %vm1675, %v1673, 0
        %2138 = vmatprep.subr.mxu0 0.0
        %2139 = vmatpush1.xpose.msra.mxu0 0.0
        %2140 = vmatprep.subr.mxu0 0.0
        %2141 = vmatpush1.xpose.msra.mxu0 0.0
        %2142 = vmatprep.subr.mxu0 0.0
        %2143 = vmatpush1.xpose.msra.mxu0 0.0
        %2144 = vmatprep.subr.mxu0 0.0
        %2145 = vmatpush1.xpose.msra.mxu0 0.0
        %2146 = vmatprep.subr.mxu0 0.0
        %2147 = vmatpush1.xpose.msra.mxu0 0.0
        %2148 = vmatprep.subr.mxu0 0.0
        %2149 = vmatpush1.xpose.msra.mxu0 0.0
        %2150 = vmatprep.subr.mxu0 0.0
        %2151 = vmatpush1.xpose.msra.mxu0 0.0
        %2152 = vmatprep.subr.mxu0 0.0
        %2153 = vmatpush1.xpose.msra.mxu0 0.0
        %2154 = vmatprep.subr.mxu0 0.0
        %2155 = vmatpush1.xpose.msra.mxu0 0.0
        %2156 = vmatprep.subr.mxu0 0.0
        %2157 = vmatpush1.xpose.msra.mxu0 0.0
        %2158 = vmatprep.subr.mxu0 0.0
        %2159 = vmatpush1.xpose.msra.mxu0 0.0
        %2160 = vmatprep.subr.mxu0 0.0
        %2161 = vmatpush1.xpose.msra.mxu0 0.0
        %2162 = vmatprep.subr.mxu0 0.0
        %2163 = vmatpush1.xpose.msra.mxu0 0.0
        %2164 = vmatprep.subr.mxu0 0.0
        %2165 = vmatpush1.xpose.msra.mxu0 0.0
        %2166 = vmatprep.subr.mxu0 0.0
        %2167 = vmatpush1.xpose.msra.mxu0 0.0
        %2168 = vmatprep.subr.mxu0 0.0
        %2169 = vmatpush1.xpose.msra.mxu0 %v2136
        %2170 = vmatprep.subr.mxu0 0.0
        %2171 = vmatpush2.xpose.msra.mxu0 0.0
        %2172 = vmatprep.subr.mxu0 0.0
        %2173 = vmatpush2.xpose.msra.mxu0 0.0
        %2174 = vmatprep.subr.mxu0 0.0
        %2175 = vmatpush2.xpose.msra.mxu0 0.0
        %2176 = vmatprep.subr.mxu0 0.0
        %2177 = vmatpush2.xpose.msra.mxu0 0.0
        %2178 = vmatprep.subr.mxu0 0.0
        %2179 = vmatpush2.xpose.msra.mxu0 0.0
        %2180 = vmatprep.subr.mxu0 0.0
        %2181 = vmatpush2.xpose.msra.mxu0 0.0
        %2182 = vmatprep.subr.mxu0 0.0
        %2183 = vmatpush2.xpose.msra.mxu0 0.0
        %2184 = vmatprep.subr.mxu0 0.0
        %2185 = vmatpush2.xpose.msra.mxu0 0.0
        %2186 = vmatprep.subr.mxu0 0.0
        %2187 = vmatpush2.xpose.msra.mxu0 0.0
        %2188 = vmatprep.subr.mxu0 0.0
        %2189 = vmatpush2.xpose.msra.mxu0 0.0
        %2190 = vmatprep.subr.mxu0 0.0
        %2191 = vmatpush2.xpose.msra.mxu0 0.0
        %2192 = vmatprep.subr.mxu0 0.0
        %2193 = vmatpush2.xpose.msra.mxu0 0.0
        %2194 = vmatprep.subr.mxu0 0.0
        %2195 = vmatpush2.xpose.msra.mxu0 0.0
        %2196 = vmatprep.subr.mxu0 0.0
        %2197 = vmatpush2.xpose.msra.mxu0 0.0
        %2198 = vmatprep.subr.mxu0 0.0
        %2199 = vmatpush2.xpose.msra.mxu0 0.0
        %2200 = vmatprep.subr.mxu0 0.0
        %2201 = vmatpush2.xpose.msra.mxu0 0.0
        %2202 = vmatprep.mubr.f32.mxu0 0.0
        %2203 = vmatmul.mubr.f32.gmra.mxu0 %v2133
        %v2204 = vpop.f32.mrf.mxu0
        %v2205 = vadd.f32 0.0, %v2204
        %v2206 = vpop.f32.mrf.mxu0
        %2207 = vdwg.mxu0
        %v2209 = vsel %vm1675, %v1666, 0
        %v2212 = vsel %vm1675, %v1674, 0
        %2214 = vmatprep.subr.mxu0 0.0
        %2215 = vmatpush1.xpose.msra.mxu0 0.0
        %2216 = vmatprep.subr.mxu0 0.0
        %2217 = vmatpush1.xpose.msra.mxu0 0.0
        %2218 = vmatprep.subr.mxu0 0.0
        %2219 = vmatpush1.xpose.msra.mxu0 0.0
        %2220 = vmatprep.subr.mxu0 0.0
        %2221 = vmatpush1.xpose.msra.mxu0 0.0
        %2222 = vmatprep.subr.mxu0 0.0
        %2223 = vmatpush1.xpose.msra.mxu0 0.0
        %2224 = vmatprep.subr.mxu0 0.0
        %2225 = vmatpush1.xpose.msra.mxu0 0.0
        %2226 = vmatprep.subr.mxu0 0.0
        %2227 = vmatpush1.xpose.msra.mxu0 0.0
        %2228 = vmatprep.subr.mxu0 0.0
        %2229 = vmatpush1.xpose.msra.mxu0 0.0
        %2230 = vmatprep.subr.mxu0 0.0
        %2231 = vmatpush1.xpose.msra.mxu0 0.0
        %2232 = vmatprep.subr.mxu0 0.0
        %2233 = vmatpush1.xpose.msra.mxu0 0.0
        %2234 = vmatprep.subr.mxu0 0.0
        %2235 = vmatpush1.xpose.msra.mxu0 0.0
        %2236 = vmatprep.subr.mxu0 0.0
        %2237 = vmatpush1.xpose.msra.mxu0 0.0
        %2238 = vmatprep.subr.mxu0 0.0
        %2239 = vmatpush1.xpose.msra.mxu0 0.0
        %2240 = vmatprep.subr.mxu0 0.0
        %2241 = vmatpush1.xpose.msra.mxu0 0.0
        %2242 = vmatprep.subr.mxu0 0.0
        %2243 = vmatpush1.xpose.msra.mxu0 0.0
        %2244 = vmatprep.subr.mxu0 0.0
        %2245 = vmatpush1.xpose.msra.mxu0 %v2212
        %2246 = vmatprep.subr.mxu0 0.0
        %2247 = vmatpush2.xpose.msra.mxu0 0.0
        %2248 = vmatprep.subr.mxu0 0.0
        %2249 = vmatpush2.xpose.msra.mxu0 0.0
        %2250 = vmatprep.subr.mxu0 0.0
        %2251 = vmatpush2.xpose.msra.mxu0 0.0
        %2252 = vmatprep.subr.mxu0 0.0
        %2253 = vmatpush2.xpose.msra.mxu0 0.0
        %2254 = vmatprep.subr.mxu0 0.0
        %2255 = vmatpush2.xpose.msra.mxu0 0.0
        %2256 = vmatprep.subr.mxu0 0.0
        %2257 = vmatpush2.xpose.msra.mxu0 0.0
        %2258 = vmatprep.subr.mxu0 0.0
        %2259 = vmatpush2.xpose.msra.mxu0 0.0
        %2260 = vmatprep.subr.mxu0 0.0
        %2261 = vmatpush2.xpose.msra.mxu0 0.0
        %2262 = vmatprep.subr.mxu0 0.0
        %2263 = vmatpush2.xpose.msra.mxu0 0.0
        %2264 = vmatprep.subr.mxu0 0.0
        %2265 = vmatpush2.xpose.msra.mxu0 0.0
        %2266 = vmatprep.subr.mxu0 0.0
        %2267 = vmatpush2.xpose.msra.mxu0 0.0
        %2268 = vmatprep.subr.mxu0 0.0
        %2269 = vmatpush2.xpose.msra.mxu0 0.0
        %2270 = vmatprep.subr.mxu0 0.0
        %2271 = vmatpush2.xpose.msra.mxu0 0.0
        %2272 = vmatprep.subr.mxu0 0.0
        %2273 = vmatpush2.xpose.msra.mxu0 0.0
        %2274 = vmatprep.subr.mxu0 0.0
        %2275 = vmatpush2.xpose.msra.mxu0 0.0
        %2276 = vmatprep.subr.mxu0 0.0
        %2277 = vmatpush2.xpose.msra.mxu0 0.0
        %2278 = vmatprep.mubr.f32.mxu0 0.0
        %2279 = vmatmul.mubr.f32.gmra.mxu0 %v2209
        %v2280 = vpop.f32.mrf.mxu0
        %v2281 = vadd.f32 0.0, %v2280
        %v2282 = vpop.f32.mrf.mxu0
        %2283 = vdwg.mxu0
        %vm2284 = vcmask 64512
        %v2285 = vsel %vm2284, %v1749, -inf
        %2286 = vmax.xlane.f32.xlu0 %v2285
        %v2287 = vpop.xlane.xlu0 %2286
        %v2288 = vsel %vm2284, %v1825, -inf
        %2289 = vmax.xlane.f32.xlu0 %v2288
        %v2290 = vpop.xlane.xlu0 %2289
        %v2291 = vsel %vm2284, %v1901, -inf
        %2292 = vmax.xlane.f32.xlu0 %v2291
        %v2293 = vpop.xlane.xlu0 %2292
        %v2294 = vsel %vm2284, %v1977, -inf
        %2295 = vmax.xlane.f32.xlu0 %v2294
        %v2296 = vpop.xlane.xlu0 %2295
        %v2297 = vsel %vm2284, %v2053, -inf
        %2298 = vmax.xlane.f32.xlu0 %v2297
        %v2299 = vpop.xlane.xlu0 %2298
        %v2300 = vsel %vm2284, %v2129, -inf
        %2301 = vmax.xlane.f32.xlu0 %v2300
        %v2302 = vpop.xlane.xlu0 %2301
        %v2303 = vsel %vm2284, %v2205, -inf
        %2304 = vmax.xlane.f32.xlu0 %v2303
        %v2305 = vpop.xlane.xlu0 %2304
        %v2306 = vsel %vm2284, %v2281, -inf
        %2307 = vmax.xlane.f32.xlu0 %v2306
        %v2308 = vpop.xlane.xlu0 %2307
        %v2309 = vsub.f32 %v1749, %v2287
        %v2310 = vsub.f32 %v1825, %v2290
        %v2311 = vsub.f32 %v1901, %v2293
        %v2312 = vsub.f32 %v1977, %v2296
        %v2313 = vsub.f32 %v2053, %v2299
        %v2314 = vsub.f32 %v2129, %v2302
        %v2315 = vsub.f32 %v2205, %v2305
        %v2316 = vsub.f32 %v2281, %v2308
        %v2317 = vmul.f32 %v2309, 1.442695
        %v2318 = vpow.pop %v2317
        %v2319 = vmul.f32 %v2310, 1.442695
        %v2320 = vpow.pop %v2319
        %v2321 = vmul.f32 %v2311, 1.442695
        %v2322 = vpow.pop %v2321
        %v2323 = vmul.f32 %v2312, 1.442695
        %v2324 = vpow.pop %v2323
        %v2325 = vmul.f32 %v2313, 1.442695
        %v2326 = vpow.pop %v2325
        %v2327 = vmul.f32 %v2314, 1.442695
        %v2328 = vpow.pop %v2327
        %v2329 = vmul.f32 %v2315, 1.442695
        %v2330 = vpow.pop %v2329
        %v2331 = vmul.f32 %v2316, 1.442695
        %v2332 = vpow.pop %v2331
        %v2333 = vsel %vm2284, %v2318, 0.0
        %2334 = vadd.xlane.f32.xlu0 %v2333
        %v2335 = vpop.xlane.xlu0 %2334
        %v2336 = vsel %vm2284, %v2320, 0.0
        %2337 = vadd.xlane.f32.xlu0 %v2336
        %v2338 = vpop.xlane.xlu0 %2337
        %v2339 = vsel %vm2284, %v2322, 0.0
        %2340 = vadd.xlane.f32.xlu0 %v2339
        %v2341 = vpop.xlane.xlu0 %2340
        %v2342 = vsel %vm2284, %v2324, 0.0
        %2343 = vadd.xlane.f32.xlu0 %v2342
        %v2344 = vpop.xlane.xlu0 %2343
        %v2345 = vsel %vm2284, %v2326, 0.0
        %2346 = vadd.xlane.f32.xlu0 %v2345
        %v2347 = vpop.xlane.xlu0 %2346
        %v2348 = vsel %vm2284, %v2328, 0.0
        %2349 = vadd.xlane.f32.xlu0 %v2348
        %v2350 = vpop.xlane.xlu0 %2349
        %v2351 = vsel %vm2284, %v2330, 0.0
        %2352 = vadd.xlane.f32.xlu0 %v2351
        %v2353 = vpop.xlane.xlu0 %2352
        %v2354 = vsel %vm2284, %v2332, 0.0
        %2355 = vadd.xlane.f32.xlu0 %v2354
        %v2356 = vpop.xlane.xlu0 %2355
        %v2357 = vrcp.pop %v2335
        %v2358 = vmul.f32 %v2318, %v2357
        %v2359 = vrcp.pop %v2338
        %v2360 = vmul.f32 %v2320, %v2359
        %v2361 = vrcp.pop %v2341
        %v2362 = vmul.f32 %v2322, %v2361
        %v2363 = vrcp.pop %v2344
        %v2364 = vmul.f32 %v2324, %v2363
        %v2365 = vrcp.pop %v2347
        %v2366 = vmul.f32 %v2326, %v2365
        %v2367 = vrcp.pop %v2350
        %v2368 = vmul.f32 %v2328, %v2367
        %v2369 = vrcp.pop %v2353
        %v2370 = vmul.f32 %v2330, %v2369
        %v2371 = vrcp.pop %v2356
        %v2372 = vmul.f32 %v2332, %v2371
        %v2373 = vld [vmem:[#allocation3] sm:$0xff]
        %v2374 = vld [vmem:[#allocation3 + $0x8] sm:$0xff]
        %v2375 = vld [vmem:[#allocation3 + $0x10] sm:$0xff]
        %v2376 = vld [vmem:[#allocation3 + $0x18] sm:$0xff]
        %v2377 = vld [vmem:[#allocation3 + $0x20] sm:$0xff]
        %v2378 = vld [vmem:[#allocation3 + $0x28] sm:$0xff]
        %v2379 = vld [vmem:[#allocation3 + $0x30] sm:$0xff]
        %v2380 = vld [vmem:[#allocation3 + $0x38] sm:$0xff]
        %v2382 = vsel %vm2284, %v2358, 0
        %2384 = vmatprep.subr.mxu0 0.0
        %2385 = vmatpush1.msra.mxu0 0.0
        %2386 = vmatprep.subr.mxu0 0.0
        %2387 = vmatpush1.msra.mxu0 0.0
        %2388 = vmatprep.subr.mxu0 0.0
        %2389 = vmatpush1.msra.mxu0 0.0
        %2390 = vmatprep.subr.mxu0 0.0
        %2391 = vmatpush1.msra.mxu0 0.0
        %2392 = vmatprep.subr.mxu0 0.0
        %2393 = vmatpush1.msra.mxu0 0.0
        %2394 = vmatprep.subr.mxu0 0.0
        %2395 = vmatpush1.msra.mxu0 0.0
        %2396 = vmatprep.subr.mxu0 0.0
        %2397 = vmatpush1.msra.mxu0 0.0
        %2398 = vmatprep.subr.mxu0 0.0
        %2399 = vmatpush1.msra.mxu0 0.0
        %2400 = vmatprep.subr.mxu0 0.0
        %2401 = vmatpush1.msra.mxu0 0.0
        %2402 = vmatprep.subr.mxu0 0.0
        %2403 = vmatpush1.msra.mxu0 0.0
        %2404 = vmatprep.subr.mxu0 0.0
        %2405 = vmatpush1.msra.mxu0 0.0
        %2406 = vmatprep.subr.mxu0 0.0
        %2407 = vmatpush1.msra.mxu0 0.0
        %2408 = vmatprep.subr.mxu0 0.0
        %2409 = vmatpush1.msra.mxu0 0.0
        %2410 = vmatprep.subr.mxu0 0.0
        %2411 = vmatpush1.msra.mxu0 0.0
        %2412 = vmatprep.subr.mxu0 0.0
        %2413 = vmatpush1.msra.mxu0 0.0
        %2414 = vmatprep.subr.mxu0 0.0
        %2415 = vmatpush1.msra.mxu0 %v2373
        %2416 = vmatprep.subr.mxu0 0.0
        %2417 = vmatpush2.msra.mxu0 0.0
        %2418 = vmatprep.subr.mxu0 0.0
        %2419 = vmatpush2.msra.mxu0 0.0
        %2420 = vmatprep.subr.mxu0 0.0
        %2421 = vmatpush2.msra.mxu0 0.0
        %2422 = vmatprep.subr.mxu0 0.0
        %2423 = vmatpush2.msra.mxu0 0.0
        %2424 = vmatprep.subr.mxu0 0.0
        %2425 = vmatpush2.msra.mxu0 0.0
        %2426 = vmatprep.subr.mxu0 0.0
        %2427 = vmatpush2.msra.mxu0 0.0
        %2428 = vmatprep.subr.mxu0 0.0
        %2429 = vmatpush2.msra.mxu0 0.0
        %2430 = vmatprep.subr.mxu0 0.0
        %2431 = vmatpush2.msra.mxu0 0.0
        %2432 = vmatprep.subr.mxu0 0.0
        %2433 = vmatpush2.msra.mxu0 0.0
        %2434 = vmatprep.subr.mxu0 0.0
        %2435 = vmatpush2.msra.mxu0 0.0
        %2436 = vmatprep.subr.mxu0 0.0
        %2437 = vmatpush2.msra.mxu0 0.0
        %2438 = vmatprep.subr.mxu0 0.0
        %2439 = vmatpush2.msra.mxu0 0.0
        %2440 = vmatprep.subr.mxu0 0.0
        %2441 = vmatpush2.msra.mxu0 0.0
        %2442 = vmatprep.subr.mxu0 0.0
        %2443 = vmatpush2.msra.mxu0 0.0
        %2444 = vmatprep.subr.mxu0 0.0
        %2445 = vmatpush2.msra.mxu0 0.0
        %2446 = vmatprep.subr.mxu0 0.0
        %2447 = vmatpush2.msra.mxu0 0.0
        %2448 = vmatprep.mubr.f32.mxu0 0.0
        %2449 = vmatmul.mubr.f32.gmra.mxu0 %v2382
        %v2450 = vpop.f32.mrf.mxu0
        %v2451 = vadd.f32 0.0, %v2450
        %v2452 = vpop.f32.mrf.mxu0
        %2453 = vdwg.mxu0
        %v2455 = vsel %vm2284, %v2360, 0
        %2457 = vmatprep.subr.mxu0 0.0
        %2458 = vmatpush1.msra.mxu0 0.0
        %2459 = vmatprep.subr.mxu0 0.0
        %2460 = vmatpush1.msra.mxu0 0.0
        %2461 = vmatprep.subr.mxu0 0.0
        %2462 = vmatpush1.msra.mxu0 0.0
        %2463 = vmatprep.subr.mxu0 0.0
        %2464 = vmatpush1.msra.mxu0 0.0
        %2465 = vmatprep.subr.mxu0 0.0
        %2466 = vmatpush1.msra.mxu0 0.0
        %2467 = vmatprep.subr.mxu0 0.0
        %2468 = vmatpush1.msra.mxu0 0.0
        %2469 = vmatprep.subr.mxu0 0.0
        %2470 = vmatpush1.msra.mxu0 0.0
        %2471 = vmatprep.subr.mxu0 0.0
        %2472 = vmatpush1.msra.mxu0 0.0
        %2473 = vmatprep.subr.mxu0 0.0
        %2474 = vmatpush1.msra.mxu0 0.0
        %2475 = vmatprep.subr.mxu0 0.0
        %2476 = vmatpush1.msra.mxu0 0.0
        %2477 = vmatprep.subr.mxu0 0.0
        %2478 = vmatpush1.msra.mxu0 0.0
        %2479 = vmatprep.subr.mxu0 0.0
        %2480 = vmatpush1.msra.mxu0 0.0
        %2481 = vmatprep.subr.mxu0 0.0
        %2482 = vmatpush1.msra.mxu0 0.0
        %2483 = vmatprep.subr.mxu0 0.0
        %2484 = vmatpush1.msra.mxu0 0.0
        %2485 = vmatprep.subr.mxu0 0.0
        %2486 = vmatpush1.msra.mxu0 0.0
        %2487 = vmatprep.subr.mxu0 0.0
        %2488 = vmatpush1.msra.mxu0 %v2374
        %2489 = vmatprep.subr.mxu0 0.0
        %2490 = vmatpush2.msra.mxu0 0.0
        %2491 = vmatprep.subr.mxu0 0.0
        %2492 = vmatpush2.msra.mxu0 0.0
        %2493 = vmatprep.subr.mxu0 0.0
        %2494 = vmatpush2.msra.mxu0 0.0
        %2495 = vmatprep.subr.mxu0 0.0
        %2496 = vmatpush2.msra.mxu0 0.0
        %2497 = vmatprep.subr.mxu0 0.0
        %2498 = vmatpush2.msra.mxu0 0.0
        %2499 = vmatprep.subr.mxu0 0.0
        %2500 = vmatpush2.msra.mxu0 0.0
        %2501 = vmatprep.subr.mxu0 0.0
        %2502 = vmatpush2.msra.mxu0 0.0
        %2503 = vmatprep.subr.mxu0 0.0
        %2504 = vmatpush2.msra.mxu0 0.0
        %2505 = vmatprep.subr.mxu0 0.0
        %2506 = vmatpush2.msra.mxu0 0.0
        %2507 = vmatprep.subr.mxu0 0.0
        %2508 = vmatpush2.msra.mxu0 0.0
        %2509 = vmatprep.subr.mxu0 0.0
        %2510 = vmatpush2.msra.mxu0 0.0
        %2511 = vmatprep.subr.mxu0 0.0
        %2512 = vmatpush2.msra.mxu0 0.0
        %2513 = vmatprep.subr.mxu0 0.0
        %2514 = vmatpush2.msra.mxu0 0.0
        %2515 = vmatprep.subr.mxu0 0.0
        %2516 = vmatpush2.msra.mxu0 0.0
        %2517 = vmatprep.subr.mxu0 0.0
        %2518 = vmatpush2.msra.mxu0 0.0
        %2519 = vmatprep.subr.mxu0 0.0
        %2520 = vmatpush2.msra.mxu0 0.0
        %2521 = vmatprep.mubr.f32.mxu0 0.0
        %2522 = vmatmul.mubr.f32.gmra.mxu0 %v2455
        %v2523 = vpop.f32.mrf.mxu0
        %v2524 = vadd.f32 0.0, %v2523
        %v2525 = vpop.f32.mrf.mxu0
        %2526 = vdwg.mxu0
        %v2528 = vsel %vm2284, %v2362, 0
        %2530 = vmatprep.subr.mxu0 0.0
        %2531 = vmatpush1.msra.mxu0 0.0
        %2532 = vmatprep.subr.mxu0 0.0
        %2533 = vmatpush1.msra.mxu0 0.0
        %2534 = vmatprep.subr.mxu0 0.0
        %2535 = vmatpush1.msra.mxu0 0.0
        %2536 = vmatprep.subr.mxu0 0.0
        %2537 = vmatpush1.msra.mxu0 0.0
        %2538 = vmatprep.subr.mxu0 0.0
        %2539 = vmatpush1.msra.mxu0 0.0
        %2540 = vmatprep.subr.mxu0 0.0
        %2541 = vmatpush1.msra.mxu0 0.0
        %2542 = vmatprep.subr.mxu0 0.0
        %2543 = vmatpush1.msra.mxu0 0.0
        %2544 = vmatprep.subr.mxu0 0.0
        %2545 = vmatpush1.msra.mxu0 0.0
        %2546 = vmatprep.subr.mxu0 0.0
        %2547 = vmatpush1.msra.mxu0 0.0
        %2548 = vmatprep.subr.mxu0 0.0
        %2549 = vmatpush1.msra.mxu0 0.0
        %2550 = vmatprep.subr.mxu0 0.0
        %2551 = vmatpush1.msra.mxu0 0.0
        %2552 = vmatprep.subr.mxu0 0.0
        %2553 = vmatpush1.msra.mxu0 0.0
        %2554 = vmatprep.subr.mxu0 0.0
        %2555 = vmatpush1.msra.mxu0 0.0
        %2556 = vmatprep.subr.mxu0 0.0
        %2557 = vmatpush1.msra.mxu0 0.0
        %2558 = vmatprep.subr.mxu0 0.0
        %2559 = vmatpush1.msra.mxu0 0.0
        %2560 = vmatprep.subr.mxu0 0.0
        %2561 = vmatpush1.msra.mxu0 %v2375
        %2562 = vmatprep.subr.mxu0 0.0
        %2563 = vmatpush2.msra.mxu0 0.0
        %2564 = vmatprep.subr.mxu0 0.0
        %2565 = vmatpush2.msra.mxu0 0.0
        %2566 = vmatprep.subr.mxu0 0.0
        %2567 = vmatpush2.msra.mxu0 0.0
        %2568 = vmatprep.subr.mxu0 0.0
        %2569 = vmatpush2.msra.mxu0 0.0
        %2570 = vmatprep.subr.mxu0 0.0
        %2571 = vmatpush2.msra.mxu0 0.0
        %2572 = vmatprep.subr.mxu0 0.0
        %2573 = vmatpush2.msra.mxu0 0.0
        %2574 = vmatprep.subr.mxu0 0.0
        %2575 = vmatpush2.msra.mxu0 0.0
        %2576 = vmatprep.subr.mxu0 0.0
        %2577 = vmatpush2.msra.mxu0 0.0
        %2578 = vmatprep.subr.mxu0 0.0
        %2579 = vmatpush2.msra.mxu0 0.0
        %2580 = vmatprep.subr.mxu0 0.0
        %2581 = vmatpush2.msra.mxu0 0.0
        %2582 = vmatprep.subr.mxu0 0.0
        %2583 = vmatpush2.msra.mxu0 0.0
        %2584 = vmatprep.subr.mxu0 0.0
        %2585 = vmatpush2.msra.mxu0 0.0
        %2586 = vmatprep.subr.mxu0 0.0
        %2587 = vmatpush2.msra.mxu0 0.0
        %2588 = vmatprep.subr.mxu0 0.0
        %2589 = vmatpush2.msra.mxu0 0.0
        %2590 = vmatprep.subr.mxu0 0.0
        %2591 = vmatpush2.msra.mxu0 0.0
        %2592 = vmatprep.subr.mxu0 0.0
        %2593 = vmatpush2.msra.mxu0 0.0
        %2594 = vmatprep.mubr.f32.mxu0 0.0
        %2595 = vmatmul.mubr.f32.gmra.mxu0 %v2528
        %v2596 = vpop.f32.mrf.mxu0
        %v2597 = vadd.f32 0.0, %v2596
        %v2598 = vpop.f32.mrf.mxu0
        %2599 = vdwg.mxu0
        %v2601 = vsel %vm2284, %v2364, 0
        %2603 = vmatprep.subr.mxu0 0.0
        %2604 = vmatpush1.msra.mxu0 0.0
        %2605 = vmatprep.subr.mxu0 0.0
        %2606 = vmatpush1.msra.mxu0 0.0
        %2607 = vmatprep.subr.mxu0 0.0
        %2608 = vmatpush1.msra.mxu0 0.0
        %2609 = vmatprep.subr.mxu0 0.0
        %2610 = vmatpush1.msra.mxu0 0.0
        %2611 = vmatprep.subr.mxu0 0.0
        %2612 = vmatpush1.msra.mxu0 0.0
        %2613 = vmatprep.subr.mxu0 0.0
        %2614 = vmatpush1.msra.mxu0 0.0
        %2615 = vmatprep.subr.mxu0 0.0
        %2616 = vmatpush1.msra.mxu0 0.0
        %2617 = vmatprep.subr.mxu0 0.0
        %2618 = vmatpush1.msra.mxu0 0.0
        %2619 = vmatprep.subr.mxu0 0.0
        %2620 = vmatpush1.msra.mxu0 0.0
        %2621 = vmatprep.subr.mxu0 0.0
        %2622 = vmatpush1.msra.mxu0 0.0
        %2623 = vmatprep.subr.mxu0 0.0
        %2624 = vmatpush1.msra.mxu0 0.0
        %2625 = vmatprep.subr.mxu0 0.0
        %2626 = vmatpush1.msra.mxu0 0.0
        %2627 = vmatprep.subr.mxu0 0.0
        %2628 = vmatpush1.msra.mxu0 0.0
        %2629 = vmatprep.subr.mxu0 0.0
        %2630 = vmatpush1.msra.mxu0 0.0
        %2631 = vmatprep.subr.mxu0 0.0
        %2632 = vmatpush1.msra.mxu0 0.0
        %2633 = vmatprep.subr.mxu0 0.0
        %2634 = vmatpush1.msra.mxu0 %v2376
        %2635 = vmatprep.subr.mxu0 0.0
        %2636 = vmatpush2.msra.mxu0 0.0
        %2637 = vmatprep.subr.mxu0 0.0
        %2638 = vmatpush2.msra.mxu0 0.0
        %2639 = vmatprep.subr.mxu0 0.0
        %2640 = vmatpush2.msra.mxu0 0.0
        %2641 = vmatprep.subr.mxu0 0.0
        %2642 = vmatpush2.msra.mxu0 0.0
        %2643 = vmatprep.subr.mxu0 0.0
        %2644 = vmatpush2.msra.mxu0 0.0
        %2645 = vmatprep.subr.mxu0 0.0
        %2646 = vmatpush2.msra.mxu0 0.0
        %2647 = vmatprep.subr.mxu0 0.0
        %2648 = vmatpush2.msra.mxu0 0.0
        %2649 = vmatprep.subr.mxu0 0.0
        %2650 = vmatpush2.msra.mxu0 0.0
        %2651 = vmatprep.subr.mxu0 0.0
        %2652 = vmatpush2.msra.mxu0 0.0
        %2653 = vmatprep.subr.mxu0 0.0
        %2654 = vmatpush2.msra.mxu0 0.0
        %2655 = vmatprep.subr.mxu0 0.0
        %2656 = vmatpush2.msra.mxu0 0.0
        %2657 = vmatprep.subr.mxu0 0.0
        %2658 = vmatpush2.msra.mxu0 0.0
        %2659 = vmatprep.subr.mxu0 0.0
        %2660 = vmatpush2.msra.mxu0 0.0
        %2661 = vmatprep.subr.mxu0 0.0
        %2662 = vmatpush2.msra.mxu0 0.0
        %2663 = vmatprep.subr.mxu0 0.0
        %2664 = vmatpush2.msra.mxu0 0.0
        %2665 = vmatprep.subr.mxu0 0.0
        %2666 = vmatpush2.msra.mxu0 0.0
        %2667 = vmatprep.mubr.f32.mxu0 0.0
        %2668 = vmatmul.mubr.f32.gmra.mxu0 %v2601
        %v2669 = vpop.f32.mrf.mxu0
        %v2670 = vadd.f32 0.0, %v2669
        %v2671 = vpop.f32.mrf.mxu0
        %2672 = vdwg.mxu0
        %v2674 = vsel %vm2284, %v2366, 0
        %2676 = vmatprep.subr.mxu0 0.0
        %2677 = vmatpush1.msra.mxu0 0.0
        %2678 = vmatprep.subr.mxu0 0.0
        %2679 = vmatpush1.msra.mxu0 0.0
        %2680 = vmatprep.subr.mxu0 0.0
        %2681 = vmatpush1.msra.mxu0 0.0
        %2682 = vmatprep.subr.mxu0 0.0
        %2683 = vmatpush1.msra.mxu0 0.0
        %2684 = vmatprep.subr.mxu0 0.0
        %2685 = vmatpush1.msra.mxu0 0.0
        %2686 = vmatprep.subr.mxu0 0.0
        %2687 = vmatpush1.msra.mxu0 0.0
        %2688 = vmatprep.subr.mxu0 0.0
        %2689 = vmatpush1.msra.mxu0 0.0
        %2690 = vmatprep.subr.mxu0 0.0
        %2691 = vmatpush1.msra.mxu0 0.0
        %2692 = vmatprep.subr.mxu0 0.0
        %2693 = vmatpush1.msra.mxu0 0.0
        %2694 = vmatprep.subr.mxu0 0.0
        %2695 = vmatpush1.msra.mxu0 0.0
        %2696 = vmatprep.subr.mxu0 0.0
        %2697 = vmatpush1.msra.mxu0 0.0
        %2698 = vmatprep.subr.mxu0 0.0
        %2699 = vmatpush1.msra.mxu0 0.0
        %2700 = vmatprep.subr.mxu0 0.0
        %2701 = vmatpush1.msra.mxu0 0.0
        %2702 = vmatprep.subr.mxu0 0.0
        %2703 = vmatpush1.msra.mxu0 0.0
        %2704 = vmatprep.subr.mxu0 0.0
        %2705 = vmatpush1.msra.mxu0 0.0
        %2706 = vmatprep.subr.mxu0 0.0
        %2707 = vmatpush1.msra.mxu0 %v2377
        %2708 = vmatprep.subr.mxu0 0.0
        %2709 = vmatpush2.msra.mxu0 0.0
        %2710 = vmatprep.subr.mxu0 0.0
        %2711 = vmatpush2.msra.mxu0 0.0
        %2712 = vmatprep.subr.mxu0 0.0
        %2713 = vmatpush2.msra.mxu0 0.0
        %2714 = vmatprep.subr.mxu0 0.0
        %2715 = vmatpush2.msra.mxu0 0.0
        %2716 = vmatprep.subr.mxu0 0.0
        %2717 = vmatpush2.msra.mxu0 0.0
        %2718 = vmatprep.subr.mxu0 0.0
        %2719 = vmatpush2.msra.mxu0 0.0
        %2720 = vmatprep.subr.mxu0 0.0
        %2721 = vmatpush2.msra.mxu0 0.0
        %2722 = vmatprep.subr.mxu0 0.0
        %2723 = vmatpush2.msra.mxu0 0.0
        %2724 = vmatprep.subr.mxu0 0.0
        %2725 = vmatpush2.msra.mxu0 0.0
        %2726 = vmatprep.subr.mxu0 0.0
        %2727 = vmatpush2.msra.mxu0 0.0
        %2728 = vmatprep.subr.mxu0 0.0
        %2729 = vmatpush2.msra.mxu0 0.0
        %2730 = vmatprep.subr.mxu0 0.0
        %2731 = vmatpush2.msra.mxu0 0.0
        %2732 = vmatprep.subr.mxu0 0.0
        %2733 = vmatpush2.msra.mxu0 0.0
        %2734 = vmatprep.subr.mxu0 0.0
        %2735 = vmatpush2.msra.mxu0 0.0
        %2736 = vmatprep.subr.mxu0 0.0
        %2737 = vmatpush2.msra.mxu0 0.0
        %2738 = vmatprep.subr.mxu0 0.0
        %2739 = vmatpush2.msra.mxu0 0.0
        %2740 = vmatprep.mubr.f32.mxu0 0.0
        %2741 = vmatmul.mubr.f32.gmra.mxu0 %v2674
        %v2742 = vpop.f32.mrf.mxu0
        %v2743 = vadd.f32 0.0, %v2742
        %v2744 = vpop.f32.mrf.mxu0
        %2745 = vdwg.mxu0
        %v2747 = vsel %vm2284, %v2368, 0
        %2749 = vmatprep.subr.mxu0 0.0
        %2750 = vmatpush1.msra.mxu0 0.0
        %2751 = vmatprep.subr.mxu0 0.0
        %2752 = vmatpush1.msra.mxu0 0.0
        %2753 = vmatprep.subr.mxu0 0.0
        %2754 = vmatpush1.msra.mxu0 0.0
        %2755 = vmatprep.subr.mxu0 0.0
        %2756 = vmatpush1.msra.mxu0 0.0
        %2757 = vmatprep.subr.mxu0 0.0
        %2758 = vmatpush1.msra.mxu0 0.0
        %2759 = vmatprep.subr.mxu0 0.0
        %2760 = vmatpush1.msra.mxu0 0.0
        %2761 = vmatprep.subr.mxu0 0.0
        %2762 = vmatpush1.msra.mxu0 0.0
        %2763 = vmatprep.subr.mxu0 0.0
        %2764 = vmatpush1.msra.mxu0 0.0
        %2765 = vmatprep.subr.mxu0 0.0
        %2766 = vmatpush1.msra.mxu0 0.0
        %2767 = vmatprep.subr.mxu0 0.0
        %2768 = vmatpush1.msra.mxu0 0.0
        %2769 = vmatprep.subr.mxu0 0.0
        %2770 = vmatpush1.msra.mxu0 0.0
        %2771 = vmatprep.subr.mxu0 0.0
        %2772 = vmatpush1.msra.mxu0 0.0
        %2773 = vmatprep.subr.mxu0 0.0
        %2774 = vmatpush1.msra.mxu0 0.0
        %2775 = vmatprep.subr.mxu0 0.0
        %2776 = vmatpush1.msra.mxu0 0.0
        %2777 = vmatprep.subr.mxu0 0.0
        %2778 = vmatpush1.msra.mxu0 0.0
        %2779 = vmatprep.subr.mxu0 0.0
        %2780 = vmatpush1.msra.mxu0 %v2378
        %2781 = vmatprep.subr.mxu0 0.0
        %2782 = vmatpush2.msra.mxu0 0.0
        %2783 = vmatprep.subr.mxu0 0.0
        %2784 = vmatpush2.msra.mxu0 0.0
        %2785 = vmatprep.subr.mxu0 0.0
        %2786 = vmatpush2.msra.mxu0 0.0
        %2787 = vmatprep.subr.mxu0 0.0
        %2788 = vmatpush2.msra.mxu0 0.0
        %2789 = vmatprep.subr.mxu0 0.0
        %2790 = vmatpush2.msra.mxu0 0.0
        %2791 = vmatprep.subr.mxu0 0.0
        %2792 = vmatpush2.msra.mxu0 0.0
        %2793 = vmatprep.subr.mxu0 0.0
        %2794 = vmatpush2.msra.mxu0 0.0
        %2795 = vmatprep.subr.mxu0 0.0
        %2796 = vmatpush2.msra.mxu0 0.0
        %2797 = vmatprep.subr.mxu0 0.0
        %2798 = vmatpush2.msra.mxu0 0.0
        %2799 = vmatprep.subr.mxu0 0.0
        %2800 = vmatpush2.msra.mxu0 0.0
        %2801 = vmatprep.subr.mxu0 0.0
        %2802 = vmatpush2.msra.mxu0 0.0
        %2803 = vmatprep.subr.mxu0 0.0
        %2804 = vmatpush2.msra.mxu0 0.0
        %2805 = vmatprep.subr.mxu0 0.0
        %2806 = vmatpush2.msra.mxu0 0.0
        %2807 = vmatprep.subr.mxu0 0.0
        %2808 = vmatpush2.msra.mxu0 0.0
        %2809 = vmatprep.subr.mxu0 0.0
        %2810 = vmatpush2.msra.mxu0 0.0
        %2811 = vmatprep.subr.mxu0 0.0
        %2812 = vmatpush2.msra.mxu0 0.0
        %2813 = vmatprep.mubr.f32.mxu0 0.0
        %2814 = vmatmul.mubr.f32.gmra.mxu0 %v2747
        %v2815 = vpop.f32.mrf.mxu0
        %v2816 = vadd.f32 0.0, %v2815
        %v2817 = vpop.f32.mrf.mxu0
        %2818 = vdwg.mxu0
        %v2820 = vsel %vm2284, %v2370, 0
        %2822 = vmatprep.subr.mxu0 0.0
        %2823 = vmatpush1.msra.mxu0 0.0
        %2824 = vmatprep.subr.mxu0 0.0
        %2825 = vmatpush1.msra.mxu0 0.0
        %2826 = vmatprep.subr.mxu0 0.0
        %2827 = vmatpush1.msra.mxu0 0.0
        %2828 = vmatprep.subr.mxu0 0.0
        %2829 = vmatpush1.msra.mxu0 0.0
        %2830 = vmatprep.subr.mxu0 0.0
        %2831 = vmatpush1.msra.mxu0 0.0
        %2832 = vmatprep.subr.mxu0 0.0
        %2833 = vmatpush1.msra.mxu0 0.0
        %2834 = vmatprep.subr.mxu0 0.0
        %2835 = vmatpush1.msra.mxu0 0.0
        %2836 = vmatprep.subr.mxu0 0.0
        %2837 = vmatpush1.msra.mxu0 0.0
        %2838 = vmatprep.subr.mxu0 0.0
        %2839 = vmatpush1.msra.mxu0 0.0
        %2840 = vmatprep.subr.mxu0 0.0
        %2841 = vmatpush1.msra.mxu0 0.0
        %2842 = vmatprep.subr.mxu0 0.0
        %2843 = vmatpush1.msra.mxu0 0.0
        %2844 = vmatprep.subr.mxu0 0.0
        %2845 = vmatpush1.msra.mxu0 0.0
        %2846 = vmatprep.subr.mxu0 0.0
        %2847 = vmatpush1.msra.mxu0 0.0
        %2848 = vmatprep.subr.mxu0 0.0
        %2849 = vmatpush1.msra.mxu0 0.0
        %2850 = vmatprep.subr.mxu0 0.0
        %2851 = vmatpush1.msra.mxu0 0.0
        %2852 = vmatprep.subr.mxu0 0.0
        %2853 = vmatpush1.msra.mxu0 %v2379
        %2854 = vmatprep.subr.mxu0 0.0
        %2855 = vmatpush2.msra.mxu0 0.0
        %2856 = vmatprep.subr.mxu0 0.0
        %2857 = vmatpush2.msra.mxu0 0.0
        %2858 = vmatprep.subr.mxu0 0.0
        %2859 = vmatpush2.msra.mxu0 0.0
        %2860 = vmatprep.subr.mxu0 0.0
        %2861 = vmatpush2.msra.mxu0 0.0
        %2862 = vmatprep.subr.mxu0 0.0
        %2863 = vmatpush2.msra.mxu0 0.0
        %2864 = vmatprep.subr.mxu0 0.0
        %2865 = vmatpush2.msra.mxu0 0.0
        %2866 = vmatprep.subr.mxu0 0.0
        %2867 = vmatpush2.msra.mxu0 0.0
        %2868 = vmatprep.subr.mxu0 0.0
        %2869 = vmatpush2.msra.mxu0 0.0
        %2870 = vmatprep.subr.mxu0 0.0
        %2871 = vmatpush2.msra.mxu0 0.0
        %2872 = vmatprep.subr.mxu0 0.0
        %2873 = vmatpush2.msra.mxu0 0.0
        %2874 = vmatprep.subr.mxu0 0.0
        %2875 = vmatpush2.msra.mxu0 0.0
        %2876 = vmatprep.subr.mxu0 0.0
        %2877 = vmatpush2.msra.mxu0 0.0
        %2878 = vmatprep.subr.mxu0 0.0
        %2879 = vmatpush2.msra.mxu0 0.0
        %2880 = vmatprep.subr.mxu0 0.0
        %2881 = vmatpush2.msra.mxu0 0.0
        %2882 = vmatprep.subr.mxu0 0.0
        %2883 = vmatpush2.msra.mxu0 0.0
        %2884 = vmatprep.subr.mxu0 0.0
        %2885 = vmatpush2.msra.mxu0 0.0
        %2886 = vmatprep.mubr.f32.mxu0 0.0
        %2887 = vmatmul.mubr.f32.gmra.mxu0 %v2820
        %v2888 = vpop.f32.mrf.mxu0
        %v2889 = vadd.f32 0.0, %v2888
        %v2890 = vpop.f32.mrf.mxu0
        %2891 = vdwg.mxu0
        %v2893 = vsel %vm2284, %v2372, 0
        %2895 = vmatprep.subr.mxu0 0.0
        %2896 = vmatpush1.msra.mxu0 0.0
        %2897 = vmatprep.subr.mxu0 0.0
        %2898 = vmatpush1.msra.mxu0 0.0
        %2899 = vmatprep.subr.mxu0 0.0
        %2900 = vmatpush1.msra.mxu0 0.0
        %2901 = vmatprep.subr.mxu0 0.0
        %2902 = vmatpush1.msra.mxu0 0.0
        %2903 = vmatprep.subr.mxu0 0.0
        %2904 = vmatpush1.msra.mxu0 0.0
        %2905 = vmatprep.subr.mxu0 0.0
        %2906 = vmatpush1.msra.mxu0 0.0
        %2907 = vmatprep.subr.mxu0 0.0
        %2908 = vmatpush1.msra.mxu0 0.0
        %2909 = vmatprep.subr.mxu0 0.0
        %2910 = vmatpush1.msra.mxu0 0.0
        %2911 = vmatprep.subr.mxu0 0.0
        %2912 = vmatpush1.msra.mxu0 0.0
        %2913 = vmatprep.subr.mxu0 0.0
        %2914 = vmatpush1.msra.mxu0 0.0
        %2915 = vmatprep.subr.mxu0 0.0
        %2916 = vmatpush1.msra.mxu0 0.0
        %2917 = vmatprep.subr.mxu0 0.0
        %2918 = vmatpush1.msra.mxu0 0.0
        %2919 = vmatprep.subr.mxu0 0.0
        %2920 = vmatpush1.msra.mxu0 0.0
        %2921 = vmatprep.subr.mxu0 0.0
        %2922 = vmatpush1.msra.mxu0 0.0
        %2923 = vmatprep.subr.mxu0 0.0
        %2924 = vmatpush1.msra.mxu0 0.0
        %2925 = vmatprep.subr.mxu0 0.0
        %2926 = vmatpush1.msra.mxu0 %v2380
        %2927 = vmatprep.subr.mxu0 0.0
        %2928 = vmatpush2.msra.mxu0 0.0
        %2929 = vmatprep.subr.mxu0 0.0
        %2930 = vmatpush2.msra.mxu0 0.0
        %2931 = vmatprep.subr.mxu0 0.0
        %2932 = vmatpush2.msra.mxu0 0.0
        %2933 = vmatprep.subr.mxu0 0.0
        %2934 = vmatpush2.msra.mxu0 0.0
        %2935 = vmatprep.subr.mxu0 0.0
        %2936 = vmatpush2.msra.mxu0 0.0
        %2937 = vmatprep.subr.mxu0 0.0
        %2938 = vmatpush2.msra.mxu0 0.0
        %2939 = vmatprep.subr.mxu0 0.0
        %2940 = vmatpush2.msra.mxu0 0.0
        %2941 = vmatprep.subr.mxu0 0.0
        %2942 = vmatpush2.msra.mxu0 0.0
        %2943 = vmatprep.subr.mxu0 0.0
        %2944 = vmatpush2.msra.mxu0 0.0
        %2945 = vmatprep.subr.mxu0 0.0
        %2946 = vmatpush2.msra.mxu0 0.0
        %2947 = vmatprep.subr.mxu0 0.0
        %2948 = vmatpush2.msra.mxu0 0.0
        %2949 = vmatprep.subr.mxu0 0.0
        %2950 = vmatpush2.msra.mxu0 0.0
        %2951 = vmatprep.subr.mxu0 0.0
        %2952 = vmatpush2.msra.mxu0 0.0
        %2953 = vmatprep.subr.mxu0 0.0
        %2954 = vmatpush2.msra.mxu0 0.0
        %2955 = vmatprep.subr.mxu0 0.0
        %2956 = vmatpush2.msra.mxu0 0.0
        %2957 = vmatprep.subr.mxu0 0.0
        %2958 = vmatpush2.msra.mxu0 0.0
        %2959 = vmatprep.mubr.f32.mxu0 0.0
        %2960 = vmatmul.mubr.f32.gmra.mxu0 %v2893
        %v2961 = vpop.f32.mrf.mxu0
        %v2962 = vadd.f32 0.0, %v2961
        %v2963 = vpop.f32.mrf.mxu0
        %2964 = vdwg.mxu0
        %v2965 = vcombine.low %v2451, %v2597
        %v2966 = vcombine.high %v2451, %v2597
        %v2968 = vunpack.c.l.s4 1983009808
        %v2969 = vunpack.c.0.s8 %v2968
        %v2970 = vlaneseq
        %v2971 = vshrl.u32 %v2970, 7
        %v2972 = vsub.s32 %v2969, %v2971
        %v2973 = vrot.slane %v2965, %v2972
        %v2975 = vunpack.c.l.s4 1983009808
        %v2976 = vunpack.c.0.s8 %v2975
        %v2977 = vlaneseq
        %v2978 = vshrl.u32 %v2977, 7
        %v2979 = vsub.s32 %v2976, %v2978
        %v2980 = vrot.slane %v2966, %v2979
        %v2981 = vcombine.low %v2524, %v2670
        %v2982 = vcombine.high %v2524, %v2670
        %v2984 = vunpack.c.l.s4 1983009808
        %v2985 = vunpack.c.0.s8 %v2984
        %v2986 = vlaneseq
        %v2987 = vshrl.u32 %v2986, 7
        %v2988 = vsub.s32 %v2985, %v2987
        %v2989 = vrot.slane %v2981, %v2988
        %v2991 = vunpack.c.l.s4 1983009808
        %v2992 = vunpack.c.0.s8 %v2991
        %v2993 = vlaneseq
        %v2994 = vshrl.u32 %v2993, 7
        %v2995 = vsub.s32 %v2992, %v2994
        %v2996 = vrot.slane %v2982, %v2995
        %v2997 = vcombine.low %v2743, %v2889
        %v2998 = vcombine.high %v2743, %v2889
        %v3000 = vunpack.c.l.s4 1983009808
        %v3001 = vunpack.c.0.s8 %v3000
        %v3002 = vlaneseq
        %v3003 = vshrl.u32 %v3002, 7
        %v3004 = vsub.s32 %v3001, %v3003
        %v3005 = vrot.slane %v2997, %v3004
        %v3007 = vunpack.c.l.s4 1983009808
        %v3008 = vunpack.c.0.s8 %v3007
        %v3009 = vlaneseq
        %v3010 = vshrl.u32 %v3009, 7
        %v3011 = vsub.s32 %v3008, %v3010
        %v3012 = vrot.slane %v2998, %v3011
        %v3013 = vcombine.low %v2816, %v2962
        %v3014 = vcombine.high %v2816, %v2962
        %v3016 = vunpack.c.l.s4 1983009808
        %v3017 = vunpack.c.0.s8 %v3016
        %v3018 = vlaneseq
        %v3019 = vshrl.u32 %v3018, 7
        %v3020 = vsub.s32 %v3017, %v3019
        %v3021 = vrot.slane %v3013, %v3020
        %v3023 = vunpack.c.l.s4 1983009808
        %v3024 = vunpack.c.0.s8 %v3023
        %v3025 = vlaneseq
        %v3026 = vshrl.u32 %v3025, 7
        %v3027 = vsub.s32 %v3024, %v3026
        %v3028 = vrot.slane %v3014, %v3027
        %v3029 = vcombine.low %v2973, %v2989
        %v3030 = vcombine.high %v2973, %v2989
        %v3032 = vunpack.c.l.s4 1934713408
        %v3033 = vunpack.c.0.s8 %v3032
        %v3034 = vlaneseq
        %v3035 = vshrl.u32 %v3034, 7
        %v3036 = vsub.s32 %v3033, %v3035
        %v3037 = vrot.slane %v3029, %v3036
        %v3039 = vunpack.c.l.s4 1934713408
        %v3040 = vunpack.c.0.s8 %v3039
        %v3041 = vlaneseq
        %v3042 = vshrl.u32 %v3041, 7
        %v3043 = vsub.s32 %v3040, %v3042
        %v3044 = vrot.slane %v3030, %v3043
        %v3045 = vcombine.low %v2980, %v2996
        %v3046 = vcombine.high %v2980, %v2996
        %v3048 = vunpack.c.l.s4 1934713408
        %v3049 = vunpack.c.0.s8 %v3048
        %v3050 = vlaneseq
        %v3051 = vshrl.u32 %v3050, 7
        %v3052 = vsub.s32 %v3049, %v3051
        %v3053 = vrot.slane %v3045, %v3052
        %v3055 = vunpack.c.l.s4 1934713408
        %v3056 = vunpack.c.0.s8 %v3055
        %v3057 = vlaneseq
        %v3058 = vshrl.u32 %v3057, 7
        %v3059 = vsub.s32 %v3056, %v3058
        %v3060 = vrot.slane %v3046, %v3059
        %v3061 = vcombine.low %v3005, %v3021
        %v3062 = vcombine.high %v3005, %v3021
        %v3064 = vunpack.c.l.s4 1934713408
        %v3065 = vunpack.c.0.s8 %v3064
        %v3066 = vlaneseq
        %v3067 = vshrl.u32 %v3066, 7
        %v3068 = vsub.s32 %v3065, %v3067
        %v3069 = vrot.slane %v3061, %v3068
        %v3071 = vunpack.c.l.s4 1934713408
        %v3072 = vunpack.c.0.s8 %v3071
        %v3073 = vlaneseq
        %v3074 = vshrl.u32 %v3073, 7
        %v3075 = vsub.s32 %v3072, %v3074
        %v3076 = vrot.slane %v3062, %v3075
        %v3077 = vcombine.low %v3012, %v3028
        %v3078 = vcombine.high %v3012, %v3028
        %v3080 = vunpack.c.l.s4 1934713408
        %v3081 = vunpack.c.0.s8 %v3080
        %v3082 = vlaneseq
        %v3083 = vshrl.u32 %v3082, 7
        %v3084 = vsub.s32 %v3081, %v3083
        %v3085 = vrot.slane %v3077, %v3084
        %v3087 = vunpack.c.l.s4 1934713408
        %v3088 = vunpack.c.0.s8 %v3087
        %v3089 = vlaneseq
        %v3090 = vshrl.u32 %v3089, 7
        %v3091 = vsub.s32 %v3088, %v3090
        %v3092 = vrot.slane %v3078, %v3091
        %v3093 = vcombine.low %v3037, %v3069
        %v3094 = vcombine.high %v3037, %v3069
        %v3095 = vcombine.low %v3044, %v3076
        %v3096 = vcombine.high %v3044, %v3076
        %v3097 = vcombine.low %v3053, %v3085
        %v3098 = vcombine.high %v3053, %v3085
        %v3099 = vcombine.low %v3060, %v3092
        %v3100 = vcombine.high %v3060, %v3092
        %v3101 = vcombine.low %v3093, %v3095
        %v3102 = vcombine.high %v3093, %v3095
        %v3104 = vunpack.c.l.s4 1983009808
        %v3105 = vunpack.c.0.s8 %v3104
        %v3106 = vlaneseq
        %v3107 = vshrl.u32 %v3106, 7
        %v3108 = vsub.s32 %v3105, %v3107
        %v3109 = vrot.slane %v3101, %v3108
        %v3111 = vunpack.c.l.s4 1983009808
        %v3112 = vunpack.c.0.s8 %v3111
        %v3113 = vlaneseq
        %v3114 = vshrl.u32 %v3113, 7
        %v3115 = vsub.s32 %v3112, %v3114
        %v3116 = vrot.slane %v3102, %v3115
        %v3117 = vcombine.low %v3094, %v3096
        %v3118 = vcombine.high %v3094, %v3096
        %v3120 = vunpack.c.l.s4 1983009808
        %v3121 = vunpack.c.0.s8 %v3120
        %v3122 = vlaneseq
        %v3123 = vshrl.u32 %v3122, 7
        %v3124 = vsub.s32 %v3121, %v3123
        %v3125 = vrot.slane %v3117, %v3124
        %v3127 = vunpack.c.l.s4 1983009808
        %v3128 = vunpack.c.0.s8 %v3127
        %v3129 = vlaneseq
        %v3130 = vshrl.u32 %v3129, 7
        %v3131 = vsub.s32 %v3128, %v3130
        %v3132 = vrot.slane %v3118, %v3131
        %v3133 = vcombine.low %v3097, %v3099
        %v3134 = vcombine.high %v3097, %v3099
        %v3136 = vunpack.c.l.s4 1983009808
        %v3137 = vunpack.c.0.s8 %v3136
        %v3138 = vlaneseq
        %v3139 = vshrl.u32 %v3138, 7
        %v3140 = vsub.s32 %v3137, %v3139
        %v3141 = vrot.slane %v3133, %v3140
        %v3143 = vunpack.c.l.s4 1983009808
        %v3144 = vunpack.c.0.s8 %v3143
        %v3145 = vlaneseq
        %v3146 = vshrl.u32 %v3145, 7
        %v3147 = vsub.s32 %v3144, %v3146
        %v3148 = vrot.slane %v3134, %v3147
        %v3149 = vcombine.low %v3098, %v3100
        %v3150 = vcombine.high %v3098, %v3100
        %v3152 = vunpack.c.l.s4 1983009808
        %v3153 = vunpack.c.0.s8 %v3152
        %v3154 = vlaneseq
        %v3155 = vshrl.u32 %v3154, 7
        %v3156 = vsub.s32 %v3153, %v3155
        %v3157 = vrot.slane %v3149, %v3156
        %v3159 = vunpack.c.l.s4 1983009808
        %v3160 = vunpack.c.0.s8 %v3159
        %v3161 = vlaneseq
        %v3162 = vshrl.u32 %v3161, 7
        %v3163 = vsub.s32 %v3160, %v3162
        %v3164 = vrot.slane %v3150, %v3163
        %v3165 = vcombine.low %v3109, %v3125
        %v3166 = vcombine.high %v3109, %v3125
        %v3168 = vunpack.c.l.s4 1934713408
        %v3169 = vunpack.c.0.s8 %v3168
        %v3170 = vlaneseq
        %v3171 = vshrl.u32 %v3170, 7
        %v3172 = vsub.s32 %v3169, %v3171
        %v3173 = vrot.slane %v3165, %v3172
        %v3175 = vunpack.c.l.s4 1934713408
        %v3176 = vunpack.c.0.s8 %v3175
        %v3177 = vlaneseq
        %v3178 = vshrl.u32 %v3177, 7
        %v3179 = vsub.s32 %v3176, %v3178
        %v3180 = vrot.slane %v3166, %v3179
        %v3181 = vcombine.low %v3116, %v3132
        %v3182 = vcombine.high %v3116, %v3132
        %v3184 = vunpack.c.l.s4 1934713408
        %v3185 = vunpack.c.0.s8 %v3184
        %v3186 = vlaneseq
        %v3187 = vshrl.u32 %v3186, 7
        %v3188 = vsub.s32 %v3185, %v3187
        %v3189 = vrot.slane %v3181, %v3188
        %v3191 = vunpack.c.l.s4 1934713408
        %v3192 = vunpack.c.0.s8 %v3191
        %v3193 = vlaneseq
        %v3194 = vshrl.u32 %v3193, 7
        %v3195 = vsub.s32 %v3192, %v3194
        %v3196 = vrot.slane %v3182, %v3195
        %v3197 = vcombine.low %v3141, %v3157
        %v3198 = vcombine.high %v3141, %v3157
        %v3200 = vunpack.c.l.s4 1934713408
        %v3201 = vunpack.c.0.s8 %v3200
        %v3202 = vlaneseq
        %v3203 = vshrl.u32 %v3202, 7
        %v3204 = vsub.s32 %v3201, %v3203
        %v3205 = vrot.slane %v3197, %v3204
        %v3207 = vunpack.c.l.s4 1934713408
        %v3208 = vunpack.c.0.s8 %v3207
        %v3209 = vlaneseq
        %v3210 = vshrl.u32 %v3209, 7
        %v3211 = vsub.s32 %v3208, %v3210
        %v3212 = vrot.slane %v3198, %v3211
        %v3213 = vcombine.low %v3148, %v3164
        %v3214 = vcombine.high %v3148, %v3164
        %v3216 = vunpack.c.l.s4 1934713408
        %v3217 = vunpack.c.0.s8 %v3216
        %v3218 = vlaneseq
        %v3219 = vshrl.u32 %v3218, 7
        %v3220 = vsub.s32 %v3217, %v3219
        %v3221 = vrot.slane %v3213, %v3220
        %v3223 = vunpack.c.l.s4 1934713408
        %v3224 = vunpack.c.0.s8 %v3223
        %v3225 = vlaneseq
        %v3226 = vshrl.u32 %v3225, 7
        %v3227 = vsub.s32 %v3224, %v3226
        %v3228 = vrot.slane %v3214, %v3227
        %v3229 = vcombine.low %v3173, %v3205
        %v3230 = vcombine.high %v3173, %v3205
        %v3231 = vcombine.low %v3180, %v3212
        %v3232 = vcombine.high %v3180, %v3212
        %v3233 = vcombine.low %v3189, %v3221
        %v3234 = vcombine.high %v3189, %v3221
        %v3235 = vcombine.low %v3196, %v3228
        %v3236 = vcombine.high %v3196, %v3228
        %3238 = vrot.lane.b32.xlu0 %v3230, 4
        %v3239 = vpop.permute.xlu0 %3238
        %3242 = vrot.lane.b32.xlu0 %v3231, 8
        %v3243 = vpop.permute.xlu0 %3242
        %3246 = vrot.lane.b32.xlu0 %v3232, 12
        %v3247 = vpop.permute.xlu0 %3246
        %3250 = vrot.lane.b32.xlu0 %v3233, 16
        %v3251 = vpop.permute.xlu0 %3250
        %3254 = vrot.lane.b32.xlu0 %v3234, 20
        %v3255 = vpop.permute.xlu0 %3254
        %3258 = vrot.lane.b32.xlu0 %v3235, 24
        %v3259 = vpop.permute.xlu0 %3258
        %3262 = vrot.lane.b32.xlu0 %v3236, 28
        %v3263 = vpop.permute.xlu0 %3262
        %v3265 = vsel %vm1675, %v3229, %v3239
        %v3266 = vsel %vm2284, %v3265, %v3243
        %vm3267 = vcmask 97280
        %v3268 = vsel %vm3267, %v3266, %v3247
        %vm3269 = vcmask 130048
        %v3270 = vsel %vm3269, %v3268, %v3251
        %vm3271 = vcmask 162816
        %v3272 = vsel %vm3271, %v3270, %v3255
        %vm3273 = vcmask 195584
        %v3274 = vsel %vm3273, %v3272, %v3259
        %vm3275 = vcmask 228352
        %v3276 = vsel %vm3275, %v3274, %v3263
        %v3277 = vld [vmem:[%s6] sm:$0xff]
        %v3278 = vld [vmem:[%s6 + $0x8] sm:$0xff]
        %v3279 = vld [vmem:[%s6 + $0x10] sm:$0xff]
        %v3280 = vld [vmem:[%s6 + $0x18] sm:$0xff]
        %v3282 = vsel %vm1267, %v3276, 0
        %3284 = vmatprep.subr.mxu0 0.0
        %3285 = vmatpush1.msra.mxu0 0.0
        %3286 = vmatprep.subr.mxu0 0.0
        %3287 = vmatpush1.msra.mxu0 0.0
        %3288 = vmatprep.subr.mxu0 0.0
        %3289 = vmatpush1.msra.mxu0 0.0
        %3290 = vmatprep.subr.mxu0 0.0
        %3291 = vmatpush1.msra.mxu0 0.0
        %3292 = vmatprep.subr.mxu0 0.0
        %3293 = vmatpush1.msra.mxu0 0.0
        %3294 = vmatprep.subr.mxu0 0.0
        %3295 = vmatpush1.msra.mxu0 0.0
        %3296 = vmatprep.subr.mxu0 0.0
        %3297 = vmatpush1.msra.mxu0 0.0
        %3298 = vmatprep.subr.mxu0 0.0
        %3299 = vmatpush1.msra.mxu0 0.0
        %3300 = vmatprep.subr.mxu0 0.0
        %3301 = vmatpush1.msra.mxu0 0.0
        %3302 = vmatprep.subr.mxu0 0.0
        %3303 = vmatpush1.msra.mxu0 0.0
        %3304 = vmatprep.subr.mxu0 0.0
        %3305 = vmatpush1.msra.mxu0 0.0
        %3306 = vmatprep.subr.mxu0 0.0
        %3307 = vmatpush1.msra.mxu0 0.0
        %3308 = vmatprep.subr.mxu0 0.0
        %3309 = vmatpush1.msra.mxu0 %v3280
        %3310 = vmatprep.subr.mxu0 0.0
        %3311 = vmatpush1.msra.mxu0 %v3279
        %3312 = vmatprep.subr.mxu0 0.0
        %3313 = vmatpush1.msra.mxu0 %v3278
        %3314 = vmatprep.subr.mxu0 0.0
        %3315 = vmatpush1.msra.mxu0 %v3277
        %3316 = vmatprep.subr.mxu0 0.0
        %3317 = vmatpush2.msra.mxu0 0.0
        %3318 = vmatprep.subr.mxu0 0.0
        %3319 = vmatpush2.msra.mxu0 0.0
        %3320 = vmatprep.subr.mxu0 0.0
        %3321 = vmatpush2.msra.mxu0 0.0
        %3322 = vmatprep.subr.mxu0 0.0
        %3323 = vmatpush2.msra.mxu0 0.0
        %3324 = vmatprep.subr.mxu0 0.0
        %3325 = vmatpush2.msra.mxu0 0.0
        %3326 = vmatprep.subr.mxu0 0.0
        %3327 = vmatpush2.msra.mxu0 0.0
        %3328 = vmatprep.subr.mxu0 0.0
        %3329 = vmatpush2.msra.mxu0 0.0
        %3330 = vmatprep.subr.mxu0 0.0
        %3331 = vmatpush2.msra.mxu0 0.0
        %3332 = vmatprep.subr.mxu0 0.0
        %3333 = vmatpush2.msra.mxu0 0.0
        %3334 = vmatprep.subr.mxu0 0.0
        %3335 = vmatpush2.msra.mxu0 0.0
        %3336 = vmatprep.subr.mxu0 0.0
        %3337 = vmatpush2.msra.mxu0 0.0
        %3338 = vmatprep.subr.mxu0 0.0
        %3339 = vmatpush2.msra.mxu0 0.0
        %3340 = vmatprep.subr.mxu0 0.0
        %3341 = vmatpush2.msra.mxu0 0.0
        %3342 = vmatprep.subr.mxu0 0.0
        %3343 = vmatpush2.msra.mxu0 0.0
        %3344 = vmatprep.subr.mxu0 0.0
        %3345 = vmatpush2.msra.mxu0 0.0
        %3346 = vmatprep.subr.mxu0 0.0
        %3347 = vmatpush2.msra.mxu0 0.0
        %3348 = vmatprep.mubr.f32.mxu0 0.0
        %3349 = vmatmul.mubr.f32.gmra.mxu0 %v3282
        %v3350 = vpop.f32.mrf.mxu0
        %v3351 = vadd.f32 0.0, %v3350
        %v3352 = vpop.f32.mrf.mxu0
        %3353 = vdwg.mxu0
        %v3354 = vadd.f32 %v1264, %v3351
        %v3355 = vld [vmem:[%s7] sm:$0x1]
        %v3356 = vld [vmem:[%s8] sm:$0x1]
        %v3357 = vsel %vm1267, %v3354, 0.0
        %3358 = vadd.xlane.f32.xlu0 %v3357
        %v3359 = vpop.xlane.xlu0 %3358
        %v3360 = vmul.f32 %v3359, %v1271
        %v3361 = vsub.f32 %v3354, %v3360
        %v3362 = vmul.f32 %v3361, %v3361
        %v3363 = vsel %vm1267, %v3362, 0.0
        %3364 = vadd.xlane.f32.xlu0 %v3363
        %v3365 = vpop.xlane.xlu0 %3364
        %v3366 = vmul.f32 %v3365, %v1271
        %v3367 = vadd.f32 %v3366, 1e-06
        %v3368 = vrsqrt.pop %v3367
        %v3369 = vmul.f32 %v3361, %v3368
        %v3371 = vlaneseq
        %v3372 = vshrl.u32 %v3371, 7
        %v3373 = vsub.s32 0, %v3372
        %v3374 = vrot.slane %v3355, %v3373
        %v3376 = vmul.f32 %v3369, %v3374
        %v3378 = vlaneseq
        %v3379 = vshrl.u32 %v3378, 7
        %v3380 = vsub.s32 0, %v3379
        %v3381 = vrot.slane %v3356, %v3380
        %v3383 = vadd.f32 %v3376, %v3381
        %v3384 = vld [vmem:[%s9] sm:$0xff]
        %v3385 = vld [vmem:[%s9 + $0x8] sm:$0xff]
        %v3386 = vld [vmem:[%s9 + $0x10] sm:$0xff]
        %v3387 = vld [vmem:[%s9 + $0x18] sm:$0xff]
        %v3388 = vld [vmem:[%s10] sm:$0x1]
        %v3390 = vlaneseq
        %v3391 = vshrl.u32 %v3390, 7
        %v3392 = vsub.s32 0, %v3391
        %v3393 = vrot.slane %v3388, %v3392
        %v3396 = vsel %vm1267, %v3383, 0
        %3398 = vmatprep.subr.mxu0 0.0
        %3399 = vmatpush1.msra.mxu0 0.0
        %3400 = vmatprep.subr.mxu0 0.0
        %3401 = vmatpush1.msra.mxu0 0.0
        %3402 = vmatprep.subr.mxu0 0.0
        %3403 = vmatpush1.msra.mxu0 0.0
        %3404 = vmatprep.subr.mxu0 0.0
        %3405 = vmatpush1.msra.mxu0 0.0
        %3406 = vmatprep.subr.mxu0 0.0
        %3407 = vmatpush1.msra.mxu0 0.0
        %3408 = vmatprep.subr.mxu0 0.0
        %3409 = vmatpush1.msra.mxu0 0.0
        %3410 = vmatprep.subr.mxu0 0.0
        %3411 = vmatpush1.msra.mxu0 0.0
        %3412 = vmatprep.subr.mxu0 0.0
        %3413 = vmatpush1.msra.mxu0 0.0
        %3414 = vmatprep.subr.mxu0 0.0
        %3415 = vmatpush1.msra.mxu0 0.0
        %3416 = vmatprep.subr.mxu0 0.0
        %3417 = vmatpush1.msra.mxu0 0.0
        %3418 = vmatprep.subr.mxu0 0.0
        %3419 = vmatpush1.msra.mxu0 0.0
        %3420 = vmatprep.subr.mxu0 0.0
        %3421 = vmatpush1.msra.mxu0 0.0
        %3422 = vmatprep.subr.mxu0 0.0
        %3423 = vmatpush1.msra.mxu0 %v3387
        %3424 = vmatprep.subr.mxu0 0.0
        %3425 = vmatpush1.msra.mxu0 %v3386
        %3426 = vmatprep.subr.mxu0 0.0
        %3427 = vmatpush1.msra.mxu0 %v3385
        %3428 = vmatprep.subr.mxu0 0.0
        %3429 = vmatpush1.msra.mxu0 %v3384
        %3430 = vmatprep.subr.mxu0 0.0
        %3431 = vmatpush2.msra.mxu0 0.0
        %3432 = vmatprep.subr.mxu0 0.0
        %3433 = vmatpush2.msra.mxu0 0.0
        %3434 = vmatprep.subr.mxu0 0.0
        %3435 = vmatpush2.msra.mxu0 0.0
        %3436 = vmatprep.subr.mxu0 0.0
        %3437 = vmatpush2.msra.mxu0 0.0
        %3438 = vmatprep.subr.mxu0 0.0
        %3439 = vmatpush2.msra.mxu0 0.0
        %3440 = vmatprep.subr.mxu0 0.0
        %3441 = vmatpush2.msra.mxu0 0.0
        %3442 = vmatprep.subr.mxu0 0.0
        %3443 = vmatpush2.msra.mxu0 0.0
        %3444 = vmatprep.subr.mxu0 0.0
        %3445 = vmatpush2.msra.mxu0 0.0
        %3446 = vmatprep.subr.mxu0 0.0
        %3447 = vmatpush2.msra.mxu0 0.0
        %3448 = vmatprep.subr.mxu0 0.0
        %3449 = vmatpush2.msra.mxu0 0.0
        %3450 = vmatprep.subr.mxu0 0.0
        %3451 = vmatpush2.msra.mxu0 0.0
        %3452 = vmatprep.subr.mxu0 0.0
        %3453 = vmatpush2.msra.mxu0 0.0
        %3454 = vmatprep.subr.mxu0 0.0
        %3455 = vmatpush2.msra.mxu0 0.0
        %3456 = vmatprep.subr.mxu0 0.0
        %3457 = vmatpush2.msra.mxu0 0.0
        %3458 = vmatprep.subr.mxu0 0.0
        %3459 = vmatpush2.msra.mxu0 0.0
        %3460 = vmatprep.subr.mxu0 0.0
        %3461 = vmatpush2.msra.mxu0 0.0
        %3462 = vmatprep.mubr.f32.mxu0 0.0
        %3463 = vmatmul.mubr.f32.gmra.mxu0 %v3396
        %v3464 = vpop.f32.mrf.mxu0
        %v3465 = vadd.f32 %v3393, %v3464
        %v3466 = vpop.f32.mrf.mxu0
        %3467 = vdwg.mxu0
        %v3468 = vmul.f32 %v3465, 0.5
        %v3469 = vmul.f32 %v3465, 0.70710677
        %v3470 = verf.f32.pop %v3469
        %v3471 = vadd.f32 %v3470, 1.0
        %v3472 = vmul.f32 %v3468, %v3471
        %v3473 = vld [vmem:[%s11] sm:$0xff]
        %v3474 = vld [vmem:[%s11 + $0x8] sm:$0xff]
        %v3475 = vld [vmem:[%s11 + $0x10] sm:$0xff]
        %v3476 = vld [vmem:[%s11 + $0x18] sm:$0xff]
        %v3477 = vld [vmem:[%s11 + $0x20] sm:$0xff]
        %v3478 = vld [vmem:[%s11 + $0x28] sm:$0xff]
        %v3479 = vld [vmem:[%s11 + $0x30] sm:$0xff]
        %v3480 = vld [vmem:[%s11 + $0x38] sm:$0xff]
        %v3481 = vld [vmem:[%s11 + $0x40] sm:$0xff]
        %v3482 = vld [vmem:[%s11 + $0x48] sm:$0xff]
        %v3483 = vld [vmem:[%s11 + $0x50] sm:$0xff]
        %v3484 = vld [vmem:[%s11 + $0x58] sm:$0xff]
        %v3485 = vld [vmem:[%s11 + $0x60] sm:$0xff]
        %v3486 = vld [vmem:[%s11 + $0x68] sm:$0xff]
        %v3487 = vld [vmem:[%s11 + $0x70] sm:$0xff]
        %v3488 = vld [vmem:[%s11 + $0x78] sm:$0xff]
        %v3489 = vld [vmem:[%s12] sm:$0x1]
        %v3491 = vlaneseq
        %v3492 = vshrl.u32 %v3491, 7
        %v3493 = vsub.s32 0, %v3492
        %v3494 = vrot.slane %v3489, %v3493
        %3496 = vmatprep.subr.mxu0 0.0
        %3497 = vmatpush1.msra.mxu0 %v3488
        %3498 = vmatprep.subr.mxu0 0.0
        %3499 = vmatpush1.msra.mxu0 %v3487
        %3500 = vmatprep.subr.mxu0 0.0
        %3501 = vmatpush1.msra.mxu0 %v3486
        %3502 = vmatprep.subr.mxu0 0.0
        %3503 = vmatpush1.msra.mxu0 %v3485
        %3504 = vmatprep.subr.mxu0 0.0
        %3505 = vmatpush1.msra.mxu0 %v3484
        %3506 = vmatprep.subr.mxu0 0.0
        %3507 = vmatpush1.msra.mxu0 %v3483
        %3508 = vmatprep.subr.mxu0 0.0
        %3509 = vmatpush1.msra.mxu0 %v3482
        %3510 = vmatprep.subr.mxu0 0.0
        %3511 = vmatpush1.msra.mxu0 %v3481
        %3512 = vmatprep.subr.mxu0 0.0
        %3513 = vmatpush1.msra.mxu0 %v3480
        %3514 = vmatprep.subr.mxu0 0.0
        %3515 = vmatpush1.msra.mxu0 %v3479
        %3516 = vmatprep.subr.mxu0 0.0
        %3517 = vmatpush1.msra.mxu0 %v3478
        %3518 = vmatprep.subr.mxu0 0.0
        %3519 = vmatpush1.msra.mxu0 %v3477
        %3520 = vmatprep.subr.mxu0 0.0
        %3521 = vmatpush1.msra.mxu0 %v3476
        %3522 = vmatprep.subr.mxu0 0.0
        %3523 = vmatpush1.msra.mxu0 %v3475
        %3524 = vmatprep.subr.mxu0 0.0
        %3525 = vmatpush1.msra.mxu0 %v3474
        %3526 = vmatprep.subr.mxu0 0.0
        %3527 = vmatpush1.msra.mxu0 %v3473
        %3528 = vmatprep.subr.mxu0 0.0
        %3529 = vmatpush2.msra.mxu0 0.0
        %3530 = vmatprep.subr.mxu0 0.0
        %3531 = vmatpush2.msra.mxu0 0.0
        %3532 = vmatprep.subr.mxu0 0.0
        %3533 = vmatpush2.msra.mxu0 0.0
        %3534 = vmatprep.subr.mxu0 0.0
        %3535 = vmatpush2.msra.mxu0 0.0
        %3536 = vmatprep.subr.mxu0 0.0
        %3537 = vmatpush2.msra.mxu0 0.0
        %3538 = vmatprep.subr.mxu0 0.0
        %3539 = vmatpush2.msra.mxu0 0.0
        %3540 = vmatprep.subr.mxu0 0.0
        %3541 = vmatpush2.msra.mxu0 0.0
        %3542 = vmatprep.subr.mxu0 0.0
        %3543 = vmatpush2.msra.mxu0 0.0
        %3544 = vmatprep.subr.mxu0 0.0
        %3545 = vmatpush2.msra.mxu0 0.0
        %3546 = vmatprep.subr.mxu0 0.0
        %3547 = vmatpush2.msra.mxu0 0.0
        %3548 = vmatprep.subr.mxu0 0.0
        %3549 = vmatpush2.msra.mxu0 0.0
        %3550 = vmatprep.subr.mxu0 0.0
        %3551 = vmatpush2.msra.mxu0 0.0
        %3552 = vmatprep.subr.mxu0 0.0
        %3553 = vmatpush2.msra.mxu0 0.0
        %3554 = vmatprep.subr.mxu0 0.0
        %3555 = vmatpush2.msra.mxu0 0.0
        %3556 = vmatprep.subr.mxu0 0.0
        %3557 = vmatpush2.msra.mxu0 0.0
        %3558 = vmatprep.subr.mxu0 0.0
        %3559 = vmatpush2.msra.mxu0 0.0
        %3560 = vmatprep.mubr.f32.mxu0 0.0
        %3561 = vmatmul.mubr.f32.gmra.mxu0 %v3472
        %v3562 = vpop.f32.mrf.mxu0
        %v3563 = vadd.f32 %v3494, %v3562
        %v3564 = vpop.f32.mrf.mxu0
        %3565 = vdwg.mxu0
        %v3566 = vadd.f32 %v3354, %v3563
        %3567 = vst.msk [vmem:[%s469] sm:$0xff] %vm1267, %v3566
        %s3568 = sand.u32 %s330, 1
        %s3569 = scalar_lea.sflag [#allocation6], %s3568
        %s3570 = sand.u32 %s330, 1
        %s3571 = smul.addr %s3570, 8
        %s3572 = scalar_lea.vmem [#allocation7], %s3571
        // Predicated region
        $region81: #{tpu_custom_call.1} parent=71 // pred_check
          %p3573 = pneg %p340
        $region82: #{tpu_custom_call.1} parent=71 // pred_check_branch
          %3575 = sbr.rel (%p3573) target = $region84
        $region83: #{tpu_custom_call.1} parent=71 // pred_region
          %s3577 = ssub.s32 128, 128
          %3578 = vsyncadd %s3569, %s3577
          %s3579 = sadd.s32 %s35, %s34
          %s3580 = smul.addr %s3579, 128
          %s3581 = scalar_lea.hbm %s13, %s3580
          %s3583 = sshll.u32 %s3572, 4
          %s3584 = int_to_ptr.vmem [resolvable:$true] %s3583
          %3586 = dma.vmem_to_hbm [thread:$0]  %s3584, 128, %s3581, %s3569
        $region84: #{tpu_custom_call.1} parent=71 // pred_fallthru
          _
      $region72: #{tpu_custom_call.1} parent=5 // pred_fallthru
        _
      %p3587 = scmp.le.s32.totalorder 2, %s25
      // Predicated region
      $region85: #{tpu_custom_call.1} parent=5 // pred_check
        %p3588 = pneg %p3587
      $region86: #{tpu_custom_call.1} parent=5 // pred_check_branch
        %3590 = sbr.rel (%p3588) target = $region88
      $region87: #{tpu_custom_call.1} parent=5 // pred_region
        %s3591 = ssub.s32 %s25, 2
        // Predicated region
        $region89: #{tpu_custom_call.1} parent=87 // pred_check
          %p3592 = pneg %p346
        $region90: #{tpu_custom_call.1} parent=87 // pred_check_branch
          %3594 = sbr.rel (%p3592) target = $region92
        $region91: #{tpu_custom_call.1} parent=87 // pred_region
          %s3595 = sand.u32 %s331, 1
          %s3596 = scalar_lea.sflag [#allocation6], %s3595
          %s3597 = sand.u32 %s331, 1
          %s3598 = smul.addr %s3597, 8
          %s3599 = scalar_lea.vmem [#allocation7], %s3598
          %3600 = dma.done %s3596, 128
        $region92: #{tpu_custom_call.1} parent=87 // pred_fallthru
          _
      $region88: #{tpu_custom_call.1} parent=5 // pred_fallthru
        _
    $region6: #{tpu_custom_call.1} parent=1 // loop_footer
      %s29 = sadd.s32 1, %s25
    $region7: #{tpu_custom_call.1} parent=1 // loop_footer_branch
      %24 = sbr.rel target = $region3
    $region8: #{tpu_custom_call.1} parent=1 // loop_exit
      _
    %3601 = vsyncpa [#allocation5], 1
    %s3602 = scalar_lea.sflag [#allocation5], 1
    %3603 = vsyncpa %s3602, 1
    %3604 = vsyncpa [#allocation6], 1
    %s3605 = scalar_lea.sflag [#allocation6], 1
    %3606 = vsyncpa %s3605, 1

</llo_original>
